<compile_context>
chip_gen: v6e
topology: v6e:2x2x1
jax: 0.10.0
libtpu: 0.0.40
codegen_flags: <defaults>
</compile_context>

<pallas_src>
import functools

import jax
import jax.numpy as jnp
import numpy as np
from jax.experimental import pallas as pl
from jax.experimental.pallas import tpu as pltpu

# Small shapes consistent with the module's forward semantics.
BATCH = 2
SEQ_LEN = 8          # sequence_length
INPUT_SIZE = 16      # input_size
HIDDEN = 32          # hidden_size
NUM_LAYERS = 2
NUM_CLASSES = 2


# ----------------------------------------------------------------------------
# Fused kernel: GRU layer 0 + GRU layer 1 (wavefront) + Linear, all in VMEM.
# ----------------------------------------------------------------------------
def fused_gru_fc_kernel(x_ref,
                        wih0_ref, whh0_ref, bih0_ref, bhh0_ref,
                        wih1_ref, whh1_ref, bih1_ref, bhh1_ref,
                        wfc_ref, bfc_ref,
                        out_ref, *, T, B, H):
    C = out_ref.shape[-1]

    # --- hoisted layer-0 input projection (off the serial critical path):
    #     one (T*B, F) @ (F, 3H) matmul + one bias add.  Rows time-major
    #     (row = t*B + b); kept 2-D and row-sliced per step (no 3-D relayout).
    gi0_all = (jnp.dot(x_ref[...], wih0_ref[...],
                       preferred_element_type=jnp.float32) + bih0_ref[...])

    whh0 = whh0_ref[...]   # (H, 3H) lane-stacked r|z|n
    bhh0 = bhh0_ref[...]   # (1, 3H)
    wih1 = wih1_ref[...]   # (H, 3H)
    bih1 = bih1_ref[...]   # (1, 3H)
    whh1 = whh1_ref[...]   # (H, 3H)
    bhh1 = bhh1_ref[...]   # (1, 3H)
    wfc = wfc_ref[...]     # (T*H, C), rows time-major / hidden-minor
    bfc = bfc_ref[...]     # (1, C)

    def gru_step(gi, h_prev, whh, bhh):
        # gi: (B, 3H) input projection incl. bias.  h_prev: (B, H) or None
        # (h0 == 0, from torch.zeros in forward).
        if h_prev is None:
            gh = bhh                                    # h_prev @ W_hh == 0
        else:
            # ONE fused recurrent matmul for all three gates.
            gh = jnp.dot(h_prev, whh,
                         preferred_element_type=jnp.float32) + bhh
        r = jax.nn.sigmoid(gi[:, 0:H] + gh[:, 0:H])
        z = jax.nn.sigmoid(gi[:, H:2 * H] + gh[:, H:2 * H])
        n = jnp.tanh(gi[:, 2 * H:3 * H] + r * gh[:, 2 * H:3 * H])
        if h_prev is None:
            return (1.0 - z) * n                        # + z * h0, h0 == 0
        return (1.0 - z) * n + z * h_prev

    # --- wavefront schedule: at step s run layer-0 step s (s < T) and
    #     layer-1 step s-1 (s >= 1).  Layer-1 consumes the layer-0 hidden of
    #     step s-1 (the OLD h0), so the two chains are independent within a
    #     wavefront step and their MXU/EUP latencies overlap.
    h0 = None
    h1 = None
    logits = jnp.zeros((B, C), jnp.float32)
    for s in range(T + 1):                    # static, fully unrolled
        h0_next = None
        if s < T:                             # layer-0 step s
            h0_next = gru_step(gi0_all[s * B:(s + 1) * B, :], h0, whh0, bhh0)
        if s >= 1:                            # layer-1 step s-1 (uses OLD h0)
            gi1 = jnp.dot(h0, wih1, preferred_element_type=jnp.float32) + bih1
            h1 = gru_step(gi1, h1, whh1, bhh1)
            # Fused FC accumulation (independent of the recurrent chains):
            # torch out.reshape(B,-1) @ W_fc.T  ==  sum_t h1_t @ Wfc[tH:(t+1)H]
            t1 = s - 1
            logits = logits + jnp.dot(h1, wfc[t1 * H:(t1 + 1) * H, :],
                                      preferred_element_type=jnp.float32)
        if s < T:
            h0 = h0_next

    out_ref[...] = (logits + bfc).astype(out_ref.dtype)


def _prep_gru_weights(w_ih, w_hh, b_ih, b_hh):
    """torch layout (3H,F)/(3H,H)/(3H,) -> lane-stacked (F,3H)/(H,3H)/(1,3H)."""
    wih = jnp.transpose(w_ih)          # (F, 3H), lanes ordered r|z|n
    whh = jnp.transpose(w_hh)          # (H, 3H)
    bih = b_ih.reshape(1, -1)          # (1, 3H)
    bhh = b_hh.reshape(1, -1)          # (1, 3H)
    return wih, whh, bih, bhh


# ----------------------------------------------------------------------------
# Full model forward: one pallas_call, layout prep is cheap XLA glue.
# ----------------------------------------------------------------------------
@jax.jit
def rnn_gru_forward(x, params):
    B, T, F = x.shape
    # time-major, batch-minor rows: row = t*B + b, shape (T*B, F)
    x_tb = jnp.transpose(x, (1, 0, 2)).reshape(T * B, F)

    wih0, whh0, bih0, bhh0 = _prep_gru_weights(*params["gru_l0"])
    wih1, whh1, bih1, bhh1 = _prep_gru_weights(*params["gru_l1"])
    w_fc, b_fc = params["fc"]
    C = w_fc.shape[0]
    wfc_t = jnp.transpose(w_fc)        # (T*H, C), rows = t*H + h
    bfc = b_fc.reshape(1, C)

    H = whh0.shape[0]
    kernel = functools.partial(fused_gru_fc_kernel, T=T, B=B, H=H)
    vmem_spec = pl.BlockSpec(memory_space=pltpu.MemorySpace.VMEM)
    return pl.pallas_call(
        kernel,
        out_shape=jax.ShapeDtypeStruct((B, C), jnp.float32),
        in_specs=[vmem_spec] * 11,
        out_specs=vmem_spec,
        compiler_params=pltpu.CompilerParams(
            # tiny working set; safe on v5e/v6e (128 MiB) and v7x (64 MiB)
            vmem_limit_bytes=16 * 1024 * 1024),
    )(x_tb, wih0, whh0, bih0, bhh0, wih1, whh1, bih1, bhh1, wfc_t, bfc)
    # TODO(synk): if batch grows, add a leading batch grid axis with
    # dimension_semantics=("parallel",) so both v7x TensorCores are used.


# ----------------------------------------------------------------------------
# Pure-JAX reference (matches torch GRU/Linear math) for correctness check.
# ----------------------------------------------------------------------------
def rnn_gru_ref(x, params):
    B, T, _ = x.shape
    seq = x
    for layer in range(NUM_LAYERS):
        w_ih, w_hh, b_ih, b_hh = params[f"gru_l{layer}"]
        hcur = jnp.zeros((B, HIDDEN), jnp.float32)
        outs = []
        for t in range(T):
            xt = seq[:, t]
            gi = xt @ w_ih.T + b_ih
            gh = hcur @ w_hh.T + b_hh
            i_r, i_z, i_n = jnp.split(gi, 3, axis=-1)
            h_r, h_z, h_n = jnp.split(gh, 3, axis=-1)
            r = jax.nn.sigmoid(i_r + h_r)
            z = jax.nn.sigmoid(i_z + h_z)
            n = jnp.tanh(i_n + r * h_n)
            hcur = (1.0 - z) * n + z * hcur
            outs.append(hcur)
        seq = jnp.stack(outs, axis=1)
    flat = seq.reshape(B, -1)
    w_fc, b_fc = params["fc"]
    return flat @ w_fc.T + b_fc


def init_params(key):
    params = {}
    stdv = 1.0 / np.sqrt(HIDDEN)
    keys = jax.random.split(key, 4 * NUM_LAYERS + 2)
    ki = 0
    for layer in range(NUM_LAYERS):
        f_in = INPUT_SIZE if layer == 0 else HIDDEN
        w_ih = jax.random.uniform(keys[ki], (3 * HIDDEN, f_in), jnp.float32, -stdv, stdv); ki += 1
        w_hh = jax.random.uniform(keys[ki], (3 * HIDDEN, HIDDEN), jnp.float32, -stdv, stdv); ki += 1
        b_ih = jax.random.uniform(keys[ki], (3 * HIDDEN,), jnp.float32, -stdv, stdv); ki += 1
        b_hh = jax.random.uniform(keys[ki], (3 * HIDDEN,), jnp.float32, -stdv, stdv); ki += 1
        params[f"gru_l{layer}"] = (w_ih, w_hh, b_ih, b_hh)
    k_fc = HIDDEN * SEQ_LEN
    stdv_fc = 1.0 / np.sqrt(k_fc)
    w_fc = jax.random.uniform(keys[ki], (NUM_CLASSES, k_fc), jnp.float32, -stdv_fc, stdv_fc); ki += 1
    b_fc = jax.random.uniform(keys[ki], (NUM_CLASSES,), jnp.float32, -stdv_fc, stdv_fc)
    params["fc"] = (w_fc, b_fc)
    return params


if __name__ == "__main__":
    key = jax.random.PRNGKey(0)
    kx, kp = jax.random.split(key)
    x = jax.random.normal(kx, (BATCH, SEQ_LEN, INPUT_SIZE), jnp.float32)
    params = init_params(kp)

    out = rnn_gru_forward(x, params)
    out = jax.block_until_ready(out)

    ref = rnn_gru_ref(x, params)
    np.testing.assert_allclose(np.asarray(out), np.asarray(ref), rtol=1e-5, atol=1e-5)

    assert out.shape == (BATCH, NUM_CLASSES)
    print("KERNEL_OK")
</pallas_src>

<mosaic_0001>
module attributes {stable_mosaic.version = 11 : i64} {
  func.func @fused_gru_fc_kernel(%arg0: memref<16x16xf32, #tpu.memory_space<vmem>>, %arg1: memref<16x96xf32, #tpu.memory_space<vmem>>, %arg2: memref<32x96xf32, #tpu.memory_space<vmem>>, %arg3: memref<1x96xf32, #tpu.memory_space<vmem>>, %arg4: memref<1x96xf32, #tpu.memory_space<vmem>>, %arg5: memref<32x96xf32, #tpu.memory_space<vmem>>, %arg6: memref<32x96xf32, #tpu.memory_space<vmem>>, %arg7: memref<1x96xf32, #tpu.memory_space<vmem>>, %arg8: memref<1x96xf32, #tpu.memory_space<vmem>>, %arg9: memref<256x2xf32, #tpu.memory_space<vmem>>, %arg10: memref<1x2xf32, #tpu.memory_space<vmem>>, %arg11: memref<2x2xf32, #tpu.memory_space<vmem>>) attributes {dimension_semantics = [], scalar_prefetch = 0 : i64, scratch_operands = 0 : i64, tpu.core_type = #tpu.core_type<tc>} {
    %c0 = arith.constant 0 : index
    %c0_0 = arith.constant 0 : index
    %0 = vector.load %arg0[%c0, %c0_0] : memref<16x16xf32, #tpu.memory_space<vmem>>, vector<16x16xf32>
    %c0_1 = arith.constant 0 : index
    %c0_2 = arith.constant 0 : index
    %1 = vector.load %arg1[%c0_1, %c0_2] : memref<16x96xf32, #tpu.memory_space<vmem>>, vector<16x96xf32>
    %cst = arith.constant dense<0.000000e+00> : vector<16x96xf32>
    %2 = tpu.matmul %0, %1, %cst {dimension_numbers = #tpu.dot_dimension_numbers<[1], [0], [0], [1], [0, 0, 1, 1], [], []>} : vector<16x16xf32>, vector<16x96xf32>, vector<16x96xf32> -> vector<16x96xf32>
    %c0_3 = arith.constant 0 : index
    %c0_4 = arith.constant 0 : index
    %3 = vector.load %arg3[%c0_3, %c0_4] : memref<1x96xf32, #tpu.memory_space<vmem>>, vector<1x96xf32>
    %4 = vector.broadcast %3 : vector<1x96xf32> to vector<16x96xf32>
    %5 = arith.addf %2, %4 : vector<16x96xf32>
    %c0_5 = arith.constant 0 : index
    %c0_6 = arith.constant 0 : index
    %6 = vector.load %arg2[%c0_5, %c0_6] : memref<32x96xf32, #tpu.memory_space<vmem>>, vector<32x96xf32>
    %c0_7 = arith.constant 0 : index
    %c0_8 = arith.constant 0 : index
    %7 = vector.load %arg4[%c0_7, %c0_8] : memref<1x96xf32, #tpu.memory_space<vmem>>, vector<1x96xf32>
    %c0_9 = arith.constant 0 : index
    %c0_10 = arith.constant 0 : index
    %8 = vector.load %arg5[%c0_9, %c0_10] : memref<32x96xf32, #tpu.memory_space<vmem>>, vector<32x96xf32>
    %c0_11 = arith.constant 0 : index
    %c0_12 = arith.constant 0 : index
    %9 = vector.load %arg7[%c0_11, %c0_12] : memref<1x96xf32, #tpu.memory_space<vmem>>, vector<1x96xf32>
    %c0_13 = arith.constant 0 : index
    %c0_14 = arith.constant 0 : index
    %10 = vector.load %arg6[%c0_13, %c0_14] : memref<32x96xf32, #tpu.memory_space<vmem>>, vector<32x96xf32>
    %c0_15 = arith.constant 0 : index
    %c0_16 = arith.constant 0 : index
    %11 = vector.load %arg8[%c0_15, %c0_16] : memref<1x96xf32, #tpu.memory_space<vmem>>, vector<1x96xf32>
    %c0_17 = arith.constant 0 : index
    %c0_18 = arith.constant 0 : index
    %12 = vector.load %arg9[%c0_17, %c0_18] : memref<256x2xf32, #tpu.memory_space<vmem>>, vector<256x2xf32>
    %c0_19 = arith.constant 0 : index
    %c0_20 = arith.constant 0 : index
    %13 = vector.load %arg10[%c0_19, %c0_20] : memref<1x2xf32, #tpu.memory_space<vmem>>, vector<1x2xf32>
    %cst_21 = arith.constant 0.000000e+00 : f32
    %14 = vector.broadcast %cst_21 : f32 to vector<2x2xf32>
    %15 = vector.extract_strided_slice %5 {offsets = [0, 0], sizes = [2, 96], strides = [1, 1]} : vector<16x96xf32> to vector<2x96xf32>
    %16 = vector.extract_strided_slice %15 {offsets = [0, 0], sizes = [2, 32], strides = [1, 1]} : vector<2x96xf32> to vector<2x32xf32>
    %17 = vector.extract_strided_slice %7 {offsets = [0, 0], sizes = [1, 32], strides = [1, 1]} : vector<1x96xf32> to vector<1x32xf32>
    %18 = vector.broadcast %17 : vector<1x32xf32> to vector<2x32xf32>
    %19 = arith.addf %16, %18 : vector<2x32xf32>
    %20 = arith.negf %19 : vector<2x32xf32>
    %21 = math.exp %20 : vector<2x32xf32>
    %cst_22 = arith.constant 1.000000e+00 : f32
    %22 = vector.broadcast %cst_22 : f32 to vector<2x32xf32>
    %23 = arith.addf %22, %21 : vector<2x32xf32>
    %24 = arith.divf %22, %23 : vector<2x32xf32>
    %25 = vector.extract_strided_slice %15 {offsets = [0, 32], sizes = [2, 32], strides = [1, 1]} : vector<2x96xf32> to vector<2x32xf32>
    %26 = vector.extract_strided_slice %7 {offsets = [0, 32], sizes = [1, 32], strides = [1, 1]} : vector<1x96xf32> to vector<1x32xf32>
    %27 = vector.broadcast %26 : vector<1x32xf32> to vector<2x32xf32>
    %28 = arith.addf %25, %27 : vector<2x32xf32>
    %29 = arith.negf %28 : vector<2x32xf32>
    %30 = math.exp %29 : vector<2x32xf32>
    %cst_23 = arith.constant 1.000000e+00 : f32
    %31 = vector.broadcast %cst_23 : f32 to vector<2x32xf32>
    %32 = arith.addf %31, %30 : vector<2x32xf32>
    %33 = arith.divf %31, %32 : vector<2x32xf32>
    %34 = vector.extract_strided_slice %15 {offsets = [0, 64], sizes = [2, 32], strides = [1, 1]} : vector<2x96xf32> to vector<2x32xf32>
    %35 = vector.extract_strided_slice %7 {offsets = [0, 64], sizes = [1, 32], strides = [1, 1]} : vector<1x96xf32> to vector<1x32xf32>
    %36 = vector.broadcast %35 : vector<1x32xf32> to vector<2x32xf32>
    %37 = arith.mulf %24, %36 : vector<2x32xf32>
    %38 = arith.addf %34, %37 : vector<2x32xf32>
    %39 = math.tanh %38 : vector<2x32xf32>
    %cst_24 = arith.constant 1.000000e+00 : f32
    %40 = vector.broadcast %cst_24 : f32 to vector<2x32xf32>
    %41 = arith.subf %40, %33 : vector<2x32xf32>
    %42 = arith.mulf %41, %39 : vector<2x32xf32>
    %43 = vector.extract_strided_slice %5 {offsets = [2, 0], sizes = [2, 96], strides = [1, 1]} : vector<16x96xf32> to vector<2x96xf32>
    %cst_25 = arith.constant dense<0.000000e+00> : vector<2x96xf32>
    %44 = tpu.matmul %42, %6, %cst_25 {dimension_numbers = #tpu.dot_dimension_numbers<[1], [0], [0], [1], [0, 0, 1, 1], [], []>} : vector<2x32xf32>, vector<32x96xf32>, vector<2x96xf32> -> vector<2x96xf32>
    %45 = vector.broadcast %7 : vector<1x96xf32> to vector<2x96xf32>
    %46 = arith.addf %44, %45 : vector<2x96xf32>
    %47 = vector.extract_strided_slice %43 {offsets = [0, 0], sizes = [2, 32], strides = [1, 1]} : vector<2x96xf32> to vector<2x32xf32>
    %48 = vector.extract_strided_slice %46 {offsets = [0, 0], sizes = [2, 32], strides = [1, 1]} : vector<2x96xf32> to vector<2x32xf32>
    %49 = arith.addf %47, %48 : vector<2x32xf32>
    %50 = arith.negf %49 : vector<2x32xf32>
    %51 = math.exp %50 : vector<2x32xf32>
    %cst_26 = arith.constant 1.000000e+00 : f32
    %52 = vector.broadcast %cst_26 : f32 to vector<2x32xf32>
    %53 = arith.addf %52, %51 : vector<2x32xf32>
    %54 = arith.divf %52, %53 : vector<2x32xf32>
    %55 = vector.extract_strided_slice %43 {offsets = [0, 32], sizes = [2, 32], strides = [1, 1]} : vector<2x96xf32> to vector<2x32xf32>
    %56 = vector.extract_strided_slice %46 {offsets = [0, 32], sizes = [2, 32], strides = [1, 1]} : vector<2x96xf32> to vector<2x32xf32>
    %57 = arith.addf %55, %56 : vector<2x32xf32>
    %58 = arith.negf %57 : vector<2x32xf32>
    %59 = math.exp %58 : vector<2x32xf32>
    %cst_27 = arith.constant 1.000000e+00 : f32
    %60 = vector.broadcast %cst_27 : f32 to vector<2x32xf32>
    %61 = arith.addf %60, %59 : vector<2x32xf32>
    %62 = arith.divf %60, %61 : vector<2x32xf32>
    %63 = vector.extract_strided_slice %43 {offsets = [0, 64], sizes = [2, 32], strides = [1, 1]} : vector<2x96xf32> to vector<2x32xf32>
    %64 = vector.extract_strided_slice %46 {offsets = [0, 64], sizes = [2, 32], strides = [1, 1]} : vector<2x96xf32> to vector<2x32xf32>
    %65 = arith.mulf %54, %64 : vector<2x32xf32>
    %66 = arith.addf %63, %65 : vector<2x32xf32>
    %67 = math.tanh %66 : vector<2x32xf32>
    %cst_28 = arith.constant 1.000000e+00 : f32
    %68 = vector.broadcast %cst_28 : f32 to vector<2x32xf32>
    %69 = arith.subf %68, %62 : vector<2x32xf32>
    %70 = arith.mulf %69, %67 : vector<2x32xf32>
    %71 = arith.mulf %62, %42 : vector<2x32xf32>
    %72 = arith.addf %70, %71 : vector<2x32xf32>
    %cst_29 = arith.constant dense<0.000000e+00> : vector<2x96xf32>
    %73 = tpu.matmul %42, %8, %cst_29 {dimension_numbers = #tpu.dot_dimension_numbers<[1], [0], [0], [1], [0, 0, 1, 1], [], []>} : vector<2x32xf32>, vector<32x96xf32>, vector<2x96xf32> -> vector<2x96xf32>
    %74 = vector.broadcast %9 : vector<1x96xf32> to vector<2x96xf32>
    %75 = arith.addf %73, %74 : vector<2x96xf32>
    %76 = vector.extract_strided_slice %75 {offsets = [0, 0], sizes = [2, 32], strides = [1, 1]} : vector<2x96xf32> to vector<2x32xf32>
    %77 = vector.extract_strided_slice %11 {offsets = [0, 0], sizes = [1, 32], strides = [1, 1]} : vector<1x96xf32> to vector<1x32xf32>
    %78 = vector.broadcast %77 : vector<1x32xf32> to vector<2x32xf32>
    %79 = arith.addf %76, %78 : vector<2x32xf32>
    %80 = arith.negf %79 : vector<2x32xf32>
    %81 = math.exp %80 : vector<2x32xf32>
    %cst_30 = arith.constant 1.000000e+00 : f32
    %82 = vector.broadcast %cst_30 : f32 to vector<2x32xf32>
    %83 = arith.addf %82, %81 : vector<2x32xf32>
    %84 = arith.divf %82, %83 : vector<2x32xf32>
    %85 = vector.extract_strided_slice %75 {offsets = [0, 32], sizes = [2, 32], strides = [1, 1]} : vector<2x96xf32> to vector<2x32xf32>
    %86 = vector.extract_strided_slice %11 {offsets = [0, 32], sizes = [1, 32], strides = [1, 1]} : vector<1x96xf32> to vector<1x32xf32>
    %87 = vector.broadcast %86 : vector<1x32xf32> to vector<2x32xf32>
    %88 = arith.addf %85, %87 : vector<2x32xf32>
    %89 = arith.negf %88 : vector<2x32xf32>
    %90 = math.exp %89 : vector<2x32xf32>
    %cst_31 = arith.constant 1.000000e+00 : f32
    %91 = vector.broadcast %cst_31 : f32 to vector<2x32xf32>
    %92 = arith.addf %91, %90 : vector<2x32xf32>
    %93 = arith.divf %91, %92 : vector<2x32xf32>
    %94 = vector.extract_strided_slice %75 {offsets = [0, 64], sizes = [2, 32], strides = [1, 1]} : vector<2x96xf32> to vector<2x32xf32>
    %95 = vector.extract_strided_slice %11 {offsets = [0, 64], sizes = [1, 32], strides = [1, 1]} : vector<1x96xf32> to vector<1x32xf32>
    %96 = vector.broadcast %95 : vector<1x32xf32> to vector<2x32xf32>
    %97 = arith.mulf %84, %96 : vector<2x32xf32>
    %98 = arith.addf %94, %97 : vector<2x32xf32>
    %99 = math.tanh %98 : vector<2x32xf32>
    %cst_32 = arith.constant 1.000000e+00 : f32
    %100 = vector.broadcast %cst_32 : f32 to vector<2x32xf32>
    %101 = arith.subf %100, %93 : vector<2x32xf32>
    %102 = arith.mulf %101, %99 : vector<2x32xf32>
    %103 = vector.extract_strided_slice %12 {offsets = [0, 0], sizes = [32, 2], strides = [1, 1]} : vector<256x2xf32> to vector<32x2xf32>
    %cst_33 = arith.constant dense<0.000000e+00> : vector<2x2xf32>
    %104 = tpu.matmul %102, %103, %cst_33 {dimension_numbers = #tpu.dot_dimension_numbers<[1], [0], [0], [1], [0, 0, 1, 1], [], []>} : vector<2x32xf32>, vector<32x2xf32>, vector<2x2xf32> -> vector<2x2xf32>
    %105 = arith.addf %14, %104 : vector<2x2xf32>
    %106 = vector.extract_strided_slice %5 {offsets = [4, 0], sizes = [2, 96], strides = [1, 1]} : vector<16x96xf32> to vector<2x96xf32>
    %cst_34 = arith.constant dense<0.000000e+00> : vector<2x96xf32>
    %107 = tpu.matmul %72, %6, %cst_34 {dimension_numbers = #tpu.dot_dimension_numbers<[1], [0], [0], [1], [0, 0, 1, 1], [], []>} : vector<2x32xf32>, vector<32x96xf32>, vector<2x96xf32> -> vector<2x96xf32>
    %108 = vector.broadcast %7 : vector<1x96xf32> to vector<2x96xf32>
    %109 = arith.addf %107, %108 : vector<2x96xf32>
    %110 = vector.extract_strided_slice %106 {offsets = [0, 0], sizes = [2, 32], strides = [1, 1]} : vector<2x96xf32> to vector<2x32xf32>
    %111 = vector.extract_strided_slice %109 {offsets = [0, 0], sizes = [2, 32], strides = [1, 1]} : vector<2x96xf32> to vector<2x32xf32>
    %112 = arith.addf %110, %111 : vector<2x32xf32>
    %113 = arith.negf %112 : vector<2x32xf32>
    %114 = math.exp %113 : vector<2x32xf32>
    %cst_35 = arith.constant 1.000000e+00 : f32
    %115 = vector.broadcast %cst_35 : f32 to vector<2x32xf32>
    %116 = arith.addf %115, %114 : vector<2x32xf32>
    %117 = arith.divf %115, %116 : vector<2x32xf32>
    %118 = vector.extract_strided_slice %106 {offsets = [0, 32], sizes = [2, 32], strides = [1, 1]} : vector<2x96xf32> to vector<2x32xf32>
    %119 = vector.extract_strided_slice %109 {offsets = [0, 32], sizes = [2, 32], strides = [1, 1]} : vector<2x96xf32> to vector<2x32xf32>
    %120 = arith.addf %118, %119 : vector<2x32xf32>
    %121 = arith.negf %120 : vector<2x32xf32>
    %122 = math.exp %121 : vector<2x32xf32>
    %cst_36 = arith.constant 1.000000e+00 : f32
    %123 = vector.broadcast %cst_36 : f32 to vector<2x32xf32>
    %124 = arith.addf %123, %122 : vector<2x32xf32>
    %125 = arith.divf %123, %124 : vector<2x32xf32>
    %126 = vector.extract_strided_slice %106 {offsets = [0, 64], sizes = [2, 32], strides = [1, 1]} : vector<2x96xf32> to vector<2x32xf32>
    %127 = vector.extract_strided_slice %109 {offsets = [0, 64], sizes = [2, 32], strides = [1, 1]} : vector<2x96xf32> to vector<2x32xf32>
    %128 = arith.mulf %117, %127 : vector<2x32xf32>
    %129 = arith.addf %126, %128 : vector<2x32xf32>
    %130 = math.tanh %129 : vector<2x32xf32>
    %cst_37 = arith.constant 1.000000e+00 : f32
    %131 = vector.broadcast %cst_37 : f32 to vector<2x32xf32>
    %132 = arith.subf %131, %125 : vector<2x32xf32>
    %133 = arith.mulf %132, %130 : vector<2x32xf32>
    %134 = arith.mulf %125, %72 : vector<2x32xf32>
    %135 = arith.addf %133, %134 : vector<2x32xf32>
    %cst_38 = arith.constant dense<0.000000e+00> : vector<2x96xf32>
    %136 = tpu.matmul %72, %8, %cst_38 {dimension_numbers = #tpu.dot_dimension_numbers<[1], [0], [0], [1], [0, 0, 1, 1], [], []>} : vector<2x32xf32>, vector<32x96xf32>, vector<2x96xf32> -> vector<2x96xf32>
    %137 = vector.broadcast %9 : vector<1x96xf32> to vector<2x96xf32>
    %138 = arith.addf %136, %137 : vector<2x96xf32>
    %cst_39 = arith.constant dense<0.000000e+00> : vector<2x96xf32>
    %139 = tpu.matmul %102, %10, %cst_39 {dimension_numbers = #tpu.dot_dimension_numbers<[1], [0], [0], [1], [0, 0, 1, 1], [], []>} : vector<2x32xf32>, vector<32x96xf32>, vector<2x96xf32> -> vector<2x96xf32>
    %140 = vector.broadcast %11 : vector<1x96xf32> to vector<2x96xf32>
    %141 = arith.addf %139, %140 : vector<2x96xf32>
    %142 = vector.extract_strided_slice %138 {offsets = [0, 0], sizes = [2, 32], strides = [1, 1]} : vector<2x96xf32> to vector<2x32xf32>
    %143 = vector.extract_strided_slice %141 {offsets = [0, 0], sizes = [2, 32], strides = [1, 1]} : vector<2x96xf32> to vector<2x32xf32>
    %144 = arith.addf %142, %143 : vector<2x32xf32>
    %145 = arith.negf %144 : vector<2x32xf32>
    %146 = math.exp %145 : vector<2x32xf32>
    %cst_40 = arith.constant 1.000000e+00 : f32
    %147 = vector.broadcast %cst_40 : f32 to vector<2x32xf32>
    %148 = arith.addf %147, %146 : vector<2x32xf32>
    %149 = arith.divf %147, %148 : vector<2x32xf32>
    %150 = vector.extract_strided_slice %138 {offsets = [0, 32], sizes = [2, 32], strides = [1, 1]} : vector<2x96xf32> to vector<2x32xf32>
    %151 = vector.extract_strided_slice %141 {offsets = [0, 32], sizes = [2, 32], strides = [1, 1]} : vector<2x96xf32> to vector<2x32xf32>
    %152 = arith.addf %150, %151 : vector<2x32xf32>
    %153 = arith.negf %152 : vector<2x32xf32>
    %154 = math.exp %153 : vector<2x32xf32>
    %cst_41 = arith.constant 1.000000e+00 : f32
    %155 = vector.broadcast %cst_41 : f32 to vector<2x32xf32>
    %156 = arith.addf %155, %154 : vector<2x32xf32>
    %157 = arith.divf %155, %156 : vector<2x32xf32>
    %158 = vector.extract_strided_slice %138 {offsets = [0, 64], sizes = [2, 32], strides = [1, 1]} : vector<2x96xf32> to vector<2x32xf32>
    %159 = vector.extract_strided_slice %141 {offsets = [0, 64], sizes = [2, 32], strides = [1, 1]} : vector<2x96xf32> to vector<2x32xf32>
    %160 = arith.mulf %149, %159 : vector<2x32xf32>
    %161 = arith.addf %158, %160 : vector<2x32xf32>
    %162 = math.tanh %161 : vector<2x32xf32>
    %cst_42 = arith.constant 1.000000e+00 : f32
    %163 = vector.broadcast %cst_42 : f32 to vector<2x32xf32>
    %164 = arith.subf %163, %157 : vector<2x32xf32>
    %165 = arith.mulf %164, %162 : vector<2x32xf32>
    %166 = arith.mulf %157, %102 : vector<2x32xf32>
    %167 = arith.addf %165, %166 : vector<2x32xf32>
    %168 = vector.extract_strided_slice %12 {offsets = [32, 0], sizes = [32, 2], strides = [1, 1]} : vector<256x2xf32> to vector<32x2xf32>
    %cst_43 = arith.constant dense<0.000000e+00> : vector<2x2xf32>
    %169 = tpu.matmul %167, %168, %cst_43 {dimension_numbers = #tpu.dot_dimension_numbers<[1], [0], [0], [1], [0, 0, 1, 1], [], []>} : vector<2x32xf32>, vector<32x2xf32>, vector<2x2xf32> -> vector<2x2xf32>
    %170 = arith.addf %105, %169 : vector<2x2xf32>
    %171 = vector.extract_strided_slice %5 {offsets = [6, 0], sizes = [2, 96], strides = [1, 1]} : vector<16x96xf32> to vector<2x96xf32>
    %cst_44 = arith.constant dense<0.000000e+00> : vector<2x96xf32>
    %172 = tpu.matmul %135, %6, %cst_44 {dimension_numbers = #tpu.dot_dimension_numbers<[1], [0], [0], [1], [0, 0, 1, 1], [], []>} : vector<2x32xf32>, vector<32x96xf32>, vector<2x96xf32> -> vector<2x96xf32>
    %173 = vector.broadcast %7 : vector<1x96xf32> to vector<2x96xf32>
    %174 = arith.addf %172, %173 : vector<2x96xf32>
    %175 = vector.extract_strided_slice %171 {offsets = [0, 0], sizes = [2, 32], strides = [1, 1]} : vector<2x96xf32> to vector<2x32xf32>
    %176 = vector.extract_strided_slice %174 {offsets = [0, 0], sizes = [2, 32], strides = [1, 1]} : vector<2x96xf32> to vector<2x32xf32>
    %177 = arith.addf %175, %176 : vector<2x32xf32>
    %178 = arith.negf %177 : vector<2x32xf32>
    %179 = math.exp %178 : vector<2x32xf32>
    %cst_45 = arith.constant 1.000000e+00 : f32
    %180 = vector.broadcast %cst_45 : f32 to vector<2x32xf32>
    %181 = arith.addf %180, %179 : vector<2x32xf32>
    %182 = arith.divf %180, %181 : vector<2x32xf32>
    %183 = vector.extract_strided_slice %171 {offsets = [0, 32], sizes = [2, 32], strides = [1, 1]} : vector<2x96xf32> to vector<2x32xf32>
    %184 = vector.extract_strided_slice %174 {offsets = [0, 32], sizes = [2, 32], strides = [1, 1]} : vector<2x96xf32> to vector<2x32xf32>
    %185 = arith.addf %183, %184 : vector<2x32xf32>
    %186 = arith.negf %185 : vector<2x32xf32>
    %187 = math.exp %186 : vector<2x32xf32>
    %cst_46 = arith.constant 1.000000e+00 : f32
    %188 = vector.broadcast %cst_46 : f32 to vector<2x32xf32>
    %189 = arith.addf %188, %187 : vector<2x32xf32>
    %190 = arith.divf %188, %189 : vector<2x32xf32>
    %191 = vector.extract_strided_slice %171 {offsets = [0, 64], sizes = [2, 32], strides = [1, 1]} : vector<2x96xf32> to vector<2x32xf32>
    %192 = vector.extract_strided_slice %174 {offsets = [0, 64], sizes = [2, 32], strides = [1, 1]} : vector<2x96xf32> to vector<2x32xf32>
    %193 = arith.mulf %182, %192 : vector<2x32xf32>
    %194 = arith.addf %191, %193 : vector<2x32xf32>
    %195 = math.tanh %194 : vector<2x32xf32>
    %cst_47 = arith.constant 1.000000e+00 : f32
    %196 = vector.broadcast %cst_47 : f32 to vector<2x32xf32>
    %197 = arith.subf %196, %190 : vector<2x32xf32>
    %198 = arith.mulf %197, %195 : vector<2x32xf32>
    %199 = arith.mulf %190, %135 : vector<2x32xf32>
    %200 = arith.addf %198, %199 : vector<2x32xf32>
    %cst_48 = arith.constant dense<0.000000e+00> : vector<2x96xf32>
    %201 = tpu.matmul %135, %8, %cst_48 {dimension_numbers = #tpu.dot_dimension_numbers<[1], [0], [0], [1], [0, 0, 1, 1], [], []>} : vector<2x32xf32>, vector<32x96xf32>, vector<2x96xf32> -> vector<2x96xf32>
    %202 = vector.broadcast %9 : vector<1x96xf32> to vector<2x96xf32>
    %203 = arith.addf %201, %202 : vector<2x96xf32>
    %cst_49 = arith.constant dense<0.000000e+00> : vector<2x96xf32>
    %204 = tpu.matmul %167, %10, %cst_49 {dimension_numbers = #tpu.dot_dimension_numbers<[1], [0], [0], [1], [0, 0, 1, 1], [], []>} : vector<2x32xf32>, vector<32x96xf32>, vector<2x96xf32> -> vector<2x96xf32>
    %205 = vector.broadcast %11 : vector<1x96xf32> to vector<2x96xf32>
    %206 = arith.addf %204, %205 : vector<2x96xf32>
    %207 = vector.extract_strided_slice %203 {offsets = [0, 0], sizes = [2, 32], strides = [1, 1]} : vector<2x96xf32> to vector<2x32xf32>
    %208 = vector.extract_strided_slice %206 {offsets = [0, 0], sizes = [2, 32], strides = [1, 1]} : vector<2x96xf32> to vector<2x32xf32>
    %209 = arith.addf %207, %208 : vector<2x32xf32>
    %210 = arith.negf %209 : vector<2x32xf32>
    %211 = math.exp %210 : vector<2x32xf32>
    %cst_50 = arith.constant 1.000000e+00 : f32
    %212 = vector.broadcast %cst_50 : f32 to vector<2x32xf32>
    %213 = arith.addf %212, %211 : vector<2x32xf32>
    %214 = arith.divf %212, %213 : vector<2x32xf32>
    %215 = vector.extract_strided_slice %203 {offsets = [0, 32], sizes = [2, 32], strides = [1, 1]} : vector<2x96xf32> to vector<2x32xf32>
    %216 = vector.extract_strided_slice %206 {offsets = [0, 32], sizes = [2, 32], strides = [1, 1]} : vector<2x96xf32> to vector<2x32xf32>
    %217 = arith.addf %215, %216 : vector<2x32xf32>
    %218 = arith.negf %217 : vector<2x32xf32>
    %219 = math.exp %218 : vector<2x32xf32>
    %cst_51 = arith.constant 1.000000e+00 : f32
    %220 = vector.broadcast %cst_51 : f32 to vector<2x32xf32>
    %221 = arith.addf %220, %219 : vector<2x32xf32>
    %222 = arith.divf %220, %221 : vector<2x32xf32>
    %223 = vector.extract_strided_slice %203 {offsets = [0, 64], sizes = [2, 32], strides = [1, 1]} : vector<2x96xf32> to vector<2x32xf32>
    %224 = vector.extract_strided_slice %206 {offsets = [0, 64], sizes = [2, 32], strides = [1, 1]} : vector<2x96xf32> to vector<2x32xf32>
    %225 = arith.mulf %214, %224 : vector<2x32xf32>
    %226 = arith.addf %223, %225 : vector<2x32xf32>
    %227 = math.tanh %226 : vector<2x32xf32>
    %cst_52 = arith.constant 1.000000e+00 : f32
    %228 = vector.broadcast %cst_52 : f32 to vector<2x32xf32>
    %229 = arith.subf %228, %222 : vector<2x32xf32>
    %230 = arith.mulf %229, %227 : vector<2x32xf32>
    %231 = arith.mulf %222, %167 : vector<2x32xf32>
    %232 = arith.addf %230, %231 : vector<2x32xf32>
    %233 = vector.extract_strided_slice %12 {offsets = [64, 0], sizes = [32, 2], strides = [1, 1]} : vector<256x2xf32> to vector<32x2xf32>
    %cst_53 = arith.constant dense<0.000000e+00> : vector<2x2xf32>
    %234 = tpu.matmul %232, %233, %cst_53 {dimension_numbers = #tpu.dot_dimension_numbers<[1], [0], [0], [1], [0, 0, 1, 1], [], []>} : vector<2x32xf32>, vector<32x2xf32>, vector<2x2xf32> -> vector<2x2xf32>
    %235 = arith.addf %170, %234 : vector<2x2xf32>
    %236 = vector.extract_strided_slice %5 {offsets = [8, 0], sizes = [2, 96], strides = [1, 1]} : vector<16x96xf32> to vector<2x96xf32>
    %cst_54 = arith.constant dense<0.000000e+00> : vector<2x96xf32>
    %237 = tpu.matmul %200, %6, %cst_54 {dimension_numbers = #tpu.dot_dimension_numbers<[1], [0], [0], [1], [0, 0, 1, 1], [], []>} : vector<2x32xf32>, vector<32x96xf32>, vector<2x96xf32> -> vector<2x96xf32>
    %238 = vector.broadcast %7 : vector<1x96xf32> to vector<2x96xf32>
    %239 = arith.addf %237, %238 : vector<2x96xf32>
    %240 = vector.extract_strided_slice %236 {offsets = [0, 0], sizes = [2, 32], strides = [1, 1]} : vector<2x96xf32> to vector<2x32xf32>
    %241 = vector.extract_strided_slice %239 {offsets = [0, 0], sizes = [2, 32], strides = [1, 1]} : vector<2x96xf32> to vector<2x32xf32>
    %242 = arith.addf %240, %241 : vector<2x32xf32>
    %243 = arith.negf %242 : vector<2x32xf32>
    %244 = math.exp %243 : vector<2x32xf32>
    %cst_55 = arith.constant 1.000000e+00 : f32
    %245 = vector.broadcast %cst_55 : f32 to vector<2x32xf32>
    %246 = arith.addf %245, %244 : vector<2x32xf32>
    %247 = arith.divf %245, %246 : vector<2x32xf32>
    %248 = vector.extract_strided_slice %236 {offsets = [0, 32], sizes = [2, 32], strides = [1, 1]} : vector<2x96xf32> to vector<2x32xf32>
    %249 = vector.extract_strided_slice %239 {offsets = [0, 32], sizes = [2, 32], strides = [1, 1]} : vector<2x96xf32> to vector<2x32xf32>
    %250 = arith.addf %248, %249 : vector<2x32xf32>
    %251 = arith.negf %250 : vector<2x32xf32>
    %252 = math.exp %251 : vector<2x32xf32>
    %cst_56 = arith.constant 1.000000e+00 : f32
    %253 = vector.broadcast %cst_56 : f32 to vector<2x32xf32>
    %254 = arith.addf %253, %252 : vector<2x32xf32>
    %255 = arith.divf %253, %254 : vector<2x32xf32>
    %256 = vector.extract_strided_slice %236 {offsets = [0, 64], sizes = [2, 32], strides = [1, 1]} : vector<2x96xf32> to vector<2x32xf32>
    %257 = vector.extract_strided_slice %239 {offsets = [0, 64], sizes = [2, 32], strides = [1, 1]} : vector<2x96xf32> to vector<2x32xf32>
    %258 = arith.mulf %247, %257 : vector<2x32xf32>
    %259 = arith.addf %256, %258 : vector<2x32xf32>
    %260 = math.tanh %259 : vector<2x32xf32>
    %cst_57 = arith.constant 1.000000e+00 : f32
    %261 = vector.broadcast %cst_57 : f32 to vector<2x32xf32>
    %262 = arith.subf %261, %255 : vector<2x32xf32>
    %263 = arith.mulf %262, %260 : vector<2x32xf32>
    %264 = arith.mulf %255, %200 : vector<2x32xf32>
    %265 = arith.addf %263, %264 : vector<2x32xf32>
    %cst_58 = arith.constant dense<0.000000e+00> : vector<2x96xf32>
    %266 = tpu.matmul %200, %8, %cst_58 {dimension_numbers = #tpu.dot_dimension_numbers<[1], [0], [0], [1], [0, 0, 1, 1], [], []>} : vector<2x32xf32>, vector<32x96xf32>, vector<2x96xf32> -> vector<2x96xf32>
    %267 = vector.broadcast %9 : vector<1x96xf32> to vector<2x96xf32>
    %268 = arith.addf %266, %267 : vector<2x96xf32>
    %cst_59 = arith.constant dense<0.000000e+00> : vector<2x96xf32>
    %269 = tpu.matmul %232, %10, %cst_59 {dimension_numbers = #tpu.dot_dimension_numbers<[1], [0], [0], [1], [0, 0, 1, 1], [], []>} : vector<2x32xf32>, vector<32x96xf32>, vector<2x96xf32> -> vector<2x96xf32>
    %270 = vector.broadcast %11 : vector<1x96xf32> to vector<2x96xf32>
    %271 = arith.addf %269, %270 : vector<2x96xf32>
    %272 = vector.extract_strided_slice %268 {offsets = [0, 0], sizes = [2, 32], strides = [1, 1]} : vector<2x96xf32> to vector<2x32xf32>
    %273 = vector.extract_strided_slice %271 {offsets = [0, 0], sizes = [2, 32], strides = [1, 1]} : vector<2x96xf32> to vector<2x32xf32>
    %274 = arith.addf %272, %273 : vector<2x32xf32>
    %275 = arith.negf %274 : vector<2x32xf32>
    %276 = math.exp %275 : vector<2x32xf32>
    %cst_60 = arith.constant 1.000000e+00 : f32
    %277 = vector.broadcast %cst_60 : f32 to vector<2x32xf32>
    %278 = arith.addf %277, %276 : vector<2x32xf32>
    %279 = arith.divf %277, %278 : vector<2x32xf32>
    %280 = vector.extract_strided_slice %268 {offsets = [0, 32], sizes = [2, 32], strides = [1, 1]} : vector<2x96xf32> to vector<2x32xf32>
    %281 = vector.extract_strided_slice %271 {offsets = [0, 32], sizes = [2, 32], strides = [1, 1]} : vector<2x96xf32> to vector<2x32xf32>
    %282 = arith.addf %280, %281 : vector<2x32xf32>
    %283 = arith.negf %282 : vector<2x32xf32>
    %284 = math.exp %283 : vector<2x32xf32>
    %cst_61 = arith.constant 1.000000e+00 : f32
    %285 = vector.broadcast %cst_61 : f32 to vector<2x32xf32>
    %286 = arith.addf %285, %284 : vector<2x32xf32>
    %287 = arith.divf %285, %286 : vector<2x32xf32>
    %288 = vector.extract_strided_slice %268 {offsets = [0, 64], sizes = [2, 32], strides = [1, 1]} : vector<2x96xf32> to vector<2x32xf32>
    %289 = vector.extract_strided_slice %271 {offsets = [0, 64], sizes = [2, 32], strides = [1, 1]} : vector<2x96xf32> to vector<2x32xf32>
    %290 = arith.mulf %279, %289 : vector<2x32xf32>
    %291 = arith.addf %288, %290 : vector<2x32xf32>
    %292 = math.tanh %291 : vector<2x32xf32>
    %cst_62 = arith.constant 1.000000e+00 : f32
    %293 = vector.broadcast %cst_62 : f32 to vector<2x32xf32>
    %294 = arith.subf %293, %287 : vector<2x32xf32>
    %295 = arith.mulf %294, %292 : vector<2x32xf32>
    %296 = arith.mulf %287, %232 : vector<2x32xf32>
    %297 = arith.addf %295, %296 : vector<2x32xf32>
    %298 = vector.extract_strided_slice %12 {offsets = [96, 0], sizes = [32, 2], strides = [1, 1]} : vector<256x2xf32> to vector<32x2xf32>
    %cst_63 = arith.constant dense<0.000000e+00> : vector<2x2xf32>
    %299 = tpu.matmul %297, %298, %cst_63 {dimension_numbers = #tpu.dot_dimension_numbers<[1], [0], [0], [1], [0, 0, 1, 1], [], []>} : vector<2x32xf32>, vector<32x2xf32>, vector<2x2xf32> -> vector<2x2xf32>
    %300 = arith.addf %235, %299 : vector<2x2xf32>
    %301 = vector.extract_strided_slice %5 {offsets = [10, 0], sizes = [2, 96], strides = [1, 1]} : vector<16x96xf32> to vector<2x96xf32>
    %cst_64 = arith.constant dense<0.000000e+00> : vector<2x96xf32>
    %302 = tpu.matmul %265, %6, %cst_64 {dimension_numbers = #tpu.dot_dimension_numbers<[1], [0], [0], [1], [0, 0, 1, 1], [], []>} : vector<2x32xf32>, vector<32x96xf32>, vector<2x96xf32> -> vector<2x96xf32>
    %303 = vector.broadcast %7 : vector<1x96xf32> to vector<2x96xf32>
    %304 = arith.addf %302, %303 : vector<2x96xf32>
    %305 = vector.extract_strided_slice %301 {offsets = [0, 0], sizes = [2, 32], strides = [1, 1]} : vector<2x96xf32> to vector<2x32xf32>
    %306 = vector.extract_strided_slice %304 {offsets = [0, 0], sizes = [2, 32], strides = [1, 1]} : vector<2x96xf32> to vector<2x32xf32>
    %307 = arith.addf %305, %306 : vector<2x32xf32>
    %308 = arith.negf %307 : vector<2x32xf32>
    %309 = math.exp %308 : vector<2x32xf32>
    %cst_65 = arith.constant 1.000000e+00 : f32
    %310 = vector.broadcast %cst_65 : f32 to vector<2x32xf32>
    %311 = arith.addf %310, %309 : vector<2x32xf32>
    %312 = arith.divf %310, %311 : vector<2x32xf32>
    %313 = vector.extract_strided_slice %301 {offsets = [0, 32], sizes = [2, 32], strides = [1, 1]} : vector<2x96xf32> to vector<2x32xf32>
    %314 = vector.extract_strided_slice %304 {offsets = [0, 32], sizes = [2, 32], strides = [1, 1]} : vector<2x96xf32> to vector<2x32xf32>
    %315 = arith.addf %313, %314 : vector<2x32xf32>
    %316 = arith.negf %315 : vector<2x32xf32>
    %317 = math.exp %316 : vector<2x32xf32>
    %cst_66 = arith.constant 1.000000e+00 : f32
    %318 = vector.broadcast %cst_66 : f32 to vector<2x32xf32>
    %319 = arith.addf %318, %317 : vector<2x32xf32>
    %320 = arith.divf %318, %319 : vector<2x32xf32>
    %321 = vector.extract_strided_slice %301 {offsets = [0, 64], sizes = [2, 32], strides = [1, 1]} : vector<2x96xf32> to vector<2x32xf32>
    %322 = vector.extract_strided_slice %304 {offsets = [0, 64], sizes = [2, 32], strides = [1, 1]} : vector<2x96xf32> to vector<2x32xf32>
    %323 = arith.mulf %312, %322 : vector<2x32xf32>
    %324 = arith.addf %321, %323 : vector<2x32xf32>
    %325 = math.tanh %324 : vector<2x32xf32>
    %cst_67 = arith.constant 1.000000e+00 : f32
    %326 = vector.broadcast %cst_67 : f32 to vector<2x32xf32>
    %327 = arith.subf %326, %320 : vector<2x32xf32>
    %328 = arith.mulf %327, %325 : vector<2x32xf32>
    %329 = arith.mulf %320, %265 : vector<2x32xf32>
    %330 = arith.addf %328, %329 : vector<2x32xf32>
    %cst_68 = arith.constant dense<0.000000e+00> : vector<2x96xf32>
    %331 = tpu.matmul %265, %8, %cst_68 {dimension_numbers = #tpu.dot_dimension_numbers<[1], [0], [0], [1], [0, 0, 1, 1], [], []>} : vector<2x32xf32>, vector<32x96xf32>, vector<2x96xf32> -> vector<2x96xf32>
    %332 = vector.broadcast %9 : vector<1x96xf32> to vector<2x96xf32>
    %333 = arith.addf %331, %332 : vector<2x96xf32>
    %cst_69 = arith.constant dense<0.000000e+00> : vector<2x96xf32>
    %334 = tpu.matmul %297, %10, %cst_69 {dimension_numbers = #tpu.dot_dimension_numbers<[1], [0], [0], [1], [0, 0, 1, 1], [], []>} : vector<2x32xf32>, vector<32x96xf32>, vector<2x96xf32> -> vector<2x96xf32>
    %335 = vector.broadcast %11 : vector<1x96xf32> to vector<2x96xf32>
    %336 = arith.addf %334, %335 : vector<2x96xf32>
    %337 = vector.extract_strided_slice %333 {offsets = [0, 0], sizes = [2, 32], strides = [1, 1]} : vector<2x96xf32> to vector<2x32xf32>
    %338 = vector.extract_strided_slice %336 {offsets = [0, 0], sizes = [2, 32], strides = [1, 1]} : vector<2x96xf32> to vector<2x32xf32>
    %339 = arith.addf %337, %338 : vector<2x32xf32>
    %340 = arith.negf %339 : vector<2x32xf32>
    %341 = math.exp %340 : vector<2x32xf32>
    %cst_70 = arith.constant 1.000000e+00 : f32
    %342 = vector.broadcast %cst_70 : f32 to vector<2x32xf32>
    %343 = arith.addf %342, %341 : vector<2x32xf32>
    %344 = arith.divf %342, %343 : vector<2x32xf32>
    %345 = vector.extract_strided_slice %333 {offsets = [0, 32], sizes = [2, 32], strides = [1, 1]} : vector<2x96xf32> to vector<2x32xf32>
    %346 = vector.extract_strided_slice %336 {offsets = [0, 32], sizes = [2, 32], strides = [1, 1]} : vector<2x96xf32> to vector<2x32xf32>
    %347 = arith.addf %345, %346 : vector<2x32xf32>
    %348 = arith.negf %347 : vector<2x32xf32>
    %349 = math.exp %348 : vector<2x32xf32>
    %cst_71 = arith.constant 1.000000e+00 : f32
    %350 = vector.broadcast %cst_71 : f32 to vector<2x32xf32>
    %351 = arith.addf %350, %349 : vector<2x32xf32>
    %352 = arith.divf %350, %351 : vector<2x32xf32>
    %353 = vector.extract_strided_slice %333 {offsets = [0, 64], sizes = [2, 32], strides = [1, 1]} : vector<2x96xf32> to vector<2x32xf32>
    %354 = vector.extract_strided_slice %336 {offsets = [0, 64], sizes = [2, 32], strides = [1, 1]} : vector<2x96xf32> to vector<2x32xf32>
    %355 = arith.mulf %344, %354 : vector<2x32xf32>
    %356 = arith.addf %353, %355 : vector<2x32xf32>
    %357 = math.tanh %356 : vector<2x32xf32>
    %cst_72 = arith.constant 1.000000e+00 : f32
    %358 = vector.broadcast %cst_72 : f32 to vector<2x32xf32>
    %359 = arith.subf %358, %352 : vector<2x32xf32>
    %360 = arith.mulf %359, %357 : vector<2x32xf32>
    %361 = arith.mulf %352, %297 : vector<2x32xf32>
    %362 = arith.addf %360, %361 : vector<2x32xf32>
    %363 = vector.extract_strided_slice %12 {offsets = [128, 0], sizes = [32, 2], strides = [1, 1]} : vector<256x2xf32> to vector<32x2xf32>
    %cst_73 = arith.constant dense<0.000000e+00> : vector<2x2xf32>
    %364 = tpu.matmul %362, %363, %cst_73 {dimension_numbers = #tpu.dot_dimension_numbers<[1], [0], [0], [1], [0, 0, 1, 1], [], []>} : vector<2x32xf32>, vector<32x2xf32>, vector<2x2xf32> -> vector<2x2xf32>
    %365 = arith.addf %300, %364 : vector<2x2xf32>
    %366 = vector.extract_strided_slice %5 {offsets = [12, 0], sizes = [2, 96], strides = [1, 1]} : vector<16x96xf32> to vector<2x96xf32>
    %cst_74 = arith.constant dense<0.000000e+00> : vector<2x96xf32>
    %367 = tpu.matmul %330, %6, %cst_74 {dimension_numbers = #tpu.dot_dimension_numbers<[1], [0], [0], [1], [0, 0, 1, 1], [], []>} : vector<2x32xf32>, vector<32x96xf32>, vector<2x96xf32> -> vector<2x96xf32>
    %368 = vector.broadcast %7 : vector<1x96xf32> to vector<2x96xf32>
    %369 = arith.addf %367, %368 : vector<2x96xf32>
    %370 = vector.extract_strided_slice %366 {offsets = [0, 0], sizes = [2, 32], strides = [1, 1]} : vector<2x96xf32> to vector<2x32xf32>
    %371 = vector.extract_strided_slice %369 {offsets = [0, 0], sizes = [2, 32], strides = [1, 1]} : vector<2x96xf32> to vector<2x32xf32>
    %372 = arith.addf %370, %371 : vector<2x32xf32>
    %373 = arith.negf %372 : vector<2x32xf32>
    %374 = math.exp %373 : vector<2x32xf32>
    %cst_75 = arith.constant 1.000000e+00 : f32
    %375 = vector.broadcast %cst_75 : f32 to vector<2x32xf32>
    %376 = arith.addf %375, %374 : vector<2x32xf32>
    %377 = arith.divf %375, %376 : vector<2x32xf32>
    %378 = vector.extract_strided_slice %366 {offsets = [0, 32], sizes = [2, 32], strides = [1, 1]} : vector<2x96xf32> to vector<2x32xf32>
    %379 = vector.extract_strided_slice %369 {offsets = [0, 32], sizes = [2, 32], strides = [1, 1]} : vector<2x96xf32> to vector<2x32xf32>
    %380 = arith.addf %378, %379 : vector<2x32xf32>
    %381 = arith.negf %380 : vector<2x32xf32>
    %382 = math.exp %381 : vector<2x32xf32>
    %cst_76 = arith.constant 1.000000e+00 : f32
    %383 = vector.broadcast %cst_76 : f32 to vector<2x32xf32>
    %384 = arith.addf %383, %382 : vector<2x32xf32>
    %385 = arith.divf %383, %384 : vector<2x32xf32>
    %386 = vector.extract_strided_slice %366 {offsets = [0, 64], sizes = [2, 32], strides = [1, 1]} : vector<2x96xf32> to vector<2x32xf32>
    %387 = vector.extract_strided_slice %369 {offsets = [0, 64], sizes = [2, 32], strides = [1, 1]} : vector<2x96xf32> to vector<2x32xf32>
    %388 = arith.mulf %377, %387 : vector<2x32xf32>
    %389 = arith.addf %386, %388 : vector<2x32xf32>
    %390 = math.tanh %389 : vector<2x32xf32>
    %cst_77 = arith.constant 1.000000e+00 : f32
    %391 = vector.broadcast %cst_77 : f32 to vector<2x32xf32>
    %392 = arith.subf %391, %385 : vector<2x32xf32>
    %393 = arith.mulf %392, %390 : vector<2x32xf32>
    %394 = arith.mulf %385, %330 : vector<2x32xf32>
    %395 = arith.addf %393, %394 : vector<2x32xf32>
    %cst_78 = arith.constant dense<0.000000e+00> : vector<2x96xf32>
    %396 = tpu.matmul %330, %8, %cst_78 {dimension_numbers = #tpu.dot_dimension_numbers<[1], [0], [0], [1], [0, 0, 1, 1], [], []>} : vector<2x32xf32>, vector<32x96xf32>, vector<2x96xf32> -> vector<2x96xf32>
    %397 = vector.broadcast %9 : vector<1x96xf32> to vector<2x96xf32>
    %398 = arith.addf %396, %397 : vector<2x96xf32>
    %cst_79 = arith.constant dense<0.000000e+00> : vector<2x96xf32>
    %399 = tpu.matmul %362, %10, %cst_79 {dimension_numbers = #tpu.dot_dimension_numbers<[1], [0], [0], [1], [0, 0, 1, 1], [], []>} : vector<2x32xf32>, vector<32x96xf32>, vector<2x96xf32> -> vector<2x96xf32>
    %400 = vector.broadcast %11 : vector<1x96xf32> to vector<2x96xf32>
    %401 = arith.addf %399, %400 : vector<2x96xf32>
    %402 = vector.extract_strided_slice %398 {offsets = [0, 0], sizes = [2, 32], strides = [1, 1]} : vector<2x96xf32> to vector<2x32xf32>
    %403 = vector.extract_strided_slice %401 {offsets = [0, 0], sizes = [2, 32], strides = [1, 1]} : vector<2x96xf32> to vector<2x32xf32>
    %404 = arith.addf %402, %403 : vector<2x32xf32>
    %405 = arith.negf %404 : vector<2x32xf32>
    %406 = math.exp %405 : vector<2x32xf32>
    %cst_80 = arith.constant 1.000000e+00 : f32
    %407 = vector.broadcast %cst_80 : f32 to vector<2x32xf32>
    %408 = arith.addf %407, %406 : vector<2x32xf32>
    %409 = arith.divf %407, %408 : vector<2x32xf32>
    %410 = vector.extract_strided_slice %398 {offsets = [0, 32], sizes = [2, 32], strides = [1, 1]} : vector<2x96xf32> to vector<2x32xf32>
    %411 = vector.extract_strided_slice %401 {offsets = [0, 32], sizes = [2, 32], strides = [1, 1]} : vector<2x96xf32> to vector<2x32xf32>
    %412 = arith.addf %410, %411 : vector<2x32xf32>
    %413 = arith.negf %412 : vector<2x32xf32>
    %414 = math.exp %413 : vector<2x32xf32>
    %cst_81 = arith.constant 1.000000e+00 : f32
    %415 = vector.broadcast %cst_81 : f32 to vector<2x32xf32>
    %416 = arith.addf %415, %414 : vector<2x32xf32>
    %417 = arith.divf %415, %416 : vector<2x32xf32>
    %418 = vector.extract_strided_slice %398 {offsets = [0, 64], sizes = [2, 32], strides = [1, 1]} : vector<2x96xf32> to vector<2x32xf32>
    %419 = vector.extract_strided_slice %401 {offsets = [0, 64], sizes = [2, 32], strides = [1, 1]} : vector<2x96xf32> to vector<2x32xf32>
    %420 = arith.mulf %409, %419 : vector<2x32xf32>
    %421 = arith.addf %418, %420 : vector<2x32xf32>
    %422 = math.tanh %421 : vector<2x32xf32>
    %cst_82 = arith.constant 1.000000e+00 : f32
    %423 = vector.broadcast %cst_82 : f32 to vector<2x32xf32>
    %424 = arith.subf %423, %417 : vector<2x32xf32>
    %425 = arith.mulf %424, %422 : vector<2x32xf32>
    %426 = arith.mulf %417, %362 : vector<2x32xf32>
    %427 = arith.addf %425, %426 : vector<2x32xf32>
    %428 = vector.extract_strided_slice %12 {offsets = [160, 0], sizes = [32, 2], strides = [1, 1]} : vector<256x2xf32> to vector<32x2xf32>
    %cst_83 = arith.constant dense<0.000000e+00> : vector<2x2xf32>
    %429 = tpu.matmul %427, %428, %cst_83 {dimension_numbers = #tpu.dot_dimension_numbers<[1], [0], [0], [1], [0, 0, 1, 1], [], []>} : vector<2x32xf32>, vector<32x2xf32>, vector<2x2xf32> -> vector<2x2xf32>
    %430 = arith.addf %365, %429 : vector<2x2xf32>
    %431 = vector.extract_strided_slice %5 {offsets = [14, 0], sizes = [2, 96], strides = [1, 1]} : vector<16x96xf32> to vector<2x96xf32>
    %cst_84 = arith.constant dense<0.000000e+00> : vector<2x96xf32>
    %432 = tpu.matmul %395, %6, %cst_84 {dimension_numbers = #tpu.dot_dimension_numbers<[1], [0], [0], [1], [0, 0, 1, 1], [], []>} : vector<2x32xf32>, vector<32x96xf32>, vector<2x96xf32> -> vector<2x96xf32>
    %433 = vector.broadcast %7 : vector<1x96xf32> to vector<2x96xf32>
    %434 = arith.addf %432, %433 : vector<2x96xf32>
    %435 = vector.extract_strided_slice %431 {offsets = [0, 0], sizes = [2, 32], strides = [1, 1]} : vector<2x96xf32> to vector<2x32xf32>
    %436 = vector.extract_strided_slice %434 {offsets = [0, 0], sizes = [2, 32], strides = [1, 1]} : vector<2x96xf32> to vector<2x32xf32>
    %437 = arith.addf %435, %436 : vector<2x32xf32>
    %438 = arith.negf %437 : vector<2x32xf32>
    %439 = math.exp %438 : vector<2x32xf32>
    %cst_85 = arith.constant 1.000000e+00 : f32
    %440 = vector.broadcast %cst_85 : f32 to vector<2x32xf32>
    %441 = arith.addf %440, %439 : vector<2x32xf32>
    %442 = arith.divf %440, %441 : vector<2x32xf32>
    %443 = vector.extract_strided_slice %431 {offsets = [0, 32], sizes = [2, 32], strides = [1, 1]} : vector<2x96xf32> to vector<2x32xf32>
    %444 = vector.extract_strided_slice %434 {offsets = [0, 32], sizes = [2, 32], strides = [1, 1]} : vector<2x96xf32> to vector<2x32xf32>
    %445 = arith.addf %443, %444 : vector<2x32xf32>
    %446 = arith.negf %445 : vector<2x32xf32>
    %447 = math.exp %446 : vector<2x32xf32>
    %cst_86 = arith.constant 1.000000e+00 : f32
    %448 = vector.broadcast %cst_86 : f32 to vector<2x32xf32>
    %449 = arith.addf %448, %447 : vector<2x32xf32>
    %450 = arith.divf %448, %449 : vector<2x32xf32>
    %451 = vector.extract_strided_slice %431 {offsets = [0, 64], sizes = [2, 32], strides = [1, 1]} : vector<2x96xf32> to vector<2x32xf32>
    %452 = vector.extract_strided_slice %434 {offsets = [0, 64], sizes = [2, 32], strides = [1, 1]} : vector<2x96xf32> to vector<2x32xf32>
    %453 = arith.mulf %442, %452 : vector<2x32xf32>
    %454 = arith.addf %451, %453 : vector<2x32xf32>
    %455 = math.tanh %454 : vector<2x32xf32>
    %cst_87 = arith.constant 1.000000e+00 : f32
    %456 = vector.broadcast %cst_87 : f32 to vector<2x32xf32>
    %457 = arith.subf %456, %450 : vector<2x32xf32>
    %458 = arith.mulf %457, %455 : vector<2x32xf32>
    %459 = arith.mulf %450, %395 : vector<2x32xf32>
    %460 = arith.addf %458, %459 : vector<2x32xf32>
    %cst_88 = arith.constant dense<0.000000e+00> : vector<2x96xf32>
    %461 = tpu.matmul %395, %8, %cst_88 {dimension_numbers = #tpu.dot_dimension_numbers<[1], [0], [0], [1], [0, 0, 1, 1], [], []>} : vector<2x32xf32>, vector<32x96xf32>, vector<2x96xf32> -> vector<2x96xf32>
    %462 = vector.broadcast %9 : vector<1x96xf32> to vector<2x96xf32>
    %463 = arith.addf %461, %462 : vector<2x96xf32>
    %cst_89 = arith.constant dense<0.000000e+00> : vector<2x96xf32>
    %464 = tpu.matmul %427, %10, %cst_89 {dimension_numbers = #tpu.dot_dimension_numbers<[1], [0], [0], [1], [0, 0, 1, 1], [], []>} : vector<2x32xf32>, vector<32x96xf32>, vector<2x96xf32> -> vector<2x96xf32>
    %465 = vector.broadcast %11 : vector<1x96xf32> to vector<2x96xf32>
    %466 = arith.addf %464, %465 : vector<2x96xf32>
    %467 = vector.extract_strided_slice %463 {offsets = [0, 0], sizes = [2, 32], strides = [1, 1]} : vector<2x96xf32> to vector<2x32xf32>
    %468 = vector.extract_strided_slice %466 {offsets = [0, 0], sizes = [2, 32], strides = [1, 1]} : vector<2x96xf32> to vector<2x32xf32>
    %469 = arith.addf %467, %468 : vector<2x32xf32>
    %470 = arith.negf %469 : vector<2x32xf32>
    %471 = math.exp %470 : vector<2x32xf32>
    %cst_90 = arith.constant 1.000000e+00 : f32
    %472 = vector.broadcast %cst_90 : f32 to vector<2x32xf32>
    %473 = arith.addf %472, %471 : vector<2x32xf32>
    %474 = arith.divf %472, %473 : vector<2x32xf32>
    %475 = vector.extract_strided_slice %463 {offsets = [0, 32], sizes = [2, 32], strides = [1, 1]} : vector<2x96xf32> to vector<2x32xf32>
    %476 = vector.extract_strided_slice %466 {offsets = [0, 32], sizes = [2, 32], strides = [1, 1]} : vector<2x96xf32> to vector<2x32xf32>
    %477 = arith.addf %475, %476 : vector<2x32xf32>
    %478 = arith.negf %477 : vector<2x32xf32>
    %479 = math.exp %478 : vector<2x32xf32>
    %cst_91 = arith.constant 1.000000e+00 : f32
    %480 = vector.broadcast %cst_91 : f32 to vector<2x32xf32>
    %481 = arith.addf %480, %479 : vector<2x32xf32>
    %482 = arith.divf %480, %481 : vector<2x32xf32>
    %483 = vector.extract_strided_slice %463 {offsets = [0, 64], sizes = [2, 32], strides = [1, 1]} : vector<2x96xf32> to vector<2x32xf32>
    %484 = vector.extract_strided_slice %466 {offsets = [0, 64], sizes = [2, 32], strides = [1, 1]} : vector<2x96xf32> to vector<2x32xf32>
    %485 = arith.mulf %474, %484 : vector<2x32xf32>
    %486 = arith.addf %483, %485 : vector<2x32xf32>
    %487 = math.tanh %486 : vector<2x32xf32>
    %cst_92 = arith.constant 1.000000e+00 : f32
    %488 = vector.broadcast %cst_92 : f32 to vector<2x32xf32>
    %489 = arith.subf %488, %482 : vector<2x32xf32>
    %490 = arith.mulf %489, %487 : vector<2x32xf32>
    %491 = arith.mulf %482, %427 : vector<2x32xf32>
    %492 = arith.addf %490, %491 : vector<2x32xf32>
    %493 = vector.extract_strided_slice %12 {offsets = [192, 0], sizes = [32, 2], strides = [1, 1]} : vector<256x2xf32> to vector<32x2xf32>
    %cst_93 = arith.constant dense<0.000000e+00> : vector<2x2xf32>
    %494 = tpu.matmul %492, %493, %cst_93 {dimension_numbers = #tpu.dot_dimension_numbers<[1], [0], [0], [1], [0, 0, 1, 1], [], []>} : vector<2x32xf32>, vector<32x2xf32>, vector<2x2xf32> -> vector<2x2xf32>
    %495 = arith.addf %430, %494 : vector<2x2xf32>
    %cst_94 = arith.constant dense<0.000000e+00> : vector<2x96xf32>
    %496 = tpu.matmul %460, %8, %cst_94 {dimension_numbers = #tpu.dot_dimension_numbers<[1], [0], [0], [1], [0, 0, 1, 1], [], []>} : vector<2x32xf32>, vector<32x96xf32>, vector<2x96xf32> -> vector<2x96xf32>
    %497 = vector.broadcast %9 : vector<1x96xf32> to vector<2x96xf32>
    %498 = arith.addf %496, %497 : vector<2x96xf32>
    %cst_95 = arith.constant dense<0.000000e+00> : vector<2x96xf32>
    %499 = tpu.matmul %492, %10, %cst_95 {dimension_numbers = #tpu.dot_dimension_numbers<[1], [0], [0], [1], [0, 0, 1, 1], [], []>} : vector<2x32xf32>, vector<32x96xf32>, vector<2x96xf32> -> vector<2x96xf32>
    %500 = vector.broadcast %11 : vector<1x96xf32> to vector<2x96xf32>
    %501 = arith.addf %499, %500 : vector<2x96xf32>
    %502 = vector.extract_strided_slice %498 {offsets = [0, 0], sizes = [2, 32], strides = [1, 1]} : vector<2x96xf32> to vector<2x32xf32>
    %503 = vector.extract_strided_slice %501 {offsets = [0, 0], sizes = [2, 32], strides = [1, 1]} : vector<2x96xf32> to vector<2x32xf32>
    %504 = arith.addf %502, %503 : vector<2x32xf32>
    %505 = arith.negf %504 : vector<2x32xf32>
    %506 = math.exp %505 : vector<2x32xf32>
    %cst_96 = arith.constant 1.000000e+00 : f32
    %507 = vector.broadcast %cst_96 : f32 to vector<2x32xf32>
    %508 = arith.addf %507, %506 : vector<2x32xf32>
    %509 = arith.divf %507, %508 : vector<2x32xf32>
    %510 = vector.extract_strided_slice %498 {offsets = [0, 32], sizes = [2, 32], strides = [1, 1]} : vector<2x96xf32> to vector<2x32xf32>
    %511 = vector.extract_strided_slice %501 {offsets = [0, 32], sizes = [2, 32], strides = [1, 1]} : vector<2x96xf32> to vector<2x32xf32>
    %512 = arith.addf %510, %511 : vector<2x32xf32>
    %513 = arith.negf %512 : vector<2x32xf32>
    %514 = math.exp %513 : vector<2x32xf32>
    %cst_97 = arith.constant 1.000000e+00 : f32
    %515 = vector.broadcast %cst_97 : f32 to vector<2x32xf32>
    %516 = arith.addf %515, %514 : vector<2x32xf32>
    %517 = arith.divf %515, %516 : vector<2x32xf32>
    %518 = vector.extract_strided_slice %498 {offsets = [0, 64], sizes = [2, 32], strides = [1, 1]} : vector<2x96xf32> to vector<2x32xf32>
    %519 = vector.extract_strided_slice %501 {offsets = [0, 64], sizes = [2, 32], strides = [1, 1]} : vector<2x96xf32> to vector<2x32xf32>
    %520 = arith.mulf %509, %519 : vector<2x32xf32>
    %521 = arith.addf %518, %520 : vector<2x32xf32>
    %522 = math.tanh %521 : vector<2x32xf32>
    %cst_98 = arith.constant 1.000000e+00 : f32
    %523 = vector.broadcast %cst_98 : f32 to vector<2x32xf32>
    %524 = arith.subf %523, %517 : vector<2x32xf32>
    %525 = arith.mulf %524, %522 : vector<2x32xf32>
    %526 = arith.mulf %517, %492 : vector<2x32xf32>
    %527 = arith.addf %525, %526 : vector<2x32xf32>
    %528 = vector.extract_strided_slice %12 {offsets = [224, 0], sizes = [32, 2], strides = [1, 1]} : vector<256x2xf32> to vector<32x2xf32>
    %cst_99 = arith.constant dense<0.000000e+00> : vector<2x2xf32>
    %529 = tpu.matmul %527, %528, %cst_99 {dimension_numbers = #tpu.dot_dimension_numbers<[1], [0], [0], [1], [0, 0, 1, 1], [], []>} : vector<2x32xf32>, vector<32x2xf32>, vector<2x2xf32> -> vector<2x2xf32>
    %530 = arith.addf %495, %529 : vector<2x2xf32>
    %531 = vector.broadcast %13 : vector<1x2xf32> to vector<2x2xf32>
    %532 = arith.addf %530, %531 : vector<2x2xf32>
    %c0_100 = arith.constant 0 : index
    %c0_101 = arith.constant 0 : index
    %533 = vector.load %arg11[%c0_100, %c0_101] : memref<2x2xf32, #tpu.memory_space<vmem>>, vector<2x2xf32>
    tpu.vector_store %arg11[%c0_100, %c0_101], %532 {strides = array<i32>} : memref<2x2xf32, #tpu.memory_space<vmem>>, vector<2x2xf32>,
    return
  }
}

</mosaic_0001>

<llo_original>
// kernel: rnn_gru_forward.1
$region0: #{rnn_gru_forward.1}
  #allocation0 [shape = 'u32[]', space=smem, size = 0x4, offset = 0x4, fixed_abs, tag = 'smem constant byte address 0x4 - core index']
  #allocation1 [shape = 'u32[144,128]{1,0:T(1,128)}', space=vmem, size = 0x12000, scoped, tag = 'internal scratch']
  %s0 = inlined_call_operand.vmem [shape: f32[16,16], index: 0, kind: input, shape index: {}]
  %s1 = inlined_call_operand.vmem [shape: f32[16,96], index: 1, kind: input, shape index: {}]
  %s2 = inlined_call_operand.vmem [shape: f32[32,96], index: 2, kind: input, shape index: {}]
  %s3 = inlined_call_operand.vmem [shape: f32[1,96], index: 3, kind: input, shape index: {}]
  %s4 = inlined_call_operand.vmem [shape: f32[1,96], index: 4, kind: input, shape index: {}]
  %s5 = inlined_call_operand.vmem [shape: f32[32,96], index: 5, kind: input, shape index: {}]
  %s6 = inlined_call_operand.vmem [shape: f32[32,96], index: 6, kind: input, shape index: {}]
  %s7 = inlined_call_operand.vmem [shape: f32[1,96], index: 7, kind: input, shape index: {}]
  %s8 = inlined_call_operand.vmem [shape: f32[1,96], index: 8, kind: input, shape index: {}]
  %s9 = inlined_call_operand.vmem [shape: f32[256,2], index: 9, kind: input, shape index: {}]
  %s10 = inlined_call_operand.vmem [shape: f32[1,2], index: 10, kind: input, shape index: {}]
  %s11 = inlined_call_operand.hbm [shape: f32[2,2], index: 11, kind: output, shape index: {}]
  %s12 = sld [smem:[#allocation0]]
  $region54: #{rnn_gru_forward.1} parent=0
    _
  %s14 = ssub.s32 1, %s12
  %s15 = scalar_select 0, %s14, %s12
  $region1: #{rnn_gru_forward.1} parent=0
    #allocation2 [shape = 'u8[1024]{0}', space=vmem, size = 0x400, scoped, tag = 'output window, operand 0, single buffered']
    #allocation3 [shape = 's32[1]{0}', space=sflag, size = 0x4, scoped, tag = 'scoped memory for rnn_gru_forward.1']
    %16 = vsyncpa [#allocation3], 0
    // Predicated region
    $region2: #{rnn_gru_forward.1} parent=1 // pred_check
      _
    $region3: #{rnn_gru_forward.1} parent=1 // pred_check_branch
      %18 = sbr.rel (0) target = $region5
    $region4: #{rnn_gru_forward.1} parent=1 // pred_region
      _
    $region5: #{rnn_gru_forward.1} parent=1 // pred_fallthru
      _
    // Predicated region
    $region6: #{rnn_gru_forward.1} parent=1 // pred_check
      _
    $region7: #{rnn_gru_forward.1} parent=1 // pred_check_branch
      %20 = sbr.rel (0) target = $region9
    $region8: #{rnn_gru_forward.1} parent=1 // pred_region
      _
    $region9: #{rnn_gru_forward.1} parent=1 // pred_fallthru
      _
    // Predicated region
    $region10: #{rnn_gru_forward.1} parent=1 // pred_check
      _
    $region11: #{rnn_gru_forward.1} parent=1 // pred_check_branch
      %22 = sbr.rel (0) target = $region13
    $region12: #{rnn_gru_forward.1} parent=1 // pred_region
      _
    $region13: #{rnn_gru_forward.1} parent=1 // pred_fallthru
      _
    // Predicated region
    $region14: #{rnn_gru_forward.1} parent=1 // pred_check
      _
    $region15: #{rnn_gru_forward.1} parent=1 // pred_check_branch
      %24 = sbr.rel (0) target = $region17
    $region16: #{rnn_gru_forward.1} parent=1 // pred_region
      _
    $region17: #{rnn_gru_forward.1} parent=1 // pred_fallthru
      _
    // Predicated region
    $region18: #{rnn_gru_forward.1} parent=1 // pred_check
      _
    $region19: #{rnn_gru_forward.1} parent=1 // pred_check_branch
      %26 = sbr.rel (0) target = $region21
    $region20: #{rnn_gru_forward.1} parent=1 // pred_region
      _
    $region21: #{rnn_gru_forward.1} parent=1 // pred_fallthru
      _
    // Predicated region
    $region22: #{rnn_gru_forward.1} parent=1 // pred_check
      _
    $region23: #{rnn_gru_forward.1} parent=1 // pred_check_branch
      %28 = sbr.rel (0) target = $region25
    $region24: #{rnn_gru_forward.1} parent=1 // pred_region
      _
    $region25: #{rnn_gru_forward.1} parent=1 // pred_fallthru
      _
    // Predicated region
    $region26: #{rnn_gru_forward.1} parent=1 // pred_check
      _
    $region27: #{rnn_gru_forward.1} parent=1 // pred_check_branch
      %30 = sbr.rel (0) target = $region29
    $region28: #{rnn_gru_forward.1} parent=1 // pred_region
      _
    $region29: #{rnn_gru_forward.1} parent=1 // pred_fallthru
      _
    // Predicated region
    $region30: #{rnn_gru_forward.1} parent=1 // pred_check
      _
    $region31: #{rnn_gru_forward.1} parent=1 // pred_check_branch
      %32 = sbr.rel (0) target = $region33
    $region32: #{rnn_gru_forward.1} parent=1 // pred_region
      _
    $region33: #{rnn_gru_forward.1} parent=1 // pred_fallthru
      _
    // Predicated region
    $region34: #{rnn_gru_forward.1} parent=1 // pred_check
      _
    $region35: #{rnn_gru_forward.1} parent=1 // pred_check_branch
      %34 = sbr.rel (0) target = $region37
    $region36: #{rnn_gru_forward.1} parent=1 // pred_region
      _
    $region37: #{rnn_gru_forward.1} parent=1 // pred_fallthru
      _
    // Predicated region
    $region38: #{rnn_gru_forward.1} parent=1 // pred_check
      _
    $region39: #{rnn_gru_forward.1} parent=1 // pred_check_branch
      %36 = sbr.rel (0) target = $region41
    $region40: #{rnn_gru_forward.1} parent=1 // pred_region
      _
    $region41: #{rnn_gru_forward.1} parent=1 // pred_fallthru
      _
    // Predicated region
    $region42: #{rnn_gru_forward.1} parent=1 // pred_check
      _
    $region43: #{rnn_gru_forward.1} parent=1 // pred_check_branch
      %38 = sbr.rel (0) target = $region45
    $region44: #{rnn_gru_forward.1} parent=1 // pred_region
      _
    $region45: #{rnn_gru_forward.1} parent=1 // pred_fallthru
      _
    %v39 = vld [vmem:[%s0] sm:$0xff]
    %v40 = vld [vmem:[%s0 + $0x8] sm:$0xff]
    %v41 = vld [vmem:[%s1] sm:$0xff]
    %v42 = vld [vmem:[%s1 + $0x8] sm:$0xff]
    %v43 = vld [vmem:[%s3] sm:$0x1]
    %v45 = vlaneseq
    %v46 = vshrl.u32 %v45, 7
    %v47 = vsub.s32 0, %v46
    %v48 = vrot.slane %v43, %v47
    %vm50 = vcmask 130048
    %v52 = vsel %vm50, %v39, 0
    %v55 = vsel %vm50, %v40, 0
    %57 = vmatprep.subr.mxu0 0.0
    %58 = vmatpush1.msra.mxu0 0.0
    %59 = vmatprep.subr.mxu0 0.0
    %60 = vmatpush1.msra.mxu0 0.0
    %61 = vmatprep.subr.mxu0 0.0
    %62 = vmatpush1.msra.mxu0 0.0
    %63 = vmatprep.subr.mxu0 0.0
    %64 = vmatpush1.msra.mxu0 0.0
    %65 = vmatprep.subr.mxu0 0.0
    %66 = vmatpush1.msra.mxu0 0.0
    %67 = vmatprep.subr.mxu0 0.0
    %68 = vmatpush1.msra.mxu0 0.0
    %69 = vmatprep.subr.mxu0 0.0
    %70 = vmatpush1.msra.mxu0 0.0
    %71 = vmatprep.subr.mxu0 0.0
    %72 = vmatpush1.msra.mxu0 0.0
    %73 = vmatprep.subr.mxu0 0.0
    %74 = vmatpush1.msra.mxu0 0.0
    %75 = vmatprep.subr.mxu0 0.0
    %76 = vmatpush1.msra.mxu0 0.0
    %77 = vmatprep.subr.mxu0 0.0
    %78 = vmatpush1.msra.mxu0 0.0
    %79 = vmatprep.subr.mxu0 0.0
    %80 = vmatpush1.msra.mxu0 0.0
    %81 = vmatprep.subr.mxu0 0.0
    %82 = vmatpush1.msra.mxu0 0.0
    %83 = vmatprep.subr.mxu0 0.0
    %84 = vmatpush1.msra.mxu0 0.0
    %85 = vmatprep.subr.mxu0 0.0
    %86 = vmatpush1.msra.mxu0 %v42
    %87 = vmatprep.subr.mxu0 0.0
    %88 = vmatpush1.msra.mxu0 %v41
    %89 = vmatprep.subr.mxu0 0.0
    %90 = vmatpush2.msra.mxu0 0.0
    %91 = vmatprep.subr.mxu0 0.0
    %92 = vmatpush2.msra.mxu0 0.0
    %93 = vmatprep.subr.mxu0 0.0
    %94 = vmatpush2.msra.mxu0 0.0
    %95 = vmatprep.subr.mxu0 0.0
    %96 = vmatpush2.msra.mxu0 0.0
    %97 = vmatprep.subr.mxu0 0.0
    %98 = vmatpush2.msra.mxu0 0.0
    %99 = vmatprep.subr.mxu0 0.0
    %100 = vmatpush2.msra.mxu0 0.0
    %101 = vmatprep.subr.mxu0 0.0
    %102 = vmatpush2.msra.mxu0 0.0
    %103 = vmatprep.subr.mxu0 0.0
    %104 = vmatpush2.msra.mxu0 0.0
    %105 = vmatprep.subr.mxu0 0.0
    %106 = vmatpush2.msra.mxu0 0.0
    %107 = vmatprep.subr.mxu0 0.0
    %108 = vmatpush2.msra.mxu0 0.0
    %109 = vmatprep.subr.mxu0 0.0
    %110 = vmatpush2.msra.mxu0 0.0
    %111 = vmatprep.subr.mxu0 0.0
    %112 = vmatpush2.msra.mxu0 0.0
    %113 = vmatprep.subr.mxu0 0.0
    %114 = vmatpush2.msra.mxu0 0.0
    %115 = vmatprep.subr.mxu0 0.0
    %116 = vmatpush2.msra.mxu0 0.0
    %117 = vmatprep.subr.mxu0 0.0
    %118 = vmatpush2.msra.mxu0 0.0
    %119 = vmatprep.subr.mxu0 0.0
    %120 = vmatpush2.msra.mxu0 0.0
    %121 = vmatprep.mubr.f32.mxu0 0.0
    %122 = vmatmul.mubr.f32.gmra.mxu0 %v52
    %v123 = vpop.f32.mrf.mxu0
    %v124 = vadd.f32 %v48, %v123
    %v125 = vpop.f32.mrf.mxu0
    %126 = vmatprep.mubr.f32.mxu0 0.0
    %127 = vmatmul.mubr.f32.gmra.mxu0 %v55
    %v128 = vpop.f32.mrf.mxu0
    %v129 = vadd.f32 %v48, %v128
    %v130 = vpop.f32.mrf.mxu0
    %131 = vdwg.mxu0
    %v132 = vld [vmem:[%s2] sm:$0xff]
    %v133 = vld [vmem:[%s2 + $0x8] sm:$0xff]
    %v134 = vld [vmem:[%s2 + $0x10] sm:$0xff]
    %v135 = vld [vmem:[%s2 + $0x18] sm:$0xff]
    %v136 = vld [vmem:[%s4] sm:$0x1]
    %v137 = vld [vmem:[%s5] sm:$0xff]
    %v138 = vld [vmem:[%s5 + $0x8] sm:$0xff]
    %v139 = vld [vmem:[%s5 + $0x10] sm:$0xff]
    %v140 = vld [vmem:[%s5 + $0x18] sm:$0xff]
    %v141 = vld [vmem:[%s7] sm:$0x1]
    %v142 = vld [vmem:[%s6] sm:$0xff]
    %v143 = vld [vmem:[%s6 + $0x8] sm:$0xff]
    %v144 = vld [vmem:[%s6 + $0x10] sm:$0xff]
    %v145 = vld [vmem:[%s6 + $0x18] sm:$0xff]
    %v146 = vld [vmem:[%s8] sm:$0x1]
    %v147 = vld [vmem:[%s9] sm:$0xff]
    %v148 = vld [vmem:[%s9 + $0x8] sm:$0xff]
    %v149 = vld [vmem:[%s9 + $0x10] sm:$0xff]
    %v150 = vld [vmem:[%s9 + $0x18] sm:$0xff]
    %v151 = vld [vmem:[%s9 + $0x20] sm:$0xff]
    %v152 = vld [vmem:[%s9 + $0x28] sm:$0xff]
    %v153 = vld [vmem:[%s9 + $0x30] sm:$0xff]
    %v154 = vld [vmem:[%s9 + $0x38] sm:$0xff]
    %v155 = vld [vmem:[%s9 + $0x40] sm:$0xff]
    %v156 = vld [vmem:[%s9 + $0x48] sm:$0xff]
    %v157 = vld [vmem:[%s9 + $0x50] sm:$0xff]
    %v158 = vld [vmem:[%s9 + $0x58] sm:$0xff]
    %v159 = vld [vmem:[%s9 + $0x60] sm:$0xff]
    %v160 = vld [vmem:[%s9 + $0x68] sm:$0xff]
    %v161 = vld [vmem:[%s9 + $0x70] sm:$0xff]
    %v162 = vld [vmem:[%s9 + $0x78] sm:$0xff]
    %v163 = vld [vmem:[%s9 + $0x80] sm:$0xff]
    %v164 = vld [vmem:[%s9 + $0x88] sm:$0xff]
    %v165 = vld [vmem:[%s9 + $0x90] sm:$0xff]
    %v166 = vld [vmem:[%s9 + $0x98] sm:$0xff]
    %v167 = vld [vmem:[%s9 + $0xa0] sm:$0xff]
    %v168 = vld [vmem:[%s9 + $0xa8] sm:$0xff]
    %v169 = vld [vmem:[%s9 + $0xb0] sm:$0xff]
    %v170 = vld [vmem:[%s9 + $0xb8] sm:$0xff]
    %v171 = vld [vmem:[%s9 + $0xc0] sm:$0xff]
    %v172 = vld [vmem:[%s9 + $0xc8] sm:$0xff]
    %v173 = vld [vmem:[%s9 + $0xd0] sm:$0xff]
    %v174 = vld [vmem:[%s9 + $0xd8] sm:$0xff]
    %v175 = vld [vmem:[%s9 + $0xe0] sm:$0xff]
    %v176 = vld [vmem:[%s9 + $0xe8] sm:$0xff]
    %v177 = vld [vmem:[%s9 + $0xf0] sm:$0xff]
    %v178 = vld [vmem:[%s9 + $0xf8] sm:$0xff]
    %v179 = vld [vmem:[%s10] sm:$0x1]
    %v181 = vlaneseq
    %v182 = vshrl.u32 %v181, 7
    %v183 = vsub.s32 0, %v182
    %v184 = vrot.slane %v136, %v183
    %v186 = vadd.f32 %v124, %v184
    %v187 = vxor.u32 %v186, 2147483648
    %v188 = vmul.f32 %v187, 1.442695
    %v189 = vpow.pop %v188
    %v190 = vadd.f32 %v189, 1.0
    %v191 = vrcp.pop %v190
    %v192 = vmul.f32 1.0, %v191
    %193 = vrot.lane.b32.xlu0 %v184, 64
    %v194 = vpop.permute.xlu0 %193
    %v196 = vmul.f32 %v192, %v194
    %198 = vrot.lane.b32.xlu0 %v196, 64
    %v199 = vpop.permute.xlu0 %198
    %v201 = vadd.f32 %v124, %v199
    %v202 = vtanh.pop %v201
    %v203 = vsub.f32 1.0, %v192
    %205 = vrot.lane.b32.xlu0 %v202, 96
    %v206 = vpop.permute.xlu0 %205
    %v208 = vmul.f32 %v203, %v206
    %210 = vrot.lane.b32.xlu0 %v208, 96
    %v211 = vpop.permute.xlu0 %210
    %vm212 = vcmask 261120
    %v213 = vsel %vm212, %v211, 0
    %215 = vmatprep.subr.mxu0 0.0
    %216 = vmatpush1.msra.mxu0 0.0
    %217 = vmatprep.subr.mxu0 0.0
    %218 = vmatpush1.msra.mxu0 0.0
    %219 = vmatprep.subr.mxu0 0.0
    %220 = vmatpush1.msra.mxu0 0.0
    %221 = vmatprep.subr.mxu0 0.0
    %222 = vmatpush1.msra.mxu0 0.0
    %223 = vmatprep.subr.mxu0 0.0
    %224 = vmatpush1.msra.mxu0 0.0
    %225 = vmatprep.subr.mxu0 0.0
    %226 = vmatpush1.msra.mxu0 0.0
    %227 = vmatprep.subr.mxu0 0.0
    %228 = vmatpush1.msra.mxu0 0.0
    %229 = vmatprep.subr.mxu0 0.0
    %230 = vmatpush1.msra.mxu0 0.0
    %231 = vmatprep.subr.mxu0 0.0
    %232 = vmatpush1.msra.mxu0 0.0
    %233 = vmatprep.subr.mxu0 0.0
    %234 = vmatpush1.msra.mxu0 0.0
    %235 = vmatprep.subr.mxu0 0.0
    %236 = vmatpush1.msra.mxu0 0.0
    %237 = vmatprep.subr.mxu0 0.0
    %238 = vmatpush1.msra.mxu0 0.0
    %239 = vmatprep.subr.mxu0 0.0
    %240 = vmatpush1.msra.mxu0 %v135
    %241 = vmatprep.subr.mxu0 0.0
    %242 = vmatpush1.msra.mxu0 %v134
    %243 = vmatprep.subr.mxu0 0.0
    %244 = vmatpush1.msra.mxu0 %v133
    %245 = vmatprep.subr.mxu0 0.0
    %246 = vmatpush1.msra.mxu0 %v132
    %247 = vmatprep.subr.mxu0 0.0
    %248 = vmatpush2.msra.mxu0 0.0
    %249 = vmatprep.subr.mxu0 0.0
    %250 = vmatpush2.msra.mxu0 0.0
    %251 = vmatprep.subr.mxu0 0.0
    %252 = vmatpush2.msra.mxu0 0.0
    %253 = vmatprep.subr.mxu0 0.0
    %254 = vmatpush2.msra.mxu0 0.0
    %255 = vmatprep.subr.mxu0 0.0
    %256 = vmatpush2.msra.mxu0 0.0
    %257 = vmatprep.subr.mxu0 0.0
    %258 = vmatpush2.msra.mxu0 0.0
    %259 = vmatprep.subr.mxu0 0.0
    %260 = vmatpush2.msra.mxu0 0.0
    %261 = vmatprep.subr.mxu0 0.0
    %262 = vmatpush2.msra.mxu0 0.0
    %263 = vmatprep.subr.mxu0 0.0
    %264 = vmatpush2.msra.mxu0 0.0
    %265 = vmatprep.subr.mxu0 0.0
    %266 = vmatpush2.msra.mxu0 0.0
    %267 = vmatprep.subr.mxu0 0.0
    %268 = vmatpush2.msra.mxu0 0.0
    %269 = vmatprep.subr.mxu0 0.0
    %270 = vmatpush2.msra.mxu0 0.0
    %271 = vmatprep.subr.mxu0 0.0
    %272 = vmatpush2.msra.mxu0 0.0
    %273 = vmatprep.subr.mxu0 0.0
    %274 = vmatpush2.msra.mxu0 0.0
    %275 = vmatprep.subr.mxu0 0.0
    %276 = vmatpush2.msra.mxu0 0.0
    %277 = vmatprep.subr.mxu0 0.0
    %278 = vmatpush2.msra.mxu0 0.0
    %279 = vmatprep.mubr.f32.mxu0 0.0
    %280 = vmatmul.mubr.f32.gmra.mxu0 %v213
    %v281 = vpop.f32.mrf.mxu0
    %v282 = vadd.f32 %v184, %v281
    %v283 = vpop.f32.mrf.mxu0
    %284 = vdwg.mxu0
    %v286 = vrot.slane %v282, 6
    %v288 = vadd.f32 %v124, %v286
    %v289 = vxor.u32 %v288, 2147483648
    %v290 = vmul.f32 %v289, 1.442695
    %v291 = vpow.pop %v290
    %v292 = vadd.f32 %v291, 1.0
    %v293 = vrcp.pop %v292
    %v294 = vmul.f32 1.0, %v293
    %295 = vrot.lane.b32.xlu0 %v286, 64
    %v296 = vpop.permute.xlu0 %295
    %v298 = vmul.f32 %v294, %v296
    %300 = vrot.lane.b32.xlu0 %v298, 64
    %v301 = vpop.permute.xlu0 %300
    %v303 = vadd.f32 %v124, %v301
    %v304 = vtanh.pop %v303
    %v305 = vsub.f32 1.0, %v294
    %307 = vrot.lane.b32.xlu0 %v304, 96
    %v308 = vpop.permute.xlu0 %307
    %v310 = vmul.f32 %v305, %v308
    %v311 = vrot.slane %v208, 6
    %v313 = vmul.f32 %v294, %v311
    %v314 = vadd.f32 %v310, %v313
    %v316 = vlaneseq
    %v317 = vshrl.u32 %v316, 7
    %v318 = vsub.s32 0, %v317
    %v319 = vrot.slane %v141, %v318
    %321 = vmatprep.subr.mxu0 0.0
    %322 = vmatpush1.msra.mxu0 0.0
    %323 = vmatprep.subr.mxu0 0.0
    %324 = vmatpush1.msra.mxu0 0.0
    %325 = vmatprep.subr.mxu0 0.0
    %326 = vmatpush1.msra.mxu0 0.0
    %327 = vmatprep.subr.mxu0 0.0
    %328 = vmatpush1.msra.mxu0 0.0
    %329 = vmatprep.subr.mxu0 0.0
    %330 = vmatpush1.msra.mxu0 0.0
    %331 = vmatprep.subr.mxu0 0.0
    %332 = vmatpush1.msra.mxu0 0.0
    %333 = vmatprep.subr.mxu0 0.0
    %334 = vmatpush1.msra.mxu0 0.0
    %335 = vmatprep.subr.mxu0 0.0
    %336 = vmatpush1.msra.mxu0 0.0
    %337 = vmatprep.subr.mxu0 0.0
    %338 = vmatpush1.msra.mxu0 0.0
    %339 = vmatprep.subr.mxu0 0.0
    %340 = vmatpush1.msra.mxu0 0.0
    %341 = vmatprep.subr.mxu0 0.0
    %342 = vmatpush1.msra.mxu0 0.0
    %343 = vmatprep.subr.mxu0 0.0
    %344 = vmatpush1.msra.mxu0 0.0
    %345 = vmatprep.subr.mxu0 0.0
    %346 = vmatpush1.msra.mxu0 %v140
    %347 = vmatprep.subr.mxu0 0.0
    %348 = vmatpush1.msra.mxu0 %v139
    %349 = vmatprep.subr.mxu0 0.0
    %350 = vmatpush1.msra.mxu0 %v138
    %351 = vmatprep.subr.mxu0 0.0
    %352 = vmatpush1.msra.mxu0 %v137
    %353 = vmatprep.subr.mxu0 0.0
    %354 = vmatpush2.msra.mxu0 0.0
    %355 = vmatprep.subr.mxu0 0.0
    %356 = vmatpush2.msra.mxu0 0.0
    %357 = vmatprep.subr.mxu0 0.0
    %358 = vmatpush2.msra.mxu0 0.0
    %359 = vmatprep.subr.mxu0 0.0
    %360 = vmatpush2.msra.mxu0 0.0
    %361 = vmatprep.subr.mxu0 0.0
    %362 = vmatpush2.msra.mxu0 0.0
    %363 = vmatprep.subr.mxu0 0.0
    %364 = vmatpush2.msra.mxu0 0.0
    %365 = vmatprep.subr.mxu0 0.0
    %366 = vmatpush2.msra.mxu0 0.0
    %367 = vmatprep.subr.mxu0 0.0
    %368 = vmatpush2.msra.mxu0 0.0
    %369 = vmatprep.subr.mxu0 0.0
    %370 = vmatpush2.msra.mxu0 0.0
    %371 = vmatprep.subr.mxu0 0.0
    %372 = vmatpush2.msra.mxu0 0.0
    %373 = vmatprep.subr.mxu0 0.0
    %374 = vmatpush2.msra.mxu0 0.0
    %375 = vmatprep.subr.mxu0 0.0
    %376 = vmatpush2.msra.mxu0 0.0
    %377 = vmatprep.subr.mxu0 0.0
    %378 = vmatpush2.msra.mxu0 0.0
    %379 = vmatprep.subr.mxu0 0.0
    %380 = vmatpush2.msra.mxu0 0.0
    %381 = vmatprep.subr.mxu0 0.0
    %382 = vmatpush2.msra.mxu0 0.0
    %383 = vmatprep.subr.mxu0 0.0
    %384 = vmatpush2.msra.mxu0 0.0
    %385 = vmatprep.mubr.f32.mxu0 0.0
    %386 = vmatmul.mubr.f32.gmra.mxu0 %v213
    %v387 = vpop.f32.mrf.mxu0
    %v388 = vadd.f32 %v319, %v387
    %v389 = vpop.f32.mrf.mxu0
    %390 = vdwg.mxu0
    %v392 = vlaneseq
    %v393 = vshrl.u32 %v392, 7
    %v394 = vsub.s32 0, %v393
    %v395 = vrot.slane %v146, %v394
    %v397 = vadd.f32 %v388, %v395
    %v398 = vxor.u32 %v397, 2147483648
    %v399 = vmul.f32 %v398, 1.442695
    %v400 = vpow.pop %v399
    %v401 = vadd.f32 %v400, 1.0
    %v402 = vrcp.pop %v401
    %v403 = vmul.f32 1.0, %v402
    %404 = vrot.lane.b32.xlu0 %v395, 64
    %v405 = vpop.permute.xlu0 %404
    %v407 = vmul.f32 %v403, %v405
    %409 = vrot.lane.b32.xlu0 %v407, 64
    %v410 = vpop.permute.xlu0 %409
    %v412 = vadd.f32 %v388, %v410
    %v413 = vtanh.pop %v412
    %v414 = vsub.f32 1.0, %v403
    %416 = vrot.lane.b32.xlu0 %v413, 96
    %v417 = vpop.permute.xlu0 %416
    %v419 = vmul.f32 %v414, %v417
    %v421 = vrot.slane %v314, 2
    %422 = vrot.lane.b32.xlu0 %v421, 96
    %v423 = vpop.permute.xlu0 %422
    %v424 = vsel %vm212, %v423, 0
    %426 = vmatprep.subr.mxu0 0.0
    %427 = vmatpush1.msra.mxu0 0.0
    %428 = vmatprep.subr.mxu0 0.0
    %429 = vmatpush1.msra.mxu0 0.0
    %430 = vmatprep.subr.mxu0 0.0
    %431 = vmatpush1.msra.mxu0 0.0
    %432 = vmatprep.subr.mxu0 0.0
    %433 = vmatpush1.msra.mxu0 0.0
    %434 = vmatprep.subr.mxu0 0.0
    %435 = vmatpush1.msra.mxu0 0.0
    %436 = vmatprep.subr.mxu0 0.0
    %437 = vmatpush1.msra.mxu0 0.0
    %438 = vmatprep.subr.mxu0 0.0
    %439 = vmatpush1.msra.mxu0 0.0
    %440 = vmatprep.subr.mxu0 0.0
    %441 = vmatpush1.msra.mxu0 0.0
    %442 = vmatprep.subr.mxu0 0.0
    %443 = vmatpush1.msra.mxu0 0.0
    %444 = vmatprep.subr.mxu0 0.0
    %445 = vmatpush1.msra.mxu0 0.0
    %446 = vmatprep.subr.mxu0 0.0
    %447 = vmatpush1.msra.mxu0 0.0
    %448 = vmatprep.subr.mxu0 0.0
    %449 = vmatpush1.msra.mxu0 0.0
    %450 = vmatprep.subr.mxu0 0.0
    %451 = vmatpush1.msra.mxu0 %v135
    %452 = vmatprep.subr.mxu0 0.0
    %453 = vmatpush1.msra.mxu0 %v134
    %454 = vmatprep.subr.mxu0 0.0
    %455 = vmatpush1.msra.mxu0 %v133
    %456 = vmatprep.subr.mxu0 0.0
    %457 = vmatpush1.msra.mxu0 %v132
    %458 = vmatprep.subr.mxu0 0.0
    %459 = vmatpush2.msra.mxu0 0.0
    %460 = vmatprep.subr.mxu0 0.0
    %461 = vmatpush2.msra.mxu0 0.0
    %462 = vmatprep.subr.mxu0 0.0
    %463 = vmatpush2.msra.mxu0 0.0
    %464 = vmatprep.subr.mxu0 0.0
    %465 = vmatpush2.msra.mxu0 0.0
    %466 = vmatprep.subr.mxu0 0.0
    %467 = vmatpush2.msra.mxu0 0.0
    %468 = vmatprep.subr.mxu0 0.0
    %469 = vmatpush2.msra.mxu0 0.0
    %470 = vmatprep.subr.mxu0 0.0
    %471 = vmatpush2.msra.mxu0 0.0
    %472 = vmatprep.subr.mxu0 0.0
    %473 = vmatpush2.msra.mxu0 0.0
    %474 = vmatprep.subr.mxu0 0.0
    %475 = vmatpush2.msra.mxu0 0.0
    %476 = vmatprep.subr.mxu0 0.0
    %477 = vmatpush2.msra.mxu0 0.0
    %478 = vmatprep.subr.mxu0 0.0
    %479 = vmatpush2.msra.mxu0 0.0
    %480 = vmatprep.subr.mxu0 0.0
    %481 = vmatpush2.msra.mxu0 0.0
    %482 = vmatprep.subr.mxu0 0.0
    %483 = vmatpush2.msra.mxu0 0.0
    %484 = vmatprep.subr.mxu0 0.0
    %485 = vmatpush2.msra.mxu0 0.0
    %486 = vmatprep.subr.mxu0 0.0
    %487 = vmatpush2.msra.mxu0 0.0
    %488 = vmatprep.subr.mxu0 0.0
    %489 = vmatpush2.msra.mxu0 0.0
    %490 = vmatprep.mubr.f32.mxu0 0.0
    %491 = vmatmul.mubr.f32.gmra.mxu0 %v424
    %v492 = vpop.f32.mrf.mxu0
    %v493 = vadd.f32 %v184, %v492
    %v494 = vpop.f32.mrf.mxu0
    %495 = vdwg.mxu0
    %v497 = vrot.slane %v493, 4
    %v499 = vadd.f32 %v124, %v497
    %v500 = vxor.u32 %v499, 2147483648
    %v501 = vmul.f32 %v500, 1.442695
    %v502 = vpow.pop %v501
    %v503 = vadd.f32 %v502, 1.0
    %v504 = vrcp.pop %v503
    %v505 = vmul.f32 1.0, %v504
    %506 = vrot.lane.b32.xlu0 %v497, 64
    %v507 = vpop.permute.xlu0 %506
    %v509 = vmul.f32 %v505, %v507
    %511 = vrot.lane.b32.xlu0 %v509, 64
    %v512 = vpop.permute.xlu0 %511
    %v514 = vadd.f32 %v124, %v512
    %v515 = vtanh.pop %v514
    %v516 = vsub.f32 1.0, %v505
    %518 = vrot.lane.b32.xlu0 %v515, 96
    %v519 = vpop.permute.xlu0 %518
    %v521 = vmul.f32 %v516, %v519
    %v522 = vrot.slane %v314, 6
    %v524 = vmul.f32 %v505, %v522
    %v525 = vadd.f32 %v521, %v524
    %526 = vmatprep.subr.mxu0 0.0
    %527 = vmatpush1.msra.mxu0 0.0
    %528 = vmatprep.subr.mxu0 0.0
    %529 = vmatpush1.msra.mxu0 0.0
    %530 = vmatprep.subr.mxu0 0.0
    %531 = vmatpush1.msra.mxu0 0.0
    %532 = vmatprep.subr.mxu0 0.0
    %533 = vmatpush1.msra.mxu0 0.0
    %534 = vmatprep.subr.mxu0 0.0
    %535 = vmatpush1.msra.mxu0 0.0
    %536 = vmatprep.subr.mxu0 0.0
    %537 = vmatpush1.msra.mxu0 0.0
    %538 = vmatprep.subr.mxu0 0.0
    %539 = vmatpush1.msra.mxu0 0.0
    %540 = vmatprep.subr.mxu0 0.0
    %541 = vmatpush1.msra.mxu0 0.0
    %542 = vmatprep.subr.mxu0 0.0
    %543 = vmatpush1.msra.mxu0 0.0
    %544 = vmatprep.subr.mxu0 0.0
    %545 = vmatpush1.msra.mxu0 0.0
    %546 = vmatprep.subr.mxu0 0.0
    %547 = vmatpush1.msra.mxu0 0.0
    %548 = vmatprep.subr.mxu0 0.0
    %549 = vmatpush1.msra.mxu0 0.0
    %550 = vmatprep.subr.mxu0 0.0
    %551 = vmatpush1.msra.mxu0 %v140
    %552 = vmatprep.subr.mxu0 0.0
    %553 = vmatpush1.msra.mxu0 %v139
    %554 = vmatprep.subr.mxu0 0.0
    %555 = vmatpush1.msra.mxu0 %v138
    %556 = vmatprep.subr.mxu0 0.0
    %557 = vmatpush1.msra.mxu0 %v137
    %558 = vmatprep.subr.mxu0 0.0
    %559 = vmatpush2.msra.mxu0 0.0
    %560 = vmatprep.subr.mxu0 0.0
    %561 = vmatpush2.msra.mxu0 0.0
    %562 = vmatprep.subr.mxu0 0.0
    %563 = vmatpush2.msra.mxu0 0.0
    %564 = vmatprep.subr.mxu0 0.0
    %565 = vmatpush2.msra.mxu0 0.0
    %566 = vmatprep.subr.mxu0 0.0
    %567 = vmatpush2.msra.mxu0 0.0
    %568 = vmatprep.subr.mxu0 0.0
    %569 = vmatpush2.msra.mxu0 0.0
    %570 = vmatprep.subr.mxu0 0.0
    %571 = vmatpush2.msra.mxu0 0.0
    %572 = vmatprep.subr.mxu0 0.0
    %573 = vmatpush2.msra.mxu0 0.0
    %574 = vmatprep.subr.mxu0 0.0
    %575 = vmatpush2.msra.mxu0 0.0
    %576 = vmatprep.subr.mxu0 0.0
    %577 = vmatpush2.msra.mxu0 0.0
    %578 = vmatprep.subr.mxu0 0.0
    %579 = vmatpush2.msra.mxu0 0.0
    %580 = vmatprep.subr.mxu0 0.0
    %581 = vmatpush2.msra.mxu0 0.0
    %582 = vmatprep.subr.mxu0 0.0
    %583 = vmatpush2.msra.mxu0 0.0
    %584 = vmatprep.subr.mxu0 0.0
    %585 = vmatpush2.msra.mxu0 0.0
    %586 = vmatprep.subr.mxu0 0.0
    %587 = vmatpush2.msra.mxu0 0.0
    %588 = vmatprep.subr.mxu0 0.0
    %589 = vmatpush2.msra.mxu0 0.0
    %590 = vmatprep.mubr.f32.mxu0 0.0
    %591 = vmatmul.mubr.f32.gmra.mxu0 %v424
    %v592 = vpop.f32.mrf.mxu0
    %v593 = vadd.f32 %v319, %v592
    %v594 = vpop.f32.mrf.mxu0
    %595 = vdwg.mxu0
    %597 = vrot.lane.b32.xlu0 %v419, 96
    %v598 = vpop.permute.xlu0 %597
    %v599 = vsel %vm212, %v598, 0
    %601 = vmatprep.subr.mxu0 0.0
    %602 = vmatpush1.msra.mxu0 0.0
    %603 = vmatprep.subr.mxu0 0.0
    %604 = vmatpush1.msra.mxu0 0.0
    %605 = vmatprep.subr.mxu0 0.0
    %606 = vmatpush1.msra.mxu0 0.0
    %607 = vmatprep.subr.mxu0 0.0
    %608 = vmatpush1.msra.mxu0 0.0
    %609 = vmatprep.subr.mxu0 0.0
    %610 = vmatpush1.msra.mxu0 0.0
    %611 = vmatprep.subr.mxu0 0.0
    %612 = vmatpush1.msra.mxu0 0.0
    %613 = vmatprep.subr.mxu0 0.0
    %614 = vmatpush1.msra.mxu0 0.0
    %615 = vmatprep.subr.mxu0 0.0
    %616 = vmatpush1.msra.mxu0 0.0
    %617 = vmatprep.subr.mxu0 0.0
    %618 = vmatpush1.msra.mxu0 0.0
    %619 = vmatprep.subr.mxu0 0.0
    %620 = vmatpush1.msra.mxu0 0.0
    %621 = vmatprep.subr.mxu0 0.0
    %622 = vmatpush1.msra.mxu0 0.0
    %623 = vmatprep.subr.mxu0 0.0
    %624 = vmatpush1.msra.mxu0 0.0
    %625 = vmatprep.subr.mxu0 0.0
    %626 = vmatpush1.msra.mxu0 %v145
    %627 = vmatprep.subr.mxu0 0.0
    %628 = vmatpush1.msra.mxu0 %v144
    %629 = vmatprep.subr.mxu0 0.0
    %630 = vmatpush1.msra.mxu0 %v143
    %631 = vmatprep.subr.mxu0 0.0
    %632 = vmatpush1.msra.mxu0 %v142
    %633 = vmatprep.subr.mxu0 0.0
    %634 = vmatpush2.msra.mxu0 0.0
    %635 = vmatprep.subr.mxu0 0.0
    %636 = vmatpush2.msra.mxu0 0.0
    %637 = vmatprep.subr.mxu0 0.0
    %638 = vmatpush2.msra.mxu0 0.0
    %639 = vmatprep.subr.mxu0 0.0
    %640 = vmatpush2.msra.mxu0 0.0
    %641 = vmatprep.subr.mxu0 0.0
    %642 = vmatpush2.msra.mxu0 0.0
    %643 = vmatprep.subr.mxu0 0.0
    %644 = vmatpush2.msra.mxu0 0.0
    %645 = vmatprep.subr.mxu0 0.0
    %646 = vmatpush2.msra.mxu0 0.0
    %647 = vmatprep.subr.mxu0 0.0
    %648 = vmatpush2.msra.mxu0 0.0
    %649 = vmatprep.subr.mxu0 0.0
    %650 = vmatpush2.msra.mxu0 0.0
    %651 = vmatprep.subr.mxu0 0.0
    %652 = vmatpush2.msra.mxu0 0.0
    %653 = vmatprep.subr.mxu0 0.0
    %654 = vmatpush2.msra.mxu0 0.0
    %655 = vmatprep.subr.mxu0 0.0
    %656 = vmatpush2.msra.mxu0 0.0
    %657 = vmatprep.subr.mxu0 0.0
    %658 = vmatpush2.msra.mxu0 0.0
    %659 = vmatprep.subr.mxu0 0.0
    %660 = vmatpush2.msra.mxu0 0.0
    %661 = vmatprep.subr.mxu0 0.0
    %662 = vmatpush2.msra.mxu0 0.0
    %663 = vmatprep.subr.mxu0 0.0
    %664 = vmatpush2.msra.mxu0 0.0
    %665 = vmatprep.mubr.f32.mxu0 0.0
    %666 = vmatmul.mubr.f32.gmra.mxu0 %v599
    %v667 = vpop.f32.mrf.mxu0
    %v668 = vadd.f32 %v395, %v667
    %v669 = vpop.f32.mrf.mxu0
    %670 = vdwg.mxu0
    %v671 = vadd.f32 %v593, %v668
    %v672 = vxor.u32 %v671, 2147483648
    %v673 = vmul.f32 %v672, 1.442695
    %v674 = vpow.pop %v673
    %v675 = vadd.f32 %v674, 1.0
    %v676 = vrcp.pop %v675
    %v677 = vmul.f32 1.0, %v676
    %679 = vrot.lane.b32.xlu0 %v668, 64
    %v680 = vpop.permute.xlu0 %679
    %v682 = vmul.f32 %v677, %v680
    %684 = vrot.lane.b32.xlu0 %v682, 64
    %v685 = vpop.permute.xlu0 %684
    %v687 = vadd.f32 %v593, %v685
    %v688 = vtanh.pop %v687
    %v689 = vsub.f32 1.0, %v677
    %691 = vrot.lane.b32.xlu0 %v688, 96
    %v692 = vpop.permute.xlu0 %691
    %v694 = vmul.f32 %v689, %v692
    %v695 = vmul.f32 %v677, %v419
    %v696 = vadd.f32 %v694, %v695
    %698 = vrot.lane.b32.xlu0 %v696, 96
    %v699 = vpop.permute.xlu0 %698
    %v700 = vsel %vm212, %v699, 0
    %702 = vmatprep.subr.mxu0 0.0
    %703 = vmatpush1.msra.mxu0 0.0
    %704 = vmatprep.subr.mxu0 0.0
    %705 = vmatpush1.msra.mxu0 0.0
    %706 = vmatprep.subr.mxu0 0.0
    %707 = vmatpush1.msra.mxu0 0.0
    %708 = vmatprep.subr.mxu0 0.0
    %709 = vmatpush1.msra.mxu0 0.0
    %710 = vmatprep.subr.mxu0 0.0
    %711 = vmatpush1.msra.mxu0 0.0
    %712 = vmatprep.subr.mxu0 0.0
    %713 = vmatpush1.msra.mxu0 0.0
    %714 = vmatprep.subr.mxu0 0.0
    %715 = vmatpush1.msra.mxu0 0.0
    %716 = vmatprep.subr.mxu0 0.0
    %717 = vmatpush1.msra.mxu0 0.0
    %718 = vmatprep.subr.mxu0 0.0
    %719 = vmatpush1.msra.mxu0 0.0
    %720 = vmatprep.subr.mxu0 0.0
    %721 = vmatpush1.msra.mxu0 0.0
    %722 = vmatprep.subr.mxu0 0.0
    %723 = vmatpush1.msra.mxu0 0.0
    %724 = vmatprep.subr.mxu0 0.0
    %725 = vmatpush1.msra.mxu0 0.0
    %726 = vmatprep.subr.mxu0 0.0
    %727 = vmatpush1.msra.mxu0 %v154
    %728 = vmatprep.subr.mxu0 0.0
    %729 = vmatpush1.msra.mxu0 %v153
    %730 = vmatprep.subr.mxu0 0.0
    %731 = vmatpush1.msra.mxu0 %v152
    %732 = vmatprep.subr.mxu0 0.0
    %733 = vmatpush1.msra.mxu0 %v151
    %734 = vmatprep.subr.mxu0 0.0
    %735 = vmatpush2.msra.mxu0 0.0
    %736 = vmatprep.subr.mxu0 0.0
    %737 = vmatpush2.msra.mxu0 0.0
    %738 = vmatprep.subr.mxu0 0.0
    %739 = vmatpush2.msra.mxu0 0.0
    %740 = vmatprep.subr.mxu0 0.0
    %741 = vmatpush2.msra.mxu0 0.0
    %742 = vmatprep.subr.mxu0 0.0
    %743 = vmatpush2.msra.mxu0 0.0
    %744 = vmatprep.subr.mxu0 0.0
    %745 = vmatpush2.msra.mxu0 0.0
    %746 = vmatprep.subr.mxu0 0.0
    %747 = vmatpush2.msra.mxu0 0.0
    %748 = vmatprep.subr.mxu0 0.0
    %749 = vmatpush2.msra.mxu0 0.0
    %750 = vmatprep.subr.mxu0 0.0
    %751 = vmatpush2.msra.mxu0 0.0
    %752 = vmatprep.subr.mxu0 0.0
    %753 = vmatpush2.msra.mxu0 0.0
    %754 = vmatprep.subr.mxu0 0.0
    %755 = vmatpush2.msra.mxu0 0.0
    %756 = vmatprep.subr.mxu0 0.0
    %757 = vmatpush2.msra.mxu0 0.0
    %758 = vmatprep.subr.mxu0 0.0
    %759 = vmatpush2.msra.mxu0 0.0
    %760 = vmatprep.subr.mxu0 0.0
    %761 = vmatpush2.msra.mxu0 0.0
    %762 = vmatprep.subr.mxu0 0.0
    %763 = vmatpush2.msra.mxu0 0.0
    %764 = vmatprep.subr.mxu0 0.0
    %765 = vmatpush2.msra.mxu0 0.0
    %766 = vmatprep.mubr.f32.mxu0 0.0
    %767 = vmatmul.mubr.f32.gmra.mxu0 %v700
    %v768 = vpop.f32.mrf.mxu0
    %v769 = vadd.f32 0.0, %v768
    %v770 = vpop.f32.mrf.mxu0
    %771 = vdwg.mxu0
    %772 = vmatprep.subr.mxu0 0.0
    %773 = vmatpush1.msra.mxu0 0.0
    %774 = vmatprep.subr.mxu0 0.0
    %775 = vmatpush1.msra.mxu0 0.0
    %776 = vmatprep.subr.mxu0 0.0
    %777 = vmatpush1.msra.mxu0 0.0
    %778 = vmatprep.subr.mxu0 0.0
    %779 = vmatpush1.msra.mxu0 0.0
    %780 = vmatprep.subr.mxu0 0.0
    %781 = vmatpush1.msra.mxu0 0.0
    %782 = vmatprep.subr.mxu0 0.0
    %783 = vmatpush1.msra.mxu0 0.0
    %784 = vmatprep.subr.mxu0 0.0
    %785 = vmatpush1.msra.mxu0 0.0
    %786 = vmatprep.subr.mxu0 0.0
    %787 = vmatpush1.msra.mxu0 0.0
    %788 = vmatprep.subr.mxu0 0.0
    %789 = vmatpush1.msra.mxu0 0.0
    %790 = vmatprep.subr.mxu0 0.0
    %791 = vmatpush1.msra.mxu0 0.0
    %792 = vmatprep.subr.mxu0 0.0
    %793 = vmatpush1.msra.mxu0 0.0
    %794 = vmatprep.subr.mxu0 0.0
    %795 = vmatpush1.msra.mxu0 0.0
    %796 = vmatprep.subr.mxu0 0.0
    %797 = vmatpush1.msra.mxu0 %v150
    %798 = vmatprep.subr.mxu0 0.0
    %799 = vmatpush1.msra.mxu0 %v149
    %800 = vmatprep.subr.mxu0 0.0
    %801 = vmatpush1.msra.mxu0 %v148
    %802 = vmatprep.subr.mxu0 0.0
    %803 = vmatpush1.msra.mxu0 %v147
    %804 = vmatprep.subr.mxu0 0.0
    %805 = vmatpush2.msra.mxu0 0.0
    %806 = vmatprep.subr.mxu0 0.0
    %807 = vmatpush2.msra.mxu0 0.0
    %808 = vmatprep.subr.mxu0 0.0
    %809 = vmatpush2.msra.mxu0 0.0
    %810 = vmatprep.subr.mxu0 0.0
    %811 = vmatpush2.msra.mxu0 0.0
    %812 = vmatprep.subr.mxu0 0.0
    %813 = vmatpush2.msra.mxu0 0.0
    %814 = vmatprep.subr.mxu0 0.0
    %815 = vmatpush2.msra.mxu0 0.0
    %816 = vmatprep.subr.mxu0 0.0
    %817 = vmatpush2.msra.mxu0 0.0
    %818 = vmatprep.subr.mxu0 0.0
    %819 = vmatpush2.msra.mxu0 0.0
    %820 = vmatprep.subr.mxu0 0.0
    %821 = vmatpush2.msra.mxu0 0.0
    %822 = vmatprep.subr.mxu0 0.0
    %823 = vmatpush2.msra.mxu0 0.0
    %824 = vmatprep.subr.mxu0 0.0
    %825 = vmatpush2.msra.mxu0 0.0
    %826 = vmatprep.subr.mxu0 0.0
    %827 = vmatpush2.msra.mxu0 0.0
    %828 = vmatprep.subr.mxu0 0.0
    %829 = vmatpush2.msra.mxu0 0.0
    %830 = vmatprep.subr.mxu0 0.0
    %831 = vmatpush2.msra.mxu0 0.0
    %832 = vmatprep.subr.mxu0 0.0
    %833 = vmatpush2.msra.mxu0 0.0
    %834 = vmatprep.subr.mxu0 0.0
    %835 = vmatpush2.msra.mxu0 0.0
    %836 = vmatprep.mubr.f32.mxu0 0.0
    %837 = vmatmul.mubr.f32.gmra.mxu0 %v599
    %v838 = vpop.f32.mrf.mxu0
    %v839 = vadd.f32 %v769, %v838
    %v840 = vpop.f32.mrf.mxu0
    %841 = vdwg.mxu0
    %v843 = vrot.slane %v525, 4
    %844 = vrot.lane.b32.xlu0 %v843, 96
    %v845 = vpop.permute.xlu0 %844
    %v846 = vsel %vm212, %v845, 0
    %848 = vmatprep.subr.mxu0 0.0
    %849 = vmatpush1.msra.mxu0 0.0
    %850 = vmatprep.subr.mxu0 0.0
    %851 = vmatpush1.msra.mxu0 0.0
    %852 = vmatprep.subr.mxu0 0.0
    %853 = vmatpush1.msra.mxu0 0.0
    %854 = vmatprep.subr.mxu0 0.0
    %855 = vmatpush1.msra.mxu0 0.0
    %856 = vmatprep.subr.mxu0 0.0
    %857 = vmatpush1.msra.mxu0 0.0
    %858 = vmatprep.subr.mxu0 0.0
    %859 = vmatpush1.msra.mxu0 0.0
    %860 = vmatprep.subr.mxu0 0.0
    %861 = vmatpush1.msra.mxu0 0.0
    %862 = vmatprep.subr.mxu0 0.0
    %863 = vmatpush1.msra.mxu0 0.0
    %864 = vmatprep.subr.mxu0 0.0
    %865 = vmatpush1.msra.mxu0 0.0
    %866 = vmatprep.subr.mxu0 0.0
    %867 = vmatpush1.msra.mxu0 0.0
    %868 = vmatprep.subr.mxu0 0.0
    %869 = vmatpush1.msra.mxu0 0.0
    %870 = vmatprep.subr.mxu0 0.0
    %871 = vmatpush1.msra.mxu0 0.0
    %872 = vmatprep.subr.mxu0 0.0
    %873 = vmatpush1.msra.mxu0 %v135
    %874 = vmatprep.subr.mxu0 0.0
    %875 = vmatpush1.msra.mxu0 %v134
    %876 = vmatprep.subr.mxu0 0.0
    %877 = vmatpush1.msra.mxu0 %v133
    %878 = vmatprep.subr.mxu0 0.0
    %879 = vmatpush1.msra.mxu0 %v132
    %880 = vmatprep.subr.mxu0 0.0
    %881 = vmatpush2.msra.mxu0 0.0
    %882 = vmatprep.subr.mxu0 0.0
    %883 = vmatpush2.msra.mxu0 0.0
    %884 = vmatprep.subr.mxu0 0.0
    %885 = vmatpush2.msra.mxu0 0.0
    %886 = vmatprep.subr.mxu0 0.0
    %887 = vmatpush2.msra.mxu0 0.0
    %888 = vmatprep.subr.mxu0 0.0
    %889 = vmatpush2.msra.mxu0 0.0
    %890 = vmatprep.subr.mxu0 0.0
    %891 = vmatpush2.msra.mxu0 0.0
    %892 = vmatprep.subr.mxu0 0.0
    %893 = vmatpush2.msra.mxu0 0.0
    %894 = vmatprep.subr.mxu0 0.0
    %895 = vmatpush2.msra.mxu0 0.0
    %896 = vmatprep.subr.mxu0 0.0
    %897 = vmatpush2.msra.mxu0 0.0
    %898 = vmatprep.subr.mxu0 0.0
    %899 = vmatpush2.msra.mxu0 0.0
    %900 = vmatprep.subr.mxu0 0.0
    %901 = vmatpush2.msra.mxu0 0.0
    %902 = vmatprep.subr.mxu0 0.0
    %903 = vmatpush2.msra.mxu0 0.0
    %904 = vmatprep.subr.mxu0 0.0
    %905 = vmatpush2.msra.mxu0 0.0
    %906 = vmatprep.subr.mxu0 0.0
    %907 = vmatpush2.msra.mxu0 0.0
    %908 = vmatprep.subr.mxu0 0.0
    %909 = vmatpush2.msra.mxu0 0.0
    %910 = vmatprep.subr.mxu0 0.0
    %911 = vmatpush2.msra.mxu0 0.0
    %912 = vmatprep.mubr.f32.mxu0 0.0
    %913 = vmatmul.mubr.f32.gmra.mxu0 %v846
    %v914 = vpop.f32.mrf.mxu0
    %v915 = vadd.f32 %v184, %v914
    %v916 = vpop.f32.mrf.mxu0
    %917 = vdwg.mxu0
    %v919 = vrot.slane %v915, 2
    %v921 = vadd.f32 %v124, %v919
    %v922 = vxor.u32 %v921, 2147483648
    %v923 = vmul.f32 %v922, 1.442695
    %v924 = vpow.pop %v923
    %v925 = vadd.f32 %v924, 1.0
    %v926 = vrcp.pop %v925
    %v927 = vmul.f32 1.0, %v926
    %928 = vrot.lane.b32.xlu0 %v919, 64
    %v929 = vpop.permute.xlu0 %928
    %v931 = vmul.f32 %v927, %v929
    %933 = vrot.lane.b32.xlu0 %v931, 64
    %v934 = vpop.permute.xlu0 %933
    %v936 = vadd.f32 %v124, %v934
    %v937 = vtanh.pop %v936
    %v938 = vsub.f32 1.0, %v927
    %940 = vrot.lane.b32.xlu0 %v937, 96
    %v941 = vpop.permute.xlu0 %940
    %v943 = vmul.f32 %v938, %v941
    %v944 = vrot.slane %v525, 6
    %v946 = vmul.f32 %v927, %v944
    %v947 = vadd.f32 %v943, %v946
    %948 = vmatprep.subr.mxu0 0.0
    %949 = vmatpush1.msra.mxu0 0.0
    %950 = vmatprep.subr.mxu0 0.0
    %951 = vmatpush1.msra.mxu0 0.0
    %952 = vmatprep.subr.mxu0 0.0
    %953 = vmatpush1.msra.mxu0 0.0
    %954 = vmatprep.subr.mxu0 0.0
    %955 = vmatpush1.msra.mxu0 0.0
    %956 = vmatprep.subr.mxu0 0.0
    %957 = vmatpush1.msra.mxu0 0.0
    %958 = vmatprep.subr.mxu0 0.0
    %959 = vmatpush1.msra.mxu0 0.0
    %960 = vmatprep.subr.mxu0 0.0
    %961 = vmatpush1.msra.mxu0 0.0
    %962 = vmatprep.subr.mxu0 0.0
    %963 = vmatpush1.msra.mxu0 0.0
    %964 = vmatprep.subr.mxu0 0.0
    %965 = vmatpush1.msra.mxu0 0.0
    %966 = vmatprep.subr.mxu0 0.0
    %967 = vmatpush1.msra.mxu0 0.0
    %968 = vmatprep.subr.mxu0 0.0
    %969 = vmatpush1.msra.mxu0 0.0
    %970 = vmatprep.subr.mxu0 0.0
    %971 = vmatpush1.msra.mxu0 0.0
    %972 = vmatprep.subr.mxu0 0.0
    %973 = vmatpush1.msra.mxu0 %v140
    %974 = vmatprep.subr.mxu0 0.0
    %975 = vmatpush1.msra.mxu0 %v139
    %976 = vmatprep.subr.mxu0 0.0
    %977 = vmatpush1.msra.mxu0 %v138
    %978 = vmatprep.subr.mxu0 0.0
    %979 = vmatpush1.msra.mxu0 %v137
    %980 = vmatprep.subr.mxu0 0.0
    %981 = vmatpush2.msra.mxu0 0.0
    %982 = vmatprep.subr.mxu0 0.0
    %983 = vmatpush2.msra.mxu0 0.0
    %984 = vmatprep.subr.mxu0 0.0
    %985 = vmatpush2.msra.mxu0 0.0
    %986 = vmatprep.subr.mxu0 0.0
    %987 = vmatpush2.msra.mxu0 0.0
    %988 = vmatprep.subr.mxu0 0.0
    %989 = vmatpush2.msra.mxu0 0.0
    %990 = vmatprep.subr.mxu0 0.0
    %991 = vmatpush2.msra.mxu0 0.0
    %992 = vmatprep.subr.mxu0 0.0
    %993 = vmatpush2.msra.mxu0 0.0
    %994 = vmatprep.subr.mxu0 0.0
    %995 = vmatpush2.msra.mxu0 0.0
    %996 = vmatprep.subr.mxu0 0.0
    %997 = vmatpush2.msra.mxu0 0.0
    %998 = vmatprep.subr.mxu0 0.0
    %999 = vmatpush2.msra.mxu0 0.0
    %1000 = vmatprep.subr.mxu0 0.0
    %1001 = vmatpush2.msra.mxu0 0.0
    %1002 = vmatprep.subr.mxu0 0.0
    %1003 = vmatpush2.msra.mxu0 0.0
    %1004 = vmatprep.subr.mxu0 0.0
    %1005 = vmatpush2.msra.mxu0 0.0
    %1006 = vmatprep.subr.mxu0 0.0
    %1007 = vmatpush2.msra.mxu0 0.0
    %1008 = vmatprep.subr.mxu0 0.0
    %1009 = vmatpush2.msra.mxu0 0.0
    %1010 = vmatprep.subr.mxu0 0.0
    %1011 = vmatpush2.msra.mxu0 0.0
    %1012 = vmatprep.mubr.f32.mxu0 0.0
    %1013 = vmatmul.mubr.f32.gmra.mxu0 %v846
    %v1014 = vpop.f32.mrf.mxu0
    %v1015 = vadd.f32 %v319, %v1014
    %v1016 = vpop.f32.mrf.mxu0
    %1017 = vdwg.mxu0
    %1018 = vmatprep.subr.mxu0 0.0
    %1019 = vmatpush1.msra.mxu0 0.0
    %1020 = vmatprep.subr.mxu0 0.0
    %1021 = vmatpush1.msra.mxu0 0.0
    %1022 = vmatprep.subr.mxu0 0.0
    %1023 = vmatpush1.msra.mxu0 0.0
    %1024 = vmatprep.subr.mxu0 0.0
    %1025 = vmatpush1.msra.mxu0 0.0
    %1026 = vmatprep.subr.mxu0 0.0
    %1027 = vmatpush1.msra.mxu0 0.0
    %1028 = vmatprep.subr.mxu0 0.0
    %1029 = vmatpush1.msra.mxu0 0.0
    %1030 = vmatprep.subr.mxu0 0.0
    %1031 = vmatpush1.msra.mxu0 0.0
    %1032 = vmatprep.subr.mxu0 0.0
    %1033 = vmatpush1.msra.mxu0 0.0
    %1034 = vmatprep.subr.mxu0 0.0
    %1035 = vmatpush1.msra.mxu0 0.0
    %1036 = vmatprep.subr.mxu0 0.0
    %1037 = vmatpush1.msra.mxu0 0.0
    %1038 = vmatprep.subr.mxu0 0.0
    %1039 = vmatpush1.msra.mxu0 0.0
    %1040 = vmatprep.subr.mxu0 0.0
    %1041 = vmatpush1.msra.mxu0 0.0
    %1042 = vmatprep.subr.mxu0 0.0
    %1043 = vmatpush1.msra.mxu0 %v145
    %1044 = vmatprep.subr.mxu0 0.0
    %1045 = vmatpush1.msra.mxu0 %v144
    %1046 = vmatprep.subr.mxu0 0.0
    %1047 = vmatpush1.msra.mxu0 %v143
    %1048 = vmatprep.subr.mxu0 0.0
    %1049 = vmatpush1.msra.mxu0 %v142
    %1050 = vmatprep.subr.mxu0 0.0
    %1051 = vmatpush2.msra.mxu0 0.0
    %1052 = vmatprep.subr.mxu0 0.0
    %1053 = vmatpush2.msra.mxu0 0.0
    %1054 = vmatprep.subr.mxu0 0.0
    %1055 = vmatpush2.msra.mxu0 0.0
    %1056 = vmatprep.subr.mxu0 0.0
    %1057 = vmatpush2.msra.mxu0 0.0
    %1058 = vmatprep.subr.mxu0 0.0
    %1059 = vmatpush2.msra.mxu0 0.0
    %1060 = vmatprep.subr.mxu0 0.0
    %1061 = vmatpush2.msra.mxu0 0.0
    %1062 = vmatprep.subr.mxu0 0.0
    %1063 = vmatpush2.msra.mxu0 0.0
    %1064 = vmatprep.subr.mxu0 0.0
    %1065 = vmatpush2.msra.mxu0 0.0
    %1066 = vmatprep.subr.mxu0 0.0
    %1067 = vmatpush2.msra.mxu0 0.0
    %1068 = vmatprep.subr.mxu0 0.0
    %1069 = vmatpush2.msra.mxu0 0.0
    %1070 = vmatprep.subr.mxu0 0.0
    %1071 = vmatpush2.msra.mxu0 0.0
    %1072 = vmatprep.subr.mxu0 0.0
    %1073 = vmatpush2.msra.mxu0 0.0
    %1074 = vmatprep.subr.mxu0 0.0
    %1075 = vmatpush2.msra.mxu0 0.0
    %1076 = vmatprep.subr.mxu0 0.0
    %1077 = vmatpush2.msra.mxu0 0.0
    %1078 = vmatprep.subr.mxu0 0.0
    %1079 = vmatpush2.msra.mxu0 0.0
    %1080 = vmatprep.subr.mxu0 0.0
    %1081 = vmatpush2.msra.mxu0 0.0
    %1082 = vmatprep.mubr.f32.mxu0 0.0
    %1083 = vmatmul.mubr.f32.gmra.mxu0 %v700
    %v1084 = vpop.f32.mrf.mxu0
    %v1085 = vadd.f32 %v395, %v1084
    %v1086 = vpop.f32.mrf.mxu0
    %1087 = vdwg.mxu0
    %v1088 = vadd.f32 %v1015, %v1085
    %v1089 = vxor.u32 %v1088, 2147483648
    %v1090 = vmul.f32 %v1089, 1.442695
    %v1091 = vpow.pop %v1090
    %v1092 = vadd.f32 %v1091, 1.0
    %v1093 = vrcp.pop %v1092
    %v1094 = vmul.f32 1.0, %v1093
    %1096 = vrot.lane.b32.xlu0 %v1085, 64
    %v1097 = vpop.permute.xlu0 %1096
    %v1099 = vmul.f32 %v1094, %v1097
    %1101 = vrot.lane.b32.xlu0 %v1099, 64
    %v1102 = vpop.permute.xlu0 %1101
    %v1104 = vadd.f32 %v1015, %v1102
    %v1105 = vtanh.pop %v1104
    %v1106 = vsub.f32 1.0, %v1094
    %1108 = vrot.lane.b32.xlu0 %v1105, 96
    %v1109 = vpop.permute.xlu0 %1108
    %v1111 = vmul.f32 %v1106, %v1109
    %v1112 = vmul.f32 %v1094, %v696
    %v1113 = vadd.f32 %v1111, %v1112
    %1115 = vrot.lane.b32.xlu0 %v1113, 96
    %v1116 = vpop.permute.xlu0 %1115
    %v1117 = vsel %vm212, %v1116, 0
    %1119 = vmatprep.subr.mxu0 0.0
    %1120 = vmatpush1.msra.mxu0 0.0
    %1121 = vmatprep.subr.mxu0 0.0
    %1122 = vmatpush1.msra.mxu0 0.0
    %1123 = vmatprep.subr.mxu0 0.0
    %1124 = vmatpush1.msra.mxu0 0.0
    %1125 = vmatprep.subr.mxu0 0.0
    %1126 = vmatpush1.msra.mxu0 0.0
    %1127 = vmatprep.subr.mxu0 0.0
    %1128 = vmatpush1.msra.mxu0 0.0
    %1129 = vmatprep.subr.mxu0 0.0
    %1130 = vmatpush1.msra.mxu0 0.0
    %1131 = vmatprep.subr.mxu0 0.0
    %1132 = vmatpush1.msra.mxu0 0.0
    %1133 = vmatprep.subr.mxu0 0.0
    %1134 = vmatpush1.msra.mxu0 0.0
    %1135 = vmatprep.subr.mxu0 0.0
    %1136 = vmatpush1.msra.mxu0 0.0
    %1137 = vmatprep.subr.mxu0 0.0
    %1138 = vmatpush1.msra.mxu0 0.0
    %1139 = vmatprep.subr.mxu0 0.0
    %1140 = vmatpush1.msra.mxu0 0.0
    %1141 = vmatprep.subr.mxu0 0.0
    %1142 = vmatpush1.msra.mxu0 0.0
    %1143 = vmatprep.subr.mxu0 0.0
    %1144 = vmatpush1.msra.mxu0 %v158
    %1145 = vmatprep.subr.mxu0 0.0
    %1146 = vmatpush1.msra.mxu0 %v157
    %1147 = vmatprep.subr.mxu0 0.0
    %1148 = vmatpush1.msra.mxu0 %v156
    %1149 = vmatprep.subr.mxu0 0.0
    %1150 = vmatpush1.msra.mxu0 %v155
    %1151 = vmatprep.subr.mxu0 0.0
    %1152 = vmatpush2.msra.mxu0 0.0
    %1153 = vmatprep.subr.mxu0 0.0
    %1154 = vmatpush2.msra.mxu0 0.0
    %1155 = vmatprep.subr.mxu0 0.0
    %1156 = vmatpush2.msra.mxu0 0.0
    %1157 = vmatprep.subr.mxu0 0.0
    %1158 = vmatpush2.msra.mxu0 0.0
    %1159 = vmatprep.subr.mxu0 0.0
    %1160 = vmatpush2.msra.mxu0 0.0
    %1161 = vmatprep.subr.mxu0 0.0
    %1162 = vmatpush2.msra.mxu0 0.0
    %1163 = vmatprep.subr.mxu0 0.0
    %1164 = vmatpush2.msra.mxu0 0.0
    %1165 = vmatprep.subr.mxu0 0.0
    %1166 = vmatpush2.msra.mxu0 0.0
    %1167 = vmatprep.subr.mxu0 0.0
    %1168 = vmatpush2.msra.mxu0 0.0
    %1169 = vmatprep.subr.mxu0 0.0
    %1170 = vmatpush2.msra.mxu0 0.0
    %1171 = vmatprep.subr.mxu0 0.0
    %1172 = vmatpush2.msra.mxu0 0.0
    %1173 = vmatprep.subr.mxu0 0.0
    %1174 = vmatpush2.msra.mxu0 0.0
    %1175 = vmatprep.subr.mxu0 0.0
    %1176 = vmatpush2.msra.mxu0 0.0
    %1177 = vmatprep.subr.mxu0 0.0
    %1178 = vmatpush2.msra.mxu0 0.0
    %1179 = vmatprep.subr.mxu0 0.0
    %1180 = vmatpush2.msra.mxu0 0.0
    %1181 = vmatprep.subr.mxu0 0.0
    %1182 = vmatpush2.msra.mxu0 0.0
    %1183 = vmatprep.mubr.f32.mxu0 0.0
    %1184 = vmatmul.mubr.f32.gmra.mxu0 %v1117
    %v1185 = vpop.f32.mrf.mxu0
    %v1186 = vadd.f32 0.0, %v1185
    %v1187 = vpop.f32.mrf.mxu0
    %1188 = vdwg.mxu0
    %v1189 = vadd.f32 %v839, %v1186
    %v1191 = vrot.slane %v947, 6
    %1192 = vrot.lane.b32.xlu0 %v1191, 96
    %v1193 = vpop.permute.xlu0 %1192
    %v1194 = vsel %vm212, %v1193, 0
    %1196 = vmatprep.subr.mxu0 0.0
    %1197 = vmatpush1.msra.mxu0 0.0
    %1198 = vmatprep.subr.mxu0 0.0
    %1199 = vmatpush1.msra.mxu0 0.0
    %1200 = vmatprep.subr.mxu0 0.0
    %1201 = vmatpush1.msra.mxu0 0.0
    %1202 = vmatprep.subr.mxu0 0.0
    %1203 = vmatpush1.msra.mxu0 0.0
    %1204 = vmatprep.subr.mxu0 0.0
    %1205 = vmatpush1.msra.mxu0 0.0
    %1206 = vmatprep.subr.mxu0 0.0
    %1207 = vmatpush1.msra.mxu0 0.0
    %1208 = vmatprep.subr.mxu0 0.0
    %1209 = vmatpush1.msra.mxu0 0.0
    %1210 = vmatprep.subr.mxu0 0.0
    %1211 = vmatpush1.msra.mxu0 0.0
    %1212 = vmatprep.subr.mxu0 0.0
    %1213 = vmatpush1.msra.mxu0 0.0
    %1214 = vmatprep.subr.mxu0 0.0
    %1215 = vmatpush1.msra.mxu0 0.0
    %1216 = vmatprep.subr.mxu0 0.0
    %1217 = vmatpush1.msra.mxu0 0.0
    %1218 = vmatprep.subr.mxu0 0.0
    %1219 = vmatpush1.msra.mxu0 0.0
    %1220 = vmatprep.subr.mxu0 0.0
    %1221 = vmatpush1.msra.mxu0 %v135
    %1222 = vmatprep.subr.mxu0 0.0
    %1223 = vmatpush1.msra.mxu0 %v134
    %1224 = vmatprep.subr.mxu0 0.0
    %1225 = vmatpush1.msra.mxu0 %v133
    %1226 = vmatprep.subr.mxu0 0.0
    %1227 = vmatpush1.msra.mxu0 %v132
    %1228 = vmatprep.subr.mxu0 0.0
    %1229 = vmatpush2.msra.mxu0 0.0
    %1230 = vmatprep.subr.mxu0 0.0
    %1231 = vmatpush2.msra.mxu0 0.0
    %1232 = vmatprep.subr.mxu0 0.0
    %1233 = vmatpush2.msra.mxu0 0.0
    %1234 = vmatprep.subr.mxu0 0.0
    %1235 = vmatpush2.msra.mxu0 0.0
    %1236 = vmatprep.subr.mxu0 0.0
    %1237 = vmatpush2.msra.mxu0 0.0
    %1238 = vmatprep.subr.mxu0 0.0
    %1239 = vmatpush2.msra.mxu0 0.0
    %1240 = vmatprep.subr.mxu0 0.0
    %1241 = vmatpush2.msra.mxu0 0.0
    %1242 = vmatprep.subr.mxu0 0.0
    %1243 = vmatpush2.msra.mxu0 0.0
    %1244 = vmatprep.subr.mxu0 0.0
    %1245 = vmatpush2.msra.mxu0 0.0
    %1246 = vmatprep.subr.mxu0 0.0
    %1247 = vmatpush2.msra.mxu0 0.0
    %1248 = vmatprep.subr.mxu0 0.0
    %1249 = vmatpush2.msra.mxu0 0.0
    %1250 = vmatprep.subr.mxu0 0.0
    %1251 = vmatpush2.msra.mxu0 0.0
    %1252 = vmatprep.subr.mxu0 0.0
    %1253 = vmatpush2.msra.mxu0 0.0
    %1254 = vmatprep.subr.mxu0 0.0
    %1255 = vmatpush2.msra.mxu0 0.0
    %1256 = vmatprep.subr.mxu0 0.0
    %1257 = vmatpush2.msra.mxu0 0.0
    %1258 = vmatprep.subr.mxu0 0.0
    %1259 = vmatpush2.msra.mxu0 0.0
    %1260 = vmatprep.mubr.f32.mxu0 0.0
    %1261 = vmatmul.mubr.f32.gmra.mxu0 %v1194
    %v1262 = vpop.f32.mrf.mxu0
    %v1263 = vadd.f32 %v184, %v1262
    %v1264 = vpop.f32.mrf.mxu0
    %1265 = vdwg.mxu0
    %v1266 = vadd.f32 %v129, %v1263
    %v1267 = vxor.u32 %v1266, 2147483648
    %v1268 = vmul.f32 %v1267, 1.442695
    %v1269 = vpow.pop %v1268
    %v1270 = vadd.f32 %v1269, 1.0
    %v1271 = vrcp.pop %v1270
    %v1272 = vmul.f32 1.0, %v1271
    %1274 = vrot.lane.b32.xlu0 %v1263, 64
    %v1275 = vpop.permute.xlu0 %1274
    %v1277 = vmul.f32 %v1272, %v1275
    %1279 = vrot.lane.b32.xlu0 %v1277, 64
    %v1280 = vpop.permute.xlu0 %1279
    %v1282 = vadd.f32 %v129, %v1280
    %v1283 = vtanh.pop %v1282
    %v1284 = vsub.f32 1.0, %v1272
    %1286 = vrot.lane.b32.xlu0 %v1283, 96
    %v1287 = vpop.permute.xlu0 %1286
    %v1289 = vmul.f32 %v1284, %v1287
    %v1291 = vmul.f32 %v1272, %v1191
    %v1292 = vadd.f32 %v1289, %v1291
    %1293 = vmatprep.subr.mxu0 0.0
    %1294 = vmatpush1.msra.mxu0 0.0
    %1295 = vmatprep.subr.mxu0 0.0
    %1296 = vmatpush1.msra.mxu0 0.0
    %1297 = vmatprep.subr.mxu0 0.0
    %1298 = vmatpush1.msra.mxu0 0.0
    %1299 = vmatprep.subr.mxu0 0.0
    %1300 = vmatpush1.msra.mxu0 0.0
    %1301 = vmatprep.subr.mxu0 0.0
    %1302 = vmatpush1.msra.mxu0 0.0
    %1303 = vmatprep.subr.mxu0 0.0
    %1304 = vmatpush1.msra.mxu0 0.0
    %1305 = vmatprep.subr.mxu0 0.0
    %1306 = vmatpush1.msra.mxu0 0.0
    %1307 = vmatprep.subr.mxu0 0.0
    %1308 = vmatpush1.msra.mxu0 0.0
    %1309 = vmatprep.subr.mxu0 0.0
    %1310 = vmatpush1.msra.mxu0 0.0
    %1311 = vmatprep.subr.mxu0 0.0
    %1312 = vmatpush1.msra.mxu0 0.0
    %1313 = vmatprep.subr.mxu0 0.0
    %1314 = vmatpush1.msra.mxu0 0.0
    %1315 = vmatprep.subr.mxu0 0.0
    %1316 = vmatpush1.msra.mxu0 0.0
    %1317 = vmatprep.subr.mxu0 0.0
    %1318 = vmatpush1.msra.mxu0 %v140
    %1319 = vmatprep.subr.mxu0 0.0
    %1320 = vmatpush1.msra.mxu0 %v139
    %1321 = vmatprep.subr.mxu0 0.0
    %1322 = vmatpush1.msra.mxu0 %v138
    %1323 = vmatprep.subr.mxu0 0.0
    %1324 = vmatpush1.msra.mxu0 %v137
    %1325 = vmatprep.subr.mxu0 0.0
    %1326 = vmatpush2.msra.mxu0 0.0
    %1327 = vmatprep.subr.mxu0 0.0
    %1328 = vmatpush2.msra.mxu0 0.0
    %1329 = vmatprep.subr.mxu0 0.0
    %1330 = vmatpush2.msra.mxu0 0.0
    %1331 = vmatprep.subr.mxu0 0.0
    %1332 = vmatpush2.msra.mxu0 0.0
    %1333 = vmatprep.subr.mxu0 0.0
    %1334 = vmatpush2.msra.mxu0 0.0
    %1335 = vmatprep.subr.mxu0 0.0
    %1336 = vmatpush2.msra.mxu0 0.0
    %1337 = vmatprep.subr.mxu0 0.0
    %1338 = vmatpush2.msra.mxu0 0.0
    %1339 = vmatprep.subr.mxu0 0.0
    %1340 = vmatpush2.msra.mxu0 0.0
    %1341 = vmatprep.subr.mxu0 0.0
    %1342 = vmatpush2.msra.mxu0 0.0
    %1343 = vmatprep.subr.mxu0 0.0
    %1344 = vmatpush2.msra.mxu0 0.0
    %1345 = vmatprep.subr.mxu0 0.0
    %1346 = vmatpush2.msra.mxu0 0.0
    %1347 = vmatprep.subr.mxu0 0.0
    %1348 = vmatpush2.msra.mxu0 0.0
    %1349 = vmatprep.subr.mxu0 0.0
    %1350 = vmatpush2.msra.mxu0 0.0
    %1351 = vmatprep.subr.mxu0 0.0
    %1352 = vmatpush2.msra.mxu0 0.0
    %1353 = vmatprep.subr.mxu0 0.0
    %1354 = vmatpush2.msra.mxu0 0.0
    %1355 = vmatprep.subr.mxu0 0.0
    %1356 = vmatpush2.msra.mxu0 0.0
    %1357 = vmatprep.mubr.f32.mxu0 0.0
    %1358 = vmatmul.mubr.f32.gmra.mxu0 %v1194
    %v1359 = vpop.f32.mrf.mxu0
    %v1360 = vadd.f32 %v319, %v1359
    %v1361 = vpop.f32.mrf.mxu0
    %1362 = vdwg.mxu0
    %1363 = vmatprep.subr.mxu0 0.0
    %1364 = vmatpush1.msra.mxu0 0.0
    %1365 = vmatprep.subr.mxu0 0.0
    %1366 = vmatpush1.msra.mxu0 0.0
    %1367 = vmatprep.subr.mxu0 0.0
    %1368 = vmatpush1.msra.mxu0 0.0
    %1369 = vmatprep.subr.mxu0 0.0
    %1370 = vmatpush1.msra.mxu0 0.0
    %1371 = vmatprep.subr.mxu0 0.0
    %1372 = vmatpush1.msra.mxu0 0.0
    %1373 = vmatprep.subr.mxu0 0.0
    %1374 = vmatpush1.msra.mxu0 0.0
    %1375 = vmatprep.subr.mxu0 0.0
    %1376 = vmatpush1.msra.mxu0 0.0
    %1377 = vmatprep.subr.mxu0 0.0
    %1378 = vmatpush1.msra.mxu0 0.0
    %1379 = vmatprep.subr.mxu0 0.0
    %1380 = vmatpush1.msra.mxu0 0.0
    %1381 = vmatprep.subr.mxu0 0.0
    %1382 = vmatpush1.msra.mxu0 0.0
    %1383 = vmatprep.subr.mxu0 0.0
    %1384 = vmatpush1.msra.mxu0 0.0
    %1385 = vmatprep.subr.mxu0 0.0
    %1386 = vmatpush1.msra.mxu0 0.0
    %1387 = vmatprep.subr.mxu0 0.0
    %1388 = vmatpush1.msra.mxu0 %v145
    %1389 = vmatprep.subr.mxu0 0.0
    %1390 = vmatpush1.msra.mxu0 %v144
    %1391 = vmatprep.subr.mxu0 0.0
    %1392 = vmatpush1.msra.mxu0 %v143
    %1393 = vmatprep.subr.mxu0 0.0
    %1394 = vmatpush1.msra.mxu0 %v142
    %1395 = vmatprep.subr.mxu0 0.0
    %1396 = vmatpush2.msra.mxu0 0.0
    %1397 = vmatprep.subr.mxu0 0.0
    %1398 = vmatpush2.msra.mxu0 0.0
    %1399 = vmatprep.subr.mxu0 0.0
    %1400 = vmatpush2.msra.mxu0 0.0
    %1401 = vmatprep.subr.mxu0 0.0
    %1402 = vmatpush2.msra.mxu0 0.0
    %1403 = vmatprep.subr.mxu0 0.0
    %1404 = vmatpush2.msra.mxu0 0.0
    %1405 = vmatprep.subr.mxu0 0.0
    %1406 = vmatpush2.msra.mxu0 0.0
    %1407 = vmatprep.subr.mxu0 0.0
    %1408 = vmatpush2.msra.mxu0 0.0
    %1409 = vmatprep.subr.mxu0 0.0
    %1410 = vmatpush2.msra.mxu0 0.0
    %1411 = vmatprep.subr.mxu0 0.0
    %1412 = vmatpush2.msra.mxu0 0.0
    %1413 = vmatprep.subr.mxu0 0.0
    %1414 = vmatpush2.msra.mxu0 0.0
    %1415 = vmatprep.subr.mxu0 0.0
    %1416 = vmatpush2.msra.mxu0 0.0
    %1417 = vmatprep.subr.mxu0 0.0
    %1418 = vmatpush2.msra.mxu0 0.0
    %1419 = vmatprep.subr.mxu0 0.0
    %1420 = vmatpush2.msra.mxu0 0.0
    %1421 = vmatprep.subr.mxu0 0.0
    %1422 = vmatpush2.msra.mxu0 0.0
    %1423 = vmatprep.subr.mxu0 0.0
    %1424 = vmatpush2.msra.mxu0 0.0
    %1425 = vmatprep.subr.mxu0 0.0
    %1426 = vmatpush2.msra.mxu0 0.0
    %1427 = vmatprep.mubr.f32.mxu0 0.0
    %1428 = vmatmul.mubr.f32.gmra.mxu0 %v1117
    %v1429 = vpop.f32.mrf.mxu0
    %v1430 = vadd.f32 %v395, %v1429
    %v1431 = vpop.f32.mrf.mxu0
    %1432 = vdwg.mxu0
    %v1433 = vadd.f32 %v1360, %v1430
    %v1434 = vxor.u32 %v1433, 2147483648
    %v1435 = vmul.f32 %v1434, 1.442695
    %v1436 = vpow.pop %v1435
    %v1437 = vadd.f32 %v1436, 1.0
    %v1438 = vrcp.pop %v1437
    %v1439 = vmul.f32 1.0, %v1438
    %1441 = vrot.lane.b32.xlu0 %v1430, 64
    %v1442 = vpop.permute.xlu0 %1441
    %v1444 = vmul.f32 %v1439, %v1442
    %1446 = vrot.lane.b32.xlu0 %v1444, 64
    %v1447 = vpop.permute.xlu0 %1446
    %v1449 = vadd.f32 %v1360, %v1447
    %v1450 = vtanh.pop %v1449
    %v1451 = vsub.f32 1.0, %v1439
    %1453 = vrot.lane.b32.xlu0 %v1450, 96
    %v1454 = vpop.permute.xlu0 %1453
    %v1456 = vmul.f32 %v1451, %v1454
    %v1457 = vmul.f32 %v1439, %v1113
    %v1458 = vadd.f32 %v1456, %v1457
    %1460 = vrot.lane.b32.xlu0 %v1458, 96
    %v1461 = vpop.permute.xlu0 %1460
    %v1462 = vsel %vm212, %v1461, 0
    %1464 = vmatprep.subr.mxu0 0.0
    %1465 = vmatpush1.msra.mxu0 0.0
    %1466 = vmatprep.subr.mxu0 0.0
    %1467 = vmatpush1.msra.mxu0 0.0
    %1468 = vmatprep.subr.mxu0 0.0
    %1469 = vmatpush1.msra.mxu0 0.0
    %1470 = vmatprep.subr.mxu0 0.0
    %1471 = vmatpush1.msra.mxu0 0.0
    %1472 = vmatprep.subr.mxu0 0.0
    %1473 = vmatpush1.msra.mxu0 0.0
    %1474 = vmatprep.subr.mxu0 0.0
    %1475 = vmatpush1.msra.mxu0 0.0
    %1476 = vmatprep.subr.mxu0 0.0
    %1477 = vmatpush1.msra.mxu0 0.0
    %1478 = vmatprep.subr.mxu0 0.0
    %1479 = vmatpush1.msra.mxu0 0.0
    %1480 = vmatprep.subr.mxu0 0.0
    %1481 = vmatpush1.msra.mxu0 0.0
    %1482 = vmatprep.subr.mxu0 0.0
    %1483 = vmatpush1.msra.mxu0 0.0
    %1484 = vmatprep.subr.mxu0 0.0
    %1485 = vmatpush1.msra.mxu0 0.0
    %1486 = vmatprep.subr.mxu0 0.0
    %1487 = vmatpush1.msra.mxu0 0.0
    %1488 = vmatprep.subr.mxu0 0.0
    %1489 = vmatpush1.msra.mxu0 %v162
    %1490 = vmatprep.subr.mxu0 0.0
    %1491 = vmatpush1.msra.mxu0 %v161
    %1492 = vmatprep.subr.mxu0 0.0
    %1493 = vmatpush1.msra.mxu0 %v160
    %1494 = vmatprep.subr.mxu0 0.0
    %1495 = vmatpush1.msra.mxu0 %v159
    %1496 = vmatprep.subr.mxu0 0.0
    %1497 = vmatpush2.msra.mxu0 0.0
    %1498 = vmatprep.subr.mxu0 0.0
    %1499 = vmatpush2.msra.mxu0 0.0
    %1500 = vmatprep.subr.mxu0 0.0
    %1501 = vmatpush2.msra.mxu0 0.0
    %1502 = vmatprep.subr.mxu0 0.0
    %1503 = vmatpush2.msra.mxu0 0.0
    %1504 = vmatprep.subr.mxu0 0.0
    %1505 = vmatpush2.msra.mxu0 0.0
    %1506 = vmatprep.subr.mxu0 0.0
    %1507 = vmatpush2.msra.mxu0 0.0
    %1508 = vmatprep.subr.mxu0 0.0
    %1509 = vmatpush2.msra.mxu0 0.0
    %1510 = vmatprep.subr.mxu0 0.0
    %1511 = vmatpush2.msra.mxu0 0.0
    %1512 = vmatprep.subr.mxu0 0.0
    %1513 = vmatpush2.msra.mxu0 0.0
    %1514 = vmatprep.subr.mxu0 0.0
    %1515 = vmatpush2.msra.mxu0 0.0
    %1516 = vmatprep.subr.mxu0 0.0
    %1517 = vmatpush2.msra.mxu0 0.0
    %1518 = vmatprep.subr.mxu0 0.0
    %1519 = vmatpush2.msra.mxu0 0.0
    %1520 = vmatprep.subr.mxu0 0.0
    %1521 = vmatpush2.msra.mxu0 0.0
    %1522 = vmatprep.subr.mxu0 0.0
    %1523 = vmatpush2.msra.mxu0 0.0
    %1524 = vmatprep.subr.mxu0 0.0
    %1525 = vmatpush2.msra.mxu0 0.0
    %1526 = vmatprep.subr.mxu0 0.0
    %1527 = vmatpush2.msra.mxu0 0.0
    %1528 = vmatprep.mubr.f32.mxu0 0.0
    %1529 = vmatmul.mubr.f32.gmra.mxu0 %v1462
    %v1530 = vpop.f32.mrf.mxu0
    %v1531 = vadd.f32 0.0, %v1530
    %v1532 = vpop.f32.mrf.mxu0
    %1533 = vdwg.mxu0
    %v1534 = vadd.f32 %v1189, %v1531
    %1536 = vrot.lane.b32.xlu0 %v1292, 96
    %v1537 = vpop.permute.xlu0 %1536
    %v1538 = vsel %vm212, %v1537, 0
    %1540 = vmatprep.subr.mxu0 0.0
    %1541 = vmatpush1.msra.mxu0 0.0
    %1542 = vmatprep.subr.mxu0 0.0
    %1543 = vmatpush1.msra.mxu0 0.0
    %1544 = vmatprep.subr.mxu0 0.0
    %1545 = vmatpush1.msra.mxu0 0.0
    %1546 = vmatprep.subr.mxu0 0.0
    %1547 = vmatpush1.msra.mxu0 0.0
    %1548 = vmatprep.subr.mxu0 0.0
    %1549 = vmatpush1.msra.mxu0 0.0
    %1550 = vmatprep.subr.mxu0 0.0
    %1551 = vmatpush1.msra.mxu0 0.0
    %1552 = vmatprep.subr.mxu0 0.0
    %1553 = vmatpush1.msra.mxu0 0.0
    %1554 = vmatprep.subr.mxu0 0.0
    %1555 = vmatpush1.msra.mxu0 0.0
    %1556 = vmatprep.subr.mxu0 0.0
    %1557 = vmatpush1.msra.mxu0 0.0
    %1558 = vmatprep.subr.mxu0 0.0
    %1559 = vmatpush1.msra.mxu0 0.0
    %1560 = vmatprep.subr.mxu0 0.0
    %1561 = vmatpush1.msra.mxu0 0.0
    %1562 = vmatprep.subr.mxu0 0.0
    %1563 = vmatpush1.msra.mxu0 0.0
    %1564 = vmatprep.subr.mxu0 0.0
    %1565 = vmatpush1.msra.mxu0 %v135
    %1566 = vmatprep.subr.mxu0 0.0
    %1567 = vmatpush1.msra.mxu0 %v134
    %1568 = vmatprep.subr.mxu0 0.0
    %1569 = vmatpush1.msra.mxu0 %v133
    %1570 = vmatprep.subr.mxu0 0.0
    %1571 = vmatpush1.msra.mxu0 %v132
    %1572 = vmatprep.subr.mxu0 0.0
    %1573 = vmatpush2.msra.mxu0 0.0
    %1574 = vmatprep.subr.mxu0 0.0
    %1575 = vmatpush2.msra.mxu0 0.0
    %1576 = vmatprep.subr.mxu0 0.0
    %1577 = vmatpush2.msra.mxu0 0.0
    %1578 = vmatprep.subr.mxu0 0.0
    %1579 = vmatpush2.msra.mxu0 0.0
    %1580 = vmatprep.subr.mxu0 0.0
    %1581 = vmatpush2.msra.mxu0 0.0
    %1582 = vmatprep.subr.mxu0 0.0
    %1583 = vmatpush2.msra.mxu0 0.0
    %1584 = vmatprep.subr.mxu0 0.0
    %1585 = vmatpush2.msra.mxu0 0.0
    %1586 = vmatprep.subr.mxu0 0.0
    %1587 = vmatpush2.msra.mxu0 0.0
    %1588 = vmatprep.subr.mxu0 0.0
    %1589 = vmatpush2.msra.mxu0 0.0
    %1590 = vmatprep.subr.mxu0 0.0
    %1591 = vmatpush2.msra.mxu0 0.0
    %1592 = vmatprep.subr.mxu0 0.0
    %1593 = vmatpush2.msra.mxu0 0.0
    %1594 = vmatprep.subr.mxu0 0.0
    %1595 = vmatpush2.msra.mxu0 0.0
    %1596 = vmatprep.subr.mxu0 0.0
    %1597 = vmatpush2.msra.mxu0 0.0
    %1598 = vmatprep.subr.mxu0 0.0
    %1599 = vmatpush2.msra.mxu0 0.0
    %1600 = vmatprep.subr.mxu0 0.0
    %1601 = vmatpush2.msra.mxu0 0.0
    %1602 = vmatprep.subr.mxu0 0.0
    %1603 = vmatpush2.msra.mxu0 0.0
    %1604 = vmatprep.mubr.f32.mxu0 0.0
    %1605 = vmatmul.mubr.f32.gmra.mxu0 %v1538
    %v1606 = vpop.f32.mrf.mxu0
    %v1607 = vadd.f32 %v184, %v1606
    %v1608 = vpop.f32.mrf.mxu0
    %1609 = vdwg.mxu0
    %v1611 = vrot.slane %v1607, 6
    %v1613 = vadd.f32 %v129, %v1611
    %v1614 = vxor.u32 %v1613, 2147483648
    %v1615 = vmul.f32 %v1614, 1.442695
    %v1616 = vpow.pop %v1615
    %v1617 = vadd.f32 %v1616, 1.0
    %v1618 = vrcp.pop %v1617
    %v1619 = vmul.f32 1.0, %v1618
    %1620 = vrot.lane.b32.xlu0 %v1611, 64
    %v1621 = vpop.permute.xlu0 %1620
    %v1623 = vmul.f32 %v1619, %v1621
    %1625 = vrot.lane.b32.xlu0 %v1623, 64
    %v1626 = vpop.permute.xlu0 %1625
    %v1628 = vadd.f32 %v129, %v1626
    %v1629 = vtanh.pop %v1628
    %v1630 = vsub.f32 1.0, %v1619
    %1632 = vrot.lane.b32.xlu0 %v1629, 96
    %v1633 = vpop.permute.xlu0 %1632
    %v1635 = vmul.f32 %v1630, %v1633
    %v1636 = vrot.slane %v1292, 6
    %v1638 = vmul.f32 %v1619, %v1636
    %v1639 = vadd.f32 %v1635, %v1638
    %1640 = vmatprep.subr.mxu0 0.0
    %1641 = vmatpush1.msra.mxu0 0.0
    %1642 = vmatprep.subr.mxu0 0.0
    %1643 = vmatpush1.msra.mxu0 0.0
    %1644 = vmatprep.subr.mxu0 0.0
    %1645 = vmatpush1.msra.mxu0 0.0
    %1646 = vmatprep.subr.mxu0 0.0
    %1647 = vmatpush1.msra.mxu0 0.0
    %1648 = vmatprep.subr.mxu0 0.0
    %1649 = vmatpush1.msra.mxu0 0.0
    %1650 = vmatprep.subr.mxu0 0.0
    %1651 = vmatpush1.msra.mxu0 0.0
    %1652 = vmatprep.subr.mxu0 0.0
    %1653 = vmatpush1.msra.mxu0 0.0
    %1654 = vmatprep.subr.mxu0 0.0
    %1655 = vmatpush1.msra.mxu0 0.0
    %1656 = vmatprep.subr.mxu0 0.0
    %1657 = vmatpush1.msra.mxu0 0.0
    %1658 = vmatprep.subr.mxu0 0.0
    %1659 = vmatpush1.msra.mxu0 0.0
    %1660 = vmatprep.subr.mxu0 0.0
    %1661 = vmatpush1.msra.mxu0 0.0
    %1662 = vmatprep.subr.mxu0 0.0
    %1663 = vmatpush1.msra.mxu0 0.0
    %1664 = vmatprep.subr.mxu0 0.0
    %1665 = vmatpush1.msra.mxu0 %v140
    %1666 = vmatprep.subr.mxu0 0.0
    %1667 = vmatpush1.msra.mxu0 %v139
    %1668 = vmatprep.subr.mxu0 0.0
    %1669 = vmatpush1.msra.mxu0 %v138
    %1670 = vmatprep.subr.mxu0 0.0
    %1671 = vmatpush1.msra.mxu0 %v137
    %1672 = vmatprep.subr.mxu0 0.0
    %1673 = vmatpush2.msra.mxu0 0.0
    %1674 = vmatprep.subr.mxu0 0.0
    %1675 = vmatpush2.msra.mxu0 0.0
    %1676 = vmatprep.subr.mxu0 0.0
    %1677 = vmatpush2.msra.mxu0 0.0
    %1678 = vmatprep.subr.mxu0 0.0
    %1679 = vmatpush2.msra.mxu0 0.0
    %1680 = vmatprep.subr.mxu0 0.0
    %1681 = vmatpush2.msra.mxu0 0.0
    %1682 = vmatprep.subr.mxu0 0.0
    %1683 = vmatpush2.msra.mxu0 0.0
    %1684 = vmatprep.subr.mxu0 0.0
    %1685 = vmatpush2.msra.mxu0 0.0
    %1686 = vmatprep.subr.mxu0 0.0
    %1687 = vmatpush2.msra.mxu0 0.0
    %1688 = vmatprep.subr.mxu0 0.0
    %1689 = vmatpush2.msra.mxu0 0.0
    %1690 = vmatprep.subr.mxu0 0.0
    %1691 = vmatpush2.msra.mxu0 0.0
    %1692 = vmatprep.subr.mxu0 0.0
    %1693 = vmatpush2.msra.mxu0 0.0
    %1694 = vmatprep.subr.mxu0 0.0
    %1695 = vmatpush2.msra.mxu0 0.0
    %1696 = vmatprep.subr.mxu0 0.0
    %1697 = vmatpush2.msra.mxu0 0.0
    %1698 = vmatprep.subr.mxu0 0.0
    %1699 = vmatpush2.msra.mxu0 0.0
    %1700 = vmatprep.subr.mxu0 0.0
    %1701 = vmatpush2.msra.mxu0 0.0
    %1702 = vmatprep.subr.mxu0 0.0
    %1703 = vmatpush2.msra.mxu0 0.0
    %1704 = vmatprep.mubr.f32.mxu0 0.0
    %1705 = vmatmul.mubr.f32.gmra.mxu0 %v1538
    %v1706 = vpop.f32.mrf.mxu0
    %v1707 = vadd.f32 %v319, %v1706
    %v1708 = vpop.f32.mrf.mxu0
    %1709 = vdwg.mxu0
    %1710 = vmatprep.subr.mxu0 0.0
    %1711 = vmatpush1.msra.mxu0 0.0
    %1712 = vmatprep.subr.mxu0 0.0
    %1713 = vmatpush1.msra.mxu0 0.0
    %1714 = vmatprep.subr.mxu0 0.0
    %1715 = vmatpush1.msra.mxu0 0.0
    %1716 = vmatprep.subr.mxu0 0.0
    %1717 = vmatpush1.msra.mxu0 0.0
    %1718 = vmatprep.subr.mxu0 0.0
    %1719 = vmatpush1.msra.mxu0 0.0
    %1720 = vmatprep.subr.mxu0 0.0
    %1721 = vmatpush1.msra.mxu0 0.0
    %1722 = vmatprep.subr.mxu0 0.0
    %1723 = vmatpush1.msra.mxu0 0.0
    %1724 = vmatprep.subr.mxu0 0.0
    %1725 = vmatpush1.msra.mxu0 0.0
    %1726 = vmatprep.subr.mxu0 0.0
    %1727 = vmatpush1.msra.mxu0 0.0
    %1728 = vmatprep.subr.mxu0 0.0
    %1729 = vmatpush1.msra.mxu0 0.0
    %1730 = vmatprep.subr.mxu0 0.0
    %1731 = vmatpush1.msra.mxu0 0.0
    %1732 = vmatprep.subr.mxu0 0.0
    %1733 = vmatpush1.msra.mxu0 0.0
    %1734 = vmatprep.subr.mxu0 0.0
    %1735 = vmatpush1.msra.mxu0 %v145
    %1736 = vmatprep.subr.mxu0 0.0
    %1737 = vmatpush1.msra.mxu0 %v144
    %1738 = vmatprep.subr.mxu0 0.0
    %1739 = vmatpush1.msra.mxu0 %v143
    %1740 = vmatprep.subr.mxu0 0.0
    %1741 = vmatpush1.msra.mxu0 %v142
    %1742 = vmatprep.subr.mxu0 0.0
    %1743 = vmatpush2.msra.mxu0 0.0
    %1744 = vmatprep.subr.mxu0 0.0
    %1745 = vmatpush2.msra.mxu0 0.0
    %1746 = vmatprep.subr.mxu0 0.0
    %1747 = vmatpush2.msra.mxu0 0.0
    %1748 = vmatprep.subr.mxu0 0.0
    %1749 = vmatpush2.msra.mxu0 0.0
    %1750 = vmatprep.subr.mxu0 0.0
    %1751 = vmatpush2.msra.mxu0 0.0
    %1752 = vmatprep.subr.mxu0 0.0
    %1753 = vmatpush2.msra.mxu0 0.0
    %1754 = vmatprep.subr.mxu0 0.0
    %1755 = vmatpush2.msra.mxu0 0.0
    %1756 = vmatprep.subr.mxu0 0.0
    %1757 = vmatpush2.msra.mxu0 0.0
    %1758 = vmatprep.subr.mxu0 0.0
    %1759 = vmatpush2.msra.mxu0 0.0
    %1760 = vmatprep.subr.mxu0 0.0
    %1761 = vmatpush2.msra.mxu0 0.0
    %1762 = vmatprep.subr.mxu0 0.0
    %1763 = vmatpush2.msra.mxu0 0.0
    %1764 = vmatprep.subr.mxu0 0.0
    %1765 = vmatpush2.msra.mxu0 0.0
    %1766 = vmatprep.subr.mxu0 0.0
    %1767 = vmatpush2.msra.mxu0 0.0
    %1768 = vmatprep.subr.mxu0 0.0
    %1769 = vmatpush2.msra.mxu0 0.0
    %1770 = vmatprep.subr.mxu0 0.0
    %1771 = vmatpush2.msra.mxu0 0.0
    %1772 = vmatprep.subr.mxu0 0.0
    %1773 = vmatpush2.msra.mxu0 0.0
    %1774 = vmatprep.mubr.f32.mxu0 0.0
    %1775 = vmatmul.mubr.f32.gmra.mxu0 %v1462
    %v1776 = vpop.f32.mrf.mxu0
    %v1777 = vadd.f32 %v395, %v1776
    %v1778 = vpop.f32.mrf.mxu0
    %1779 = vdwg.mxu0
    %v1780 = vadd.f32 %v1707, %v1777
    %v1781 = vxor.u32 %v1780, 2147483648
    %v1782 = vmul.f32 %v1781, 1.442695
    %v1783 = vpow.pop %v1782
    %v1784 = vadd.f32 %v1783, 1.0
    %v1785 = vrcp.pop %v1784
    %v1786 = vmul.f32 1.0, %v1785
    %1788 = vrot.lane.b32.xlu0 %v1777, 64
    %v1789 = vpop.permute.xlu0 %1788
    %v1791 = vmul.f32 %v1786, %v1789
    %1793 = vrot.lane.b32.xlu0 %v1791, 64
    %v1794 = vpop.permute.xlu0 %1793
    %v1796 = vadd.f32 %v1707, %v1794
    %v1797 = vtanh.pop %v1796
    %v1798 = vsub.f32 1.0, %v1786
    %1800 = vrot.lane.b32.xlu0 %v1797, 96
    %v1801 = vpop.permute.xlu0 %1800
    %v1803 = vmul.f32 %v1798, %v1801
    %v1804 = vmul.f32 %v1786, %v1458
    %v1805 = vadd.f32 %v1803, %v1804
    %1807 = vrot.lane.b32.xlu0 %v1805, 96
    %v1808 = vpop.permute.xlu0 %1807
    %v1809 = vsel %vm212, %v1808, 0
    %1811 = vmatprep.subr.mxu0 0.0
    %1812 = vmatpush1.msra.mxu0 0.0
    %1813 = vmatprep.subr.mxu0 0.0
    %1814 = vmatpush1.msra.mxu0 0.0
    %1815 = vmatprep.subr.mxu0 0.0
    %1816 = vmatpush1.msra.mxu0 0.0
    %1817 = vmatprep.subr.mxu0 0.0
    %1818 = vmatpush1.msra.mxu0 0.0
    %1819 = vmatprep.subr.mxu0 0.0
    %1820 = vmatpush1.msra.mxu0 0.0
    %1821 = vmatprep.subr.mxu0 0.0
    %1822 = vmatpush1.msra.mxu0 0.0
    %1823 = vmatprep.subr.mxu0 0.0
    %1824 = vmatpush1.msra.mxu0 0.0
    %1825 = vmatprep.subr.mxu0 0.0
    %1826 = vmatpush1.msra.mxu0 0.0
    %1827 = vmatprep.subr.mxu0 0.0
    %1828 = vmatpush1.msra.mxu0 0.0
    %1829 = vmatprep.subr.mxu0 0.0
    %1830 = vmatpush1.msra.mxu0 0.0
    %1831 = vmatprep.subr.mxu0 0.0
    %1832 = vmatpush1.msra.mxu0 0.0
    %1833 = vmatprep.subr.mxu0 0.0
    %1834 = vmatpush1.msra.mxu0 0.0
    %1835 = vmatprep.subr.mxu0 0.0
    %1836 = vmatpush1.msra.mxu0 %v166
    %1837 = vmatprep.subr.mxu0 0.0
    %1838 = vmatpush1.msra.mxu0 %v165
    %1839 = vmatprep.subr.mxu0 0.0
    %1840 = vmatpush1.msra.mxu0 %v164
    %1841 = vmatprep.subr.mxu0 0.0
    %1842 = vmatpush1.msra.mxu0 %v163
    %1843 = vmatprep.subr.mxu0 0.0
    %1844 = vmatpush2.msra.mxu0 0.0
    %1845 = vmatprep.subr.mxu0 0.0
    %1846 = vmatpush2.msra.mxu0 0.0
    %1847 = vmatprep.subr.mxu0 0.0
    %1848 = vmatpush2.msra.mxu0 0.0
    %1849 = vmatprep.subr.mxu0 0.0
    %1850 = vmatpush2.msra.mxu0 0.0
    %1851 = vmatprep.subr.mxu0 0.0
    %1852 = vmatpush2.msra.mxu0 0.0
    %1853 = vmatprep.subr.mxu0 0.0
    %1854 = vmatpush2.msra.mxu0 0.0
    %1855 = vmatprep.subr.mxu0 0.0
    %1856 = vmatpush2.msra.mxu0 0.0
    %1857 = vmatprep.subr.mxu0 0.0
    %1858 = vmatpush2.msra.mxu0 0.0
    %1859 = vmatprep.subr.mxu0 0.0
    %1860 = vmatpush2.msra.mxu0 0.0
    %1861 = vmatprep.subr.mxu0 0.0
    %1862 = vmatpush2.msra.mxu0 0.0
    %1863 = vmatprep.subr.mxu0 0.0
    %1864 = vmatpush2.msra.mxu0 0.0
    %1865 = vmatprep.subr.mxu0 0.0
    %1866 = vmatpush2.msra.mxu0 0.0
    %1867 = vmatprep.subr.mxu0 0.0
    %1868 = vmatpush2.msra.mxu0 0.0
    %1869 = vmatprep.subr.mxu0 0.0
    %1870 = vmatpush2.msra.mxu0 0.0
    %1871 = vmatprep.subr.mxu0 0.0
    %1872 = vmatpush2.msra.mxu0 0.0
    %1873 = vmatprep.subr.mxu0 0.0
    %1874 = vmatpush2.msra.mxu0 0.0
    %1875 = vmatprep.mubr.f32.mxu0 0.0
    %1876 = vmatmul.mubr.f32.gmra.mxu0 %v1809
    %v1877 = vpop.f32.mrf.mxu0
    %v1878 = vadd.f32 0.0, %v1877
    %v1879 = vpop.f32.mrf.mxu0
    %1880 = vdwg.mxu0
    %v1881 = vadd.f32 %v1534, %v1878
    %v1883 = vrot.slane %v1639, 2
    %1884 = vrot.lane.b32.xlu0 %v1883, 96
    %v1885 = vpop.permute.xlu0 %1884
    %v1886 = vsel %vm212, %v1885, 0
    %1888 = vmatprep.subr.mxu0 0.0
    %1889 = vmatpush1.msra.mxu0 0.0
    %1890 = vmatprep.subr.mxu0 0.0
    %1891 = vmatpush1.msra.mxu0 0.0
    %1892 = vmatprep.subr.mxu0 0.0
    %1893 = vmatpush1.msra.mxu0 0.0
    %1894 = vmatprep.subr.mxu0 0.0
    %1895 = vmatpush1.msra.mxu0 0.0
    %1896 = vmatprep.subr.mxu0 0.0
    %1897 = vmatpush1.msra.mxu0 0.0
    %1898 = vmatprep.subr.mxu0 0.0
    %1899 = vmatpush1.msra.mxu0 0.0
    %1900 = vmatprep.subr.mxu0 0.0
    %1901 = vmatpush1.msra.mxu0 0.0
    %1902 = vmatprep.subr.mxu0 0.0
    %1903 = vmatpush1.msra.mxu0 0.0
    %1904 = vmatprep.subr.mxu0 0.0
    %1905 = vmatpush1.msra.mxu0 0.0
    %1906 = vmatprep.subr.mxu0 0.0
    %1907 = vmatpush1.msra.mxu0 0.0
    %1908 = vmatprep.subr.mxu0 0.0
    %1909 = vmatpush1.msra.mxu0 0.0
    %1910 = vmatprep.subr.mxu0 0.0
    %1911 = vmatpush1.msra.mxu0 0.0
    %1912 = vmatprep.subr.mxu0 0.0
    %1913 = vmatpush1.msra.mxu0 %v135
    %1914 = vmatprep.subr.mxu0 0.0
    %1915 = vmatpush1.msra.mxu0 %v134
    %1916 = vmatprep.subr.mxu0 0.0
    %1917 = vmatpush1.msra.mxu0 %v133
    %1918 = vmatprep.subr.mxu0 0.0
    %1919 = vmatpush1.msra.mxu0 %v132
    %1920 = vmatprep.subr.mxu0 0.0
    %1921 = vmatpush2.msra.mxu0 0.0
    %1922 = vmatprep.subr.mxu0 0.0
    %1923 = vmatpush2.msra.mxu0 0.0
    %1924 = vmatprep.subr.mxu0 0.0
    %1925 = vmatpush2.msra.mxu0 0.0
    %1926 = vmatprep.subr.mxu0 0.0
    %1927 = vmatpush2.msra.mxu0 0.0
    %1928 = vmatprep.subr.mxu0 0.0
    %1929 = vmatpush2.msra.mxu0 0.0
    %1930 = vmatprep.subr.mxu0 0.0
    %1931 = vmatpush2.msra.mxu0 0.0
    %1932 = vmatprep.subr.mxu0 0.0
    %1933 = vmatpush2.msra.mxu0 0.0
    %1934 = vmatprep.subr.mxu0 0.0
    %1935 = vmatpush2.msra.mxu0 0.0
    %1936 = vmatprep.subr.mxu0 0.0
    %1937 = vmatpush2.msra.mxu0 0.0
    %1938 = vmatprep.subr.mxu0 0.0
    %1939 = vmatpush2.msra.mxu0 0.0
    %1940 = vmatprep.subr.mxu0 0.0
    %1941 = vmatpush2.msra.mxu0 0.0
    %1942 = vmatprep.subr.mxu0 0.0
    %1943 = vmatpush2.msra.mxu0 0.0
    %1944 = vmatprep.subr.mxu0 0.0
    %1945 = vmatpush2.msra.mxu0 0.0
    %1946 = vmatprep.subr.mxu0 0.0
    %1947 = vmatpush2.msra.mxu0 0.0
    %1948 = vmatprep.subr.mxu0 0.0
    %1949 = vmatpush2.msra.mxu0 0.0
    %1950 = vmatprep.subr.mxu0 0.0
    %1951 = vmatpush2.msra.mxu0 0.0
    %1952 = vmatprep.mubr.f32.mxu0 0.0
    %1953 = vmatmul.mubr.f32.gmra.mxu0 %v1886
    %v1954 = vpop.f32.mrf.mxu0
    %v1955 = vadd.f32 %v184, %v1954
    %v1956 = vpop.f32.mrf.mxu0
    %1957 = vdwg.mxu0
    %v1959 = vrot.slane %v1955, 4
    %v1961 = vadd.f32 %v129, %v1959
    %v1962 = vxor.u32 %v1961, 2147483648
    %v1963 = vmul.f32 %v1962, 1.442695
    %v1964 = vpow.pop %v1963
    %v1965 = vadd.f32 %v1964, 1.0
    %v1966 = vrcp.pop %v1965
    %v1967 = vmul.f32 1.0, %v1966
    %1968 = vrot.lane.b32.xlu0 %v1959, 64
    %v1969 = vpop.permute.xlu0 %1968
    %v1971 = vmul.f32 %v1967, %v1969
    %1973 = vrot.lane.b32.xlu0 %v1971, 64
    %v1974 = vpop.permute.xlu0 %1973
    %v1976 = vadd.f32 %v129, %v1974
    %v1977 = vtanh.pop %v1976
    %v1978 = vsub.f32 1.0, %v1967
    %1980 = vrot.lane.b32.xlu0 %v1977, 96
    %v1981 = vpop.permute.xlu0 %1980
    %v1983 = vmul.f32 %v1978, %v1981
    %v1984 = vrot.slane %v1639, 6
    %v1986 = vmul.f32 %v1967, %v1984
    %v1987 = vadd.f32 %v1983, %v1986
    %1988 = vmatprep.subr.mxu0 0.0
    %1989 = vmatpush1.msra.mxu0 0.0
    %1990 = vmatprep.subr.mxu0 0.0
    %1991 = vmatpush1.msra.mxu0 0.0
    %1992 = vmatprep.subr.mxu0 0.0
    %1993 = vmatpush1.msra.mxu0 0.0
    %1994 = vmatprep.subr.mxu0 0.0
    %1995 = vmatpush1.msra.mxu0 0.0
    %1996 = vmatprep.subr.mxu0 0.0
    %1997 = vmatpush1.msra.mxu0 0.0
    %1998 = vmatprep.subr.mxu0 0.0
    %1999 = vmatpush1.msra.mxu0 0.0
    %2000 = vmatprep.subr.mxu0 0.0
    %2001 = vmatpush1.msra.mxu0 0.0
    %2002 = vmatprep.subr.mxu0 0.0
    %2003 = vmatpush1.msra.mxu0 0.0
    %2004 = vmatprep.subr.mxu0 0.0
    %2005 = vmatpush1.msra.mxu0 0.0
    %2006 = vmatprep.subr.mxu0 0.0
    %2007 = vmatpush1.msra.mxu0 0.0
    %2008 = vmatprep.subr.mxu0 0.0
    %2009 = vmatpush1.msra.mxu0 0.0
    %2010 = vmatprep.subr.mxu0 0.0
    %2011 = vmatpush1.msra.mxu0 0.0
    %2012 = vmatprep.subr.mxu0 0.0
    %2013 = vmatpush1.msra.mxu0 %v140
    %2014 = vmatprep.subr.mxu0 0.0
    %2015 = vmatpush1.msra.mxu0 %v139
    %2016 = vmatprep.subr.mxu0 0.0
    %2017 = vmatpush1.msra.mxu0 %v138
    %2018 = vmatprep.subr.mxu0 0.0
    %2019 = vmatpush1.msra.mxu0 %v137
    %2020 = vmatprep.subr.mxu0 0.0
    %2021 = vmatpush2.msra.mxu0 0.0
    %2022 = vmatprep.subr.mxu0 0.0
    %2023 = vmatpush2.msra.mxu0 0.0
    %2024 = vmatprep.subr.mxu0 0.0
    %2025 = vmatpush2.msra.mxu0 0.0
    %2026 = vmatprep.subr.mxu0 0.0
    %2027 = vmatpush2.msra.mxu0 0.0
    %2028 = vmatprep.subr.mxu0 0.0
    %2029 = vmatpush2.msra.mxu0 0.0
    %2030 = vmatprep.subr.mxu0 0.0
    %2031 = vmatpush2.msra.mxu0 0.0
    %2032 = vmatprep.subr.mxu0 0.0
    %2033 = vmatpush2.msra.mxu0 0.0
    %2034 = vmatprep.subr.mxu0 0.0
    %2035 = vmatpush2.msra.mxu0 0.0
    %2036 = vmatprep.subr.mxu0 0.0
    %2037 = vmatpush2.msra.mxu0 0.0
    %2038 = vmatprep.subr.mxu0 0.0
    %2039 = vmatpush2.msra.mxu0 0.0
    %2040 = vmatprep.subr.mxu0 0.0
    %2041 = vmatpush2.msra.mxu0 0.0
    %2042 = vmatprep.subr.mxu0 0.0
    %2043 = vmatpush2.msra.mxu0 0.0
    %2044 = vmatprep.subr.mxu0 0.0
    %2045 = vmatpush2.msra.mxu0 0.0
    %2046 = vmatprep.subr.mxu0 0.0
    %2047 = vmatpush2.msra.mxu0 0.0
    %2048 = vmatprep.subr.mxu0 0.0
    %2049 = vmatpush2.msra.mxu0 0.0
    %2050 = vmatprep.subr.mxu0 0.0
    %2051 = vmatpush2.msra.mxu0 0.0
    %2052 = vmatprep.mubr.f32.mxu0 0.0
    %2053 = vmatmul.mubr.f32.gmra.mxu0 %v1886
    %v2054 = vpop.f32.mrf.mxu0
    %v2055 = vadd.f32 %v319, %v2054
    %v2056 = vpop.f32.mrf.mxu0
    %2057 = vdwg.mxu0
    %2058 = vmatprep.subr.mxu0 0.0
    %2059 = vmatpush1.msra.mxu0 0.0
    %2060 = vmatprep.subr.mxu0 0.0
    %2061 = vmatpush1.msra.mxu0 0.0
    %2062 = vmatprep.subr.mxu0 0.0
    %2063 = vmatpush1.msra.mxu0 0.0
    %2064 = vmatprep.subr.mxu0 0.0
    %2065 = vmatpush1.msra.mxu0 0.0
    %2066 = vmatprep.subr.mxu0 0.0
    %2067 = vmatpush1.msra.mxu0 0.0
    %2068 = vmatprep.subr.mxu0 0.0
    %2069 = vmatpush1.msra.mxu0 0.0
    %2070 = vmatprep.subr.mxu0 0.0
    %2071 = vmatpush1.msra.mxu0 0.0
    %2072 = vmatprep.subr.mxu0 0.0
    %2073 = vmatpush1.msra.mxu0 0.0
    %2074 = vmatprep.subr.mxu0 0.0
    %2075 = vmatpush1.msra.mxu0 0.0
    %2076 = vmatprep.subr.mxu0 0.0
    %2077 = vmatpush1.msra.mxu0 0.0
    %2078 = vmatprep.subr.mxu0 0.0
    %2079 = vmatpush1.msra.mxu0 0.0
    %2080 = vmatprep.subr.mxu0 0.0
    %2081 = vmatpush1.msra.mxu0 0.0
    %2082 = vmatprep.subr.mxu0 0.0
    %2083 = vmatpush1.msra.mxu0 %v145
    %2084 = vmatprep.subr.mxu0 0.0
    %2085 = vmatpush1.msra.mxu0 %v144
    %2086 = vmatprep.subr.mxu0 0.0
    %2087 = vmatpush1.msra.mxu0 %v143
    %2088 = vmatprep.subr.mxu0 0.0
    %2089 = vmatpush1.msra.mxu0 %v142
    %2090 = vmatprep.subr.mxu0 0.0
    %2091 = vmatpush2.msra.mxu0 0.0
    %2092 = vmatprep.subr.mxu0 0.0
    %2093 = vmatpush2.msra.mxu0 0.0
    %2094 = vmatprep.subr.mxu0 0.0
    %2095 = vmatpush2.msra.mxu0 0.0
    %2096 = vmatprep.subr.mxu0 0.0
    %2097 = vmatpush2.msra.mxu0 0.0
    %2098 = vmatprep.subr.mxu0 0.0
    %2099 = vmatpush2.msra.mxu0 0.0
    %2100 = vmatprep.subr.mxu0 0.0
    %2101 = vmatpush2.msra.mxu0 0.0
    %2102 = vmatprep.subr.mxu0 0.0
    %2103 = vmatpush2.msra.mxu0 0.0
    %2104 = vmatprep.subr.mxu0 0.0
    %2105 = vmatpush2.msra.mxu0 0.0
    %2106 = vmatprep.subr.mxu0 0.0
    %2107 = vmatpush2.msra.mxu0 0.0
    %2108 = vmatprep.subr.mxu0 0.0
    %2109 = vmatpush2.msra.mxu0 0.0
    %2110 = vmatprep.subr.mxu0 0.0
    %2111 = vmatpush2.msra.mxu0 0.0
    %2112 = vmatprep.subr.mxu0 0.0
    %2113 = vmatpush2.msra.mxu0 0.0
    %2114 = vmatprep.subr.mxu0 0.0
    %2115 = vmatpush2.msra.mxu0 0.0
    %2116 = vmatprep.subr.mxu0 0.0
    %2117 = vmatpush2.msra.mxu0 0.0
    %2118 = vmatprep.subr.mxu0 0.0
    %2119 = vmatpush2.msra.mxu0 0.0
    %2120 = vmatprep.subr.mxu0 0.0
    %2121 = vmatpush2.msra.mxu0 0.0
    %2122 = vmatprep.mubr.f32.mxu0 0.0
    %2123 = vmatmul.mubr.f32.gmra.mxu0 %v1809
    %v2124 = vpop.f32.mrf.mxu0
    %v2125 = vadd.f32 %v395, %v2124
    %v2126 = vpop.f32.mrf.mxu0
    %2127 = vdwg.mxu0
    %v2128 = vadd.f32 %v2055, %v2125
    %v2129 = vxor.u32 %v2128, 2147483648
    %v2130 = vmul.f32 %v2129, 1.442695
    %v2131 = vpow.pop %v2130
    %v2132 = vadd.f32 %v2131, 1.0
    %v2133 = vrcp.pop %v2132
    %v2134 = vmul.f32 1.0, %v2133
    %2136 = vrot.lane.b32.xlu0 %v2125, 64
    %v2137 = vpop.permute.xlu0 %2136
    %v2139 = vmul.f32 %v2134, %v2137
    %2141 = vrot.lane.b32.xlu0 %v2139, 64
    %v2142 = vpop.permute.xlu0 %2141
    %v2144 = vadd.f32 %v2055, %v2142
    %v2145 = vtanh.pop %v2144
    %v2146 = vsub.f32 1.0, %v2134
    %2148 = vrot.lane.b32.xlu0 %v2145, 96
    %v2149 = vpop.permute.xlu0 %2148
    %v2151 = vmul.f32 %v2146, %v2149
    %v2152 = vmul.f32 %v2134, %v1805
    %v2153 = vadd.f32 %v2151, %v2152
    %2155 = vrot.lane.b32.xlu0 %v2153, 96
    %v2156 = vpop.permute.xlu0 %2155
    %v2157 = vsel %vm212, %v2156, 0
    %2159 = vmatprep.subr.mxu0 0.0
    %2160 = vmatpush1.msra.mxu0 0.0
    %2161 = vmatprep.subr.mxu0 0.0
    %2162 = vmatpush1.msra.mxu0 0.0
    %2163 = vmatprep.subr.mxu0 0.0
    %2164 = vmatpush1.msra.mxu0 0.0
    %2165 = vmatprep.subr.mxu0 0.0
    %2166 = vmatpush1.msra.mxu0 0.0
    %2167 = vmatprep.subr.mxu0 0.0
    %2168 = vmatpush1.msra.mxu0 0.0
    %2169 = vmatprep.subr.mxu0 0.0
    %2170 = vmatpush1.msra.mxu0 0.0
    %2171 = vmatprep.subr.mxu0 0.0
    %2172 = vmatpush1.msra.mxu0 0.0
    %2173 = vmatprep.subr.mxu0 0.0
    %2174 = vmatpush1.msra.mxu0 0.0
    %2175 = vmatprep.subr.mxu0 0.0
    %2176 = vmatpush1.msra.mxu0 0.0
    %2177 = vmatprep.subr.mxu0 0.0
    %2178 = vmatpush1.msra.mxu0 0.0
    %2179 = vmatprep.subr.mxu0 0.0
    %2180 = vmatpush1.msra.mxu0 0.0
    %2181 = vmatprep.subr.mxu0 0.0
    %2182 = vmatpush1.msra.mxu0 0.0
    %2183 = vmatprep.subr.mxu0 0.0
    %2184 = vmatpush1.msra.mxu0 %v170
    %2185 = vmatprep.subr.mxu0 0.0
    %2186 = vmatpush1.msra.mxu0 %v169
    %2187 = vmatprep.subr.mxu0 0.0
    %2188 = vmatpush1.msra.mxu0 %v168
    %2189 = vmatprep.subr.mxu0 0.0
    %2190 = vmatpush1.msra.mxu0 %v167
    %2191 = vmatprep.subr.mxu0 0.0
    %2192 = vmatpush2.msra.mxu0 0.0
    %2193 = vmatprep.subr.mxu0 0.0
    %2194 = vmatpush2.msra.mxu0 0.0
    %2195 = vmatprep.subr.mxu0 0.0
    %2196 = vmatpush2.msra.mxu0 0.0
    %2197 = vmatprep.subr.mxu0 0.0
    %2198 = vmatpush2.msra.mxu0 0.0
    %2199 = vmatprep.subr.mxu0 0.0
    %2200 = vmatpush2.msra.mxu0 0.0
    %2201 = vmatprep.subr.mxu0 0.0
    %2202 = vmatpush2.msra.mxu0 0.0
    %2203 = vmatprep.subr.mxu0 0.0
    %2204 = vmatpush2.msra.mxu0 0.0
    %2205 = vmatprep.subr.mxu0 0.0
    %2206 = vmatpush2.msra.mxu0 0.0
    %2207 = vmatprep.subr.mxu0 0.0
    %2208 = vmatpush2.msra.mxu0 0.0
    %2209 = vmatprep.subr.mxu0 0.0
    %2210 = vmatpush2.msra.mxu0 0.0
    %2211 = vmatprep.subr.mxu0 0.0
    %2212 = vmatpush2.msra.mxu0 0.0
    %2213 = vmatprep.subr.mxu0 0.0
    %2214 = vmatpush2.msra.mxu0 0.0
    %2215 = vmatprep.subr.mxu0 0.0
    %2216 = vmatpush2.msra.mxu0 0.0
    %2217 = vmatprep.subr.mxu0 0.0
    %2218 = vmatpush2.msra.mxu0 0.0
    %2219 = vmatprep.subr.mxu0 0.0
    %2220 = vmatpush2.msra.mxu0 0.0
    %2221 = vmatprep.subr.mxu0 0.0
    %2222 = vmatpush2.msra.mxu0 0.0
    %2223 = vmatprep.mubr.f32.mxu0 0.0
    %2224 = vmatmul.mubr.f32.gmra.mxu0 %v2157
    %v2225 = vpop.f32.mrf.mxu0
    %v2226 = vadd.f32 0.0, %v2225
    %v2227 = vpop.f32.mrf.mxu0
    %2228 = vdwg.mxu0
    %v2229 = vadd.f32 %v1881, %v2226
    %v2231 = vrot.slane %v1987, 4
    %2232 = vrot.lane.b32.xlu0 %v2231, 96
    %v2233 = vpop.permute.xlu0 %2232
    %v2234 = vsel %vm212, %v2233, 0
    %2236 = vmatprep.subr.mxu0 0.0
    %2237 = vmatpush1.msra.mxu0 0.0
    %2238 = vmatprep.subr.mxu0 0.0
    %2239 = vmatpush1.msra.mxu0 0.0
    %2240 = vmatprep.subr.mxu0 0.0
    %2241 = vmatpush1.msra.mxu0 0.0
    %2242 = vmatprep.subr.mxu0 0.0
    %2243 = vmatpush1.msra.mxu0 0.0
    %2244 = vmatprep.subr.mxu0 0.0
    %2245 = vmatpush1.msra.mxu0 0.0
    %2246 = vmatprep.subr.mxu0 0.0
    %2247 = vmatpush1.msra.mxu0 0.0
    %2248 = vmatprep.subr.mxu0 0.0
    %2249 = vmatpush1.msra.mxu0 0.0
    %2250 = vmatprep.subr.mxu0 0.0
    %2251 = vmatpush1.msra.mxu0 0.0
    %2252 = vmatprep.subr.mxu0 0.0
    %2253 = vmatpush1.msra.mxu0 0.0
    %2254 = vmatprep.subr.mxu0 0.0
    %2255 = vmatpush1.msra.mxu0 0.0
    %2256 = vmatprep.subr.mxu0 0.0
    %2257 = vmatpush1.msra.mxu0 0.0
    %2258 = vmatprep.subr.mxu0 0.0
    %2259 = vmatpush1.msra.mxu0 0.0
    %2260 = vmatprep.subr.mxu0 0.0
    %2261 = vmatpush1.msra.mxu0 %v135
    %2262 = vmatprep.subr.mxu0 0.0
    %2263 = vmatpush1.msra.mxu0 %v134
    %2264 = vmatprep.subr.mxu0 0.0
    %2265 = vmatpush1.msra.mxu0 %v133
    %2266 = vmatprep.subr.mxu0 0.0
    %2267 = vmatpush1.msra.mxu0 %v132
    %2268 = vmatprep.subr.mxu0 0.0
    %2269 = vmatpush2.msra.mxu0 0.0
    %2270 = vmatprep.subr.mxu0 0.0
    %2271 = vmatpush2.msra.mxu0 0.0
    %2272 = vmatprep.subr.mxu0 0.0
    %2273 = vmatpush2.msra.mxu0 0.0
    %2274 = vmatprep.subr.mxu0 0.0
    %2275 = vmatpush2.msra.mxu0 0.0
    %2276 = vmatprep.subr.mxu0 0.0
    %2277 = vmatpush2.msra.mxu0 0.0
    %2278 = vmatprep.subr.mxu0 0.0
    %2279 = vmatpush2.msra.mxu0 0.0
    %2280 = vmatprep.subr.mxu0 0.0
    %2281 = vmatpush2.msra.mxu0 0.0
    %2282 = vmatprep.subr.mxu0 0.0
    %2283 = vmatpush2.msra.mxu0 0.0
    %2284 = vmatprep.subr.mxu0 0.0
    %2285 = vmatpush2.msra.mxu0 0.0
    %2286 = vmatprep.subr.mxu0 0.0
    %2287 = vmatpush2.msra.mxu0 0.0
    %2288 = vmatprep.subr.mxu0 0.0
    %2289 = vmatpush2.msra.mxu0 0.0
    %2290 = vmatprep.subr.mxu0 0.0
    %2291 = vmatpush2.msra.mxu0 0.0
    %2292 = vmatprep.subr.mxu0 0.0
    %2293 = vmatpush2.msra.mxu0 0.0
    %2294 = vmatprep.subr.mxu0 0.0
    %2295 = vmatpush2.msra.mxu0 0.0
    %2296 = vmatprep.subr.mxu0 0.0
    %2297 = vmatpush2.msra.mxu0 0.0
    %2298 = vmatprep.subr.mxu0 0.0
    %2299 = vmatpush2.msra.mxu0 0.0
    %2300 = vmatprep.mubr.f32.mxu0 0.0
    %2301 = vmatmul.mubr.f32.gmra.mxu0 %v2234
    %v2302 = vpop.f32.mrf.mxu0
    %v2303 = vadd.f32 %v184, %v2302
    %v2304 = vpop.f32.mrf.mxu0
    %2305 = vdwg.mxu0
    %v2307 = vrot.slane %v2303, 2
    %v2309 = vadd.f32 %v129, %v2307
    %v2310 = vxor.u32 %v2309, 2147483648
    %v2311 = vmul.f32 %v2310, 1.442695
    %v2312 = vpow.pop %v2311
    %v2313 = vadd.f32 %v2312, 1.0
    %v2314 = vrcp.pop %v2313
    %v2315 = vmul.f32 1.0, %v2314
    %2316 = vrot.lane.b32.xlu0 %v2307, 64
    %v2317 = vpop.permute.xlu0 %2316
    %v2319 = vmul.f32 %v2315, %v2317
    %2321 = vrot.lane.b32.xlu0 %v2319, 64
    %v2322 = vpop.permute.xlu0 %2321
    %v2324 = vadd.f32 %v129, %v2322
    %v2325 = vtanh.pop %v2324
    %v2326 = vsub.f32 1.0, %v2315
    %2328 = vrot.lane.b32.xlu0 %v2325, 96
    %v2329 = vpop.permute.xlu0 %2328
    %v2331 = vmul.f32 %v2326, %v2329
    %v2332 = vrot.slane %v1987, 6
    %v2334 = vmul.f32 %v2315, %v2332
    %v2335 = vadd.f32 %v2331, %v2334
    %2336 = vmatprep.subr.mxu0 0.0
    %2337 = vmatpush1.msra.mxu0 0.0
    %2338 = vmatprep.subr.mxu0 0.0
    %2339 = vmatpush1.msra.mxu0 0.0
    %2340 = vmatprep.subr.mxu0 0.0
    %2341 = vmatpush1.msra.mxu0 0.0
    %2342 = vmatprep.subr.mxu0 0.0
    %2343 = vmatpush1.msra.mxu0 0.0
    %2344 = vmatprep.subr.mxu0 0.0
    %2345 = vmatpush1.msra.mxu0 0.0
    %2346 = vmatprep.subr.mxu0 0.0
    %2347 = vmatpush1.msra.mxu0 0.0
    %2348 = vmatprep.subr.mxu0 0.0
    %2349 = vmatpush1.msra.mxu0 0.0
    %2350 = vmatprep.subr.mxu0 0.0
    %2351 = vmatpush1.msra.mxu0 0.0
    %2352 = vmatprep.subr.mxu0 0.0
    %2353 = vmatpush1.msra.mxu0 0.0
    %2354 = vmatprep.subr.mxu0 0.0
    %2355 = vmatpush1.msra.mxu0 0.0
    %2356 = vmatprep.subr.mxu0 0.0
    %2357 = vmatpush1.msra.mxu0 0.0
    %2358 = vmatprep.subr.mxu0 0.0
    %2359 = vmatpush1.msra.mxu0 0.0
    %2360 = vmatprep.subr.mxu0 0.0
    %2361 = vmatpush1.msra.mxu0 %v140
    %2362 = vmatprep.subr.mxu0 0.0
    %2363 = vmatpush1.msra.mxu0 %v139
    %2364 = vmatprep.subr.mxu0 0.0
    %2365 = vmatpush1.msra.mxu0 %v138
    %2366 = vmatprep.subr.mxu0 0.0
    %2367 = vmatpush1.msra.mxu0 %v137
    %2368 = vmatprep.subr.mxu0 0.0
    %2369 = vmatpush2.msra.mxu0 0.0
    %2370 = vmatprep.subr.mxu0 0.0
    %2371 = vmatpush2.msra.mxu0 0.0
    %2372 = vmatprep.subr.mxu0 0.0
    %2373 = vmatpush2.msra.mxu0 0.0
    %2374 = vmatprep.subr.mxu0 0.0
    %2375 = vmatpush2.msra.mxu0 0.0
    %2376 = vmatprep.subr.mxu0 0.0
    %2377 = vmatpush2.msra.mxu0 0.0
    %2378 = vmatprep.subr.mxu0 0.0
    %2379 = vmatpush2.msra.mxu0 0.0
    %2380 = vmatprep.subr.mxu0 0.0
    %2381 = vmatpush2.msra.mxu0 0.0
    %2382 = vmatprep.subr.mxu0 0.0
    %2383 = vmatpush2.msra.mxu0 0.0
    %2384 = vmatprep.subr.mxu0 0.0
    %2385 = vmatpush2.msra.mxu0 0.0
    %2386 = vmatprep.subr.mxu0 0.0
    %2387 = vmatpush2.msra.mxu0 0.0
    %2388 = vmatprep.subr.mxu0 0.0
    %2389 = vmatpush2.msra.mxu0 0.0
    %2390 = vmatprep.subr.mxu0 0.0
    %2391 = vmatpush2.msra.mxu0 0.0
    %2392 = vmatprep.subr.mxu0 0.0
    %2393 = vmatpush2.msra.mxu0 0.0
    %2394 = vmatprep.subr.mxu0 0.0
    %2395 = vmatpush2.msra.mxu0 0.0
    %2396 = vmatprep.subr.mxu0 0.0
    %2397 = vmatpush2.msra.mxu0 0.0
    %2398 = vmatprep.subr.mxu0 0.0
    %2399 = vmatpush2.msra.mxu0 0.0
    %2400 = vmatprep.mubr.f32.mxu0 0.0
    %2401 = vmatmul.mubr.f32.gmra.mxu0 %v2234
    %v2402 = vpop.f32.mrf.mxu0
    %v2403 = vadd.f32 %v319, %v2402
    %v2404 = vpop.f32.mrf.mxu0
    %2405 = vdwg.mxu0
    %2406 = vmatprep.subr.mxu0 0.0
    %2407 = vmatpush1.msra.mxu0 0.0
    %2408 = vmatprep.subr.mxu0 0.0
    %2409 = vmatpush1.msra.mxu0 0.0
    %2410 = vmatprep.subr.mxu0 0.0
    %2411 = vmatpush1.msra.mxu0 0.0
    %2412 = vmatprep.subr.mxu0 0.0
    %2413 = vmatpush1.msra.mxu0 0.0
    %2414 = vmatprep.subr.mxu0 0.0
    %2415 = vmatpush1.msra.mxu0 0.0
    %2416 = vmatprep.subr.mxu0 0.0
    %2417 = vmatpush1.msra.mxu0 0.0
    %2418 = vmatprep.subr.mxu0 0.0
    %2419 = vmatpush1.msra.mxu0 0.0
    %2420 = vmatprep.subr.mxu0 0.0
    %2421 = vmatpush1.msra.mxu0 0.0
    %2422 = vmatprep.subr.mxu0 0.0
    %2423 = vmatpush1.msra.mxu0 0.0
    %2424 = vmatprep.subr.mxu0 0.0
    %2425 = vmatpush1.msra.mxu0 0.0
    %2426 = vmatprep.subr.mxu0 0.0
    %2427 = vmatpush1.msra.mxu0 0.0
    %2428 = vmatprep.subr.mxu0 0.0
    %2429 = vmatpush1.msra.mxu0 0.0
    %2430 = vmatprep.subr.mxu0 0.0
    %2431 = vmatpush1.msra.mxu0 %v145
    %2432 = vmatprep.subr.mxu0 0.0
    %2433 = vmatpush1.msra.mxu0 %v144
    %2434 = vmatprep.subr.mxu0 0.0
    %2435 = vmatpush1.msra.mxu0 %v143
    %2436 = vmatprep.subr.mxu0 0.0
    %2437 = vmatpush1.msra.mxu0 %v142
    %2438 = vmatprep.subr.mxu0 0.0
    %2439 = vmatpush2.msra.mxu0 0.0
    %2440 = vmatprep.subr.mxu0 0.0
    %2441 = vmatpush2.msra.mxu0 0.0
    %2442 = vmatprep.subr.mxu0 0.0
    %2443 = vmatpush2.msra.mxu0 0.0
    %2444 = vmatprep.subr.mxu0 0.0
    %2445 = vmatpush2.msra.mxu0 0.0
    %2446 = vmatprep.subr.mxu0 0.0
    %2447 = vmatpush2.msra.mxu0 0.0
    %2448 = vmatprep.subr.mxu0 0.0
    %2449 = vmatpush2.msra.mxu0 0.0
    %2450 = vmatprep.subr.mxu0 0.0
    %2451 = vmatpush2.msra.mxu0 0.0
    %2452 = vmatprep.subr.mxu0 0.0
    %2453 = vmatpush2.msra.mxu0 0.0
    %2454 = vmatprep.subr.mxu0 0.0
    %2455 = vmatpush2.msra.mxu0 0.0
    %2456 = vmatprep.subr.mxu0 0.0
    %2457 = vmatpush2.msra.mxu0 0.0
    %2458 = vmatprep.subr.mxu0 0.0
    %2459 = vmatpush2.msra.mxu0 0.0
    %2460 = vmatprep.subr.mxu0 0.0
    %2461 = vmatpush2.msra.mxu0 0.0
    %2462 = vmatprep.subr.mxu0 0.0
    %2463 = vmatpush2.msra.mxu0 0.0
    %2464 = vmatprep.subr.mxu0 0.0
    %2465 = vmatpush2.msra.mxu0 0.0
    %2466 = vmatprep.subr.mxu0 0.0
    %2467 = vmatpush2.msra.mxu0 0.0
    %2468 = vmatprep.subr.mxu0 0.0
    %2469 = vmatpush2.msra.mxu0 0.0
    %2470 = vmatprep.mubr.f32.mxu0 0.0
    %2471 = vmatmul.mubr.f32.gmra.mxu0 %v2157
    %v2472 = vpop.f32.mrf.mxu0
    %v2473 = vadd.f32 %v395, %v2472
    %v2474 = vpop.f32.mrf.mxu0
    %2475 = vdwg.mxu0
    %v2476 = vadd.f32 %v2403, %v2473
    %v2477 = vxor.u32 %v2476, 2147483648
    %v2478 = vmul.f32 %v2477, 1.442695
    %v2479 = vpow.pop %v2478
    %v2480 = vadd.f32 %v2479, 1.0
    %v2481 = vrcp.pop %v2480
    %v2482 = vmul.f32 1.0, %v2481
    %2484 = vrot.lane.b32.xlu0 %v2473, 64
    %v2485 = vpop.permute.xlu0 %2484
    %v2487 = vmul.f32 %v2482, %v2485
    %2489 = vrot.lane.b32.xlu0 %v2487, 64
    %v2490 = vpop.permute.xlu0 %2489
    %v2492 = vadd.f32 %v2403, %v2490
    %v2493 = vtanh.pop %v2492
    %v2494 = vsub.f32 1.0, %v2482
    %2496 = vrot.lane.b32.xlu0 %v2493, 96
    %v2497 = vpop.permute.xlu0 %2496
    %v2499 = vmul.f32 %v2494, %v2497
    %v2500 = vmul.f32 %v2482, %v2153
    %v2501 = vadd.f32 %v2499, %v2500
    %2503 = vrot.lane.b32.xlu0 %v2501, 96
    %v2504 = vpop.permute.xlu0 %2503
    %v2505 = vsel %vm212, %v2504, 0
    %2507 = vmatprep.subr.mxu0 0.0
    %2508 = vmatpush1.msra.mxu0 0.0
    %2509 = vmatprep.subr.mxu0 0.0
    %2510 = vmatpush1.msra.mxu0 0.0
    %2511 = vmatprep.subr.mxu0 0.0
    %2512 = vmatpush1.msra.mxu0 0.0
    %2513 = vmatprep.subr.mxu0 0.0
    %2514 = vmatpush1.msra.mxu0 0.0
    %2515 = vmatprep.subr.mxu0 0.0
    %2516 = vmatpush1.msra.mxu0 0.0
    %2517 = vmatprep.subr.mxu0 0.0
    %2518 = vmatpush1.msra.mxu0 0.0
    %2519 = vmatprep.subr.mxu0 0.0
    %2520 = vmatpush1.msra.mxu0 0.0
    %2521 = vmatprep.subr.mxu0 0.0
    %2522 = vmatpush1.msra.mxu0 0.0
    %2523 = vmatprep.subr.mxu0 0.0
    %2524 = vmatpush1.msra.mxu0 0.0
    %2525 = vmatprep.subr.mxu0 0.0
    %2526 = vmatpush1.msra.mxu0 0.0
    %2527 = vmatprep.subr.mxu0 0.0
    %2528 = vmatpush1.msra.mxu0 0.0
    %2529 = vmatprep.subr.mxu0 0.0
    %2530 = vmatpush1.msra.mxu0 0.0
    %2531 = vmatprep.subr.mxu0 0.0
    %2532 = vmatpush1.msra.mxu0 %v174
    %2533 = vmatprep.subr.mxu0 0.0
    %2534 = vmatpush1.msra.mxu0 %v173
    %2535 = vmatprep.subr.mxu0 0.0
    %2536 = vmatpush1.msra.mxu0 %v172
    %2537 = vmatprep.subr.mxu0 0.0
    %2538 = vmatpush1.msra.mxu0 %v171
    %2539 = vmatprep.subr.mxu0 0.0
    %2540 = vmatpush2.msra.mxu0 0.0
    %2541 = vmatprep.subr.mxu0 0.0
    %2542 = vmatpush2.msra.mxu0 0.0
    %2543 = vmatprep.subr.mxu0 0.0
    %2544 = vmatpush2.msra.mxu0 0.0
    %2545 = vmatprep.subr.mxu0 0.0
    %2546 = vmatpush2.msra.mxu0 0.0
    %2547 = vmatprep.subr.mxu0 0.0
    %2548 = vmatpush2.msra.mxu0 0.0
    %2549 = vmatprep.subr.mxu0 0.0
    %2550 = vmatpush2.msra.mxu0 0.0
    %2551 = vmatprep.subr.mxu0 0.0
    %2552 = vmatpush2.msra.mxu0 0.0
    %2553 = vmatprep.subr.mxu0 0.0
    %2554 = vmatpush2.msra.mxu0 0.0
    %2555 = vmatprep.subr.mxu0 0.0
    %2556 = vmatpush2.msra.mxu0 0.0
    %2557 = vmatprep.subr.mxu0 0.0
    %2558 = vmatpush2.msra.mxu0 0.0
    %2559 = vmatprep.subr.mxu0 0.0
    %2560 = vmatpush2.msra.mxu0 0.0
    %2561 = vmatprep.subr.mxu0 0.0
    %2562 = vmatpush2.msra.mxu0 0.0
    %2563 = vmatprep.subr.mxu0 0.0
    %2564 = vmatpush2.msra.mxu0 0.0
    %2565 = vmatprep.subr.mxu0 0.0
    %2566 = vmatpush2.msra.mxu0 0.0
    %2567 = vmatprep.subr.mxu0 0.0
    %2568 = vmatpush2.msra.mxu0 0.0
    %2569 = vmatprep.subr.mxu0 0.0
    %2570 = vmatpush2.msra.mxu0 0.0
    %2571 = vmatprep.mubr.f32.mxu0 0.0
    %2572 = vmatmul.mubr.f32.gmra.mxu0 %v2505
    %v2573 = vpop.f32.mrf.mxu0
    %v2574 = vadd.f32 0.0, %v2573
    %v2575 = vpop.f32.mrf.mxu0
    %2576 = vdwg.mxu0
    %v2577 = vadd.f32 %v2229, %v2574
    %v2579 = vrot.slane %v2335, 6
    %2580 = vrot.lane.b32.xlu0 %v2579, 96
    %v2581 = vpop.permute.xlu0 %2580
    %v2582 = vsel %vm212, %v2581, 0
    %2584 = vmatprep.subr.mxu0 0.0
    %2585 = vmatpush1.msra.mxu0 0.0
    %2586 = vmatprep.subr.mxu0 0.0
    %2587 = vmatpush1.msra.mxu0 0.0
    %2588 = vmatprep.subr.mxu0 0.0
    %2589 = vmatpush1.msra.mxu0 0.0
    %2590 = vmatprep.subr.mxu0 0.0
    %2591 = vmatpush1.msra.mxu0 0.0
    %2592 = vmatprep.subr.mxu0 0.0
    %2593 = vmatpush1.msra.mxu0 0.0
    %2594 = vmatprep.subr.mxu0 0.0
    %2595 = vmatpush1.msra.mxu0 0.0
    %2596 = vmatprep.subr.mxu0 0.0
    %2597 = vmatpush1.msra.mxu0 0.0
    %2598 = vmatprep.subr.mxu0 0.0
    %2599 = vmatpush1.msra.mxu0 0.0
    %2600 = vmatprep.subr.mxu0 0.0
    %2601 = vmatpush1.msra.mxu0 0.0
    %2602 = vmatprep.subr.mxu0 0.0
    %2603 = vmatpush1.msra.mxu0 0.0
    %2604 = vmatprep.subr.mxu0 0.0
    %2605 = vmatpush1.msra.mxu0 0.0
    %2606 = vmatprep.subr.mxu0 0.0
    %2607 = vmatpush1.msra.mxu0 0.0
    %2608 = vmatprep.subr.mxu0 0.0
    %2609 = vmatpush1.msra.mxu0 %v140
    %2610 = vmatprep.subr.mxu0 0.0
    %2611 = vmatpush1.msra.mxu0 %v139
    %2612 = vmatprep.subr.mxu0 0.0
    %2613 = vmatpush1.msra.mxu0 %v138
    %2614 = vmatprep.subr.mxu0 0.0
    %2615 = vmatpush1.msra.mxu0 %v137
    %2616 = vmatprep.subr.mxu0 0.0
    %2617 = vmatpush2.msra.mxu0 0.0
    %2618 = vmatprep.subr.mxu0 0.0
    %2619 = vmatpush2.msra.mxu0 0.0
    %2620 = vmatprep.subr.mxu0 0.0
    %2621 = vmatpush2.msra.mxu0 0.0
    %2622 = vmatprep.subr.mxu0 0.0
    %2623 = vmatpush2.msra.mxu0 0.0
    %2624 = vmatprep.subr.mxu0 0.0
    %2625 = vmatpush2.msra.mxu0 0.0
    %2626 = vmatprep.subr.mxu0 0.0
    %2627 = vmatpush2.msra.mxu0 0.0
    %2628 = vmatprep.subr.mxu0 0.0
    %2629 = vmatpush2.msra.mxu0 0.0
    %2630 = vmatprep.subr.mxu0 0.0
    %2631 = vmatpush2.msra.mxu0 0.0
    %2632 = vmatprep.subr.mxu0 0.0
    %2633 = vmatpush2.msra.mxu0 0.0
    %2634 = vmatprep.subr.mxu0 0.0
    %2635 = vmatpush2.msra.mxu0 0.0
    %2636 = vmatprep.subr.mxu0 0.0
    %2637 = vmatpush2.msra.mxu0 0.0
    %2638 = vmatprep.subr.mxu0 0.0
    %2639 = vmatpush2.msra.mxu0 0.0
    %2640 = vmatprep.subr.mxu0 0.0
    %2641 = vmatpush2.msra.mxu0 0.0
    %2642 = vmatprep.subr.mxu0 0.0
    %2643 = vmatpush2.msra.mxu0 0.0
    %2644 = vmatprep.subr.mxu0 0.0
    %2645 = vmatpush2.msra.mxu0 0.0
    %2646 = vmatprep.subr.mxu0 0.0
    %2647 = vmatpush2.msra.mxu0 0.0
    %2648 = vmatprep.mubr.f32.mxu0 0.0
    %2649 = vmatmul.mubr.f32.gmra.mxu0 %v2582
    %v2650 = vpop.f32.mrf.mxu0
    %v2651 = vadd.f32 %v319, %v2650
    %v2652 = vpop.f32.mrf.mxu0
    %2653 = vdwg.mxu0
    %2654 = vmatprep.subr.mxu0 0.0
    %2655 = vmatpush1.msra.mxu0 0.0
    %2656 = vmatprep.subr.mxu0 0.0
    %2657 = vmatpush1.msra.mxu0 0.0
    %2658 = vmatprep.subr.mxu0 0.0
    %2659 = vmatpush1.msra.mxu0 0.0
    %2660 = vmatprep.subr.mxu0 0.0
    %2661 = vmatpush1.msra.mxu0 0.0
    %2662 = vmatprep.subr.mxu0 0.0
    %2663 = vmatpush1.msra.mxu0 0.0
    %2664 = vmatprep.subr.mxu0 0.0
    %2665 = vmatpush1.msra.mxu0 0.0
    %2666 = vmatprep.subr.mxu0 0.0
    %2667 = vmatpush1.msra.mxu0 0.0
    %2668 = vmatprep.subr.mxu0 0.0
    %2669 = vmatpush1.msra.mxu0 0.0
    %2670 = vmatprep.subr.mxu0 0.0
    %2671 = vmatpush1.msra.mxu0 0.0
    %2672 = vmatprep.subr.mxu0 0.0
    %2673 = vmatpush1.msra.mxu0 0.0
    %2674 = vmatprep.subr.mxu0 0.0
    %2675 = vmatpush1.msra.mxu0 0.0
    %2676 = vmatprep.subr.mxu0 0.0
    %2677 = vmatpush1.msra.mxu0 0.0
    %2678 = vmatprep.subr.mxu0 0.0
    %2679 = vmatpush1.msra.mxu0 %v145
    %2680 = vmatprep.subr.mxu0 0.0
    %2681 = vmatpush1.msra.mxu0 %v144
    %2682 = vmatprep.subr.mxu0 0.0
    %2683 = vmatpush1.msra.mxu0 %v143
    %2684 = vmatprep.subr.mxu0 0.0
    %2685 = vmatpush1.msra.mxu0 %v142
    %2686 = vmatprep.subr.mxu0 0.0
    %2687 = vmatpush2.msra.mxu0 0.0
    %2688 = vmatprep.subr.mxu0 0.0
    %2689 = vmatpush2.msra.mxu0 0.0
    %2690 = vmatprep.subr.mxu0 0.0
    %2691 = vmatpush2.msra.mxu0 0.0
    %2692 = vmatprep.subr.mxu0 0.0
    %2693 = vmatpush2.msra.mxu0 0.0
    %2694 = vmatprep.subr.mxu0 0.0
    %2695 = vmatpush2.msra.mxu0 0.0
    %2696 = vmatprep.subr.mxu0 0.0
    %2697 = vmatpush2.msra.mxu0 0.0
    %2698 = vmatprep.subr.mxu0 0.0
    %2699 = vmatpush2.msra.mxu0 0.0
    %2700 = vmatprep.subr.mxu0 0.0
    %2701 = vmatpush2.msra.mxu0 0.0
    %2702 = vmatprep.subr.mxu0 0.0
    %2703 = vmatpush2.msra.mxu0 0.0
    %2704 = vmatprep.subr.mxu0 0.0
    %2705 = vmatpush2.msra.mxu0 0.0
    %2706 = vmatprep.subr.mxu0 0.0
    %2707 = vmatpush2.msra.mxu0 0.0
    %2708 = vmatprep.subr.mxu0 0.0
    %2709 = vmatpush2.msra.mxu0 0.0
    %2710 = vmatprep.subr.mxu0 0.0
    %2711 = vmatpush2.msra.mxu0 0.0
    %2712 = vmatprep.subr.mxu0 0.0
    %2713 = vmatpush2.msra.mxu0 0.0
    %2714 = vmatprep.subr.mxu0 0.0
    %2715 = vmatpush2.msra.mxu0 0.0
    %2716 = vmatprep.subr.mxu0 0.0
    %2717 = vmatpush2.msra.mxu0 0.0
    %2718 = vmatprep.mubr.f32.mxu0 0.0
    %2719 = vmatmul.mubr.f32.gmra.mxu0 %v2505
    %v2720 = vpop.f32.mrf.mxu0
    %v2721 = vadd.f32 %v395, %v2720
    %v2722 = vpop.f32.mrf.mxu0
    %2723 = vdwg.mxu0
    %v2724 = vadd.f32 %v2651, %v2721
    %v2725 = vxor.u32 %v2724, 2147483648
    %v2726 = vmul.f32 %v2725, 1.442695
    %v2727 = vpow.pop %v2726
    %v2728 = vadd.f32 %v2727, 1.0
    %v2729 = vrcp.pop %v2728
    %v2730 = vmul.f32 1.0, %v2729
    %2732 = vrot.lane.b32.xlu0 %v2721, 64
    %v2733 = vpop.permute.xlu0 %2732
    %v2735 = vmul.f32 %v2730, %v2733
    %2737 = vrot.lane.b32.xlu0 %v2735, 64
    %v2738 = vpop.permute.xlu0 %2737
    %v2740 = vadd.f32 %v2651, %v2738
    %v2741 = vtanh.pop %v2740
    %v2742 = vsub.f32 1.0, %v2730
    %2744 = vrot.lane.b32.xlu0 %v2741, 96
    %v2745 = vpop.permute.xlu0 %2744
    %v2747 = vmul.f32 %v2742, %v2745
    %v2748 = vmul.f32 %v2730, %v2501
    %v2749 = vadd.f32 %v2747, %v2748
    %2751 = vrot.lane.b32.xlu0 %v2749, 96
    %v2752 = vpop.permute.xlu0 %2751
    %v2753 = vsel %vm212, %v2752, 0
    %2755 = vmatprep.subr.mxu0 0.0
    %2756 = vmatpush1.msra.mxu0 0.0
    %2757 = vmatprep.subr.mxu0 0.0
    %2758 = vmatpush1.msra.mxu0 0.0
    %2759 = vmatprep.subr.mxu0 0.0
    %2760 = vmatpush1.msra.mxu0 0.0
    %2761 = vmatprep.subr.mxu0 0.0
    %2762 = vmatpush1.msra.mxu0 0.0
    %2763 = vmatprep.subr.mxu0 0.0
    %2764 = vmatpush1.msra.mxu0 0.0
    %2765 = vmatprep.subr.mxu0 0.0
    %2766 = vmatpush1.msra.mxu0 0.0
    %2767 = vmatprep.subr.mxu0 0.0
    %2768 = vmatpush1.msra.mxu0 0.0
    %2769 = vmatprep.subr.mxu0 0.0
    %2770 = vmatpush1.msra.mxu0 0.0
    %2771 = vmatprep.subr.mxu0 0.0
    %2772 = vmatpush1.msra.mxu0 0.0
    %2773 = vmatprep.subr.mxu0 0.0
    %2774 = vmatpush1.msra.mxu0 0.0
    %2775 = vmatprep.subr.mxu0 0.0
    %2776 = vmatpush1.msra.mxu0 0.0
    %2777 = vmatprep.subr.mxu0 0.0
    %2778 = vmatpush1.msra.mxu0 0.0
    %2779 = vmatprep.subr.mxu0 0.0
    %2780 = vmatpush1.msra.mxu0 %v178
    %2781 = vmatprep.subr.mxu0 0.0
    %2782 = vmatpush1.msra.mxu0 %v177
    %2783 = vmatprep.subr.mxu0 0.0
    %2784 = vmatpush1.msra.mxu0 %v176
    %2785 = vmatprep.subr.mxu0 0.0
    %2786 = vmatpush1.msra.mxu0 %v175
    %2787 = vmatprep.subr.mxu0 0.0
    %2788 = vmatpush2.msra.mxu0 0.0
    %2789 = vmatprep.subr.mxu0 0.0
    %2790 = vmatpush2.msra.mxu0 0.0
    %2791 = vmatprep.subr.mxu0 0.0
    %2792 = vmatpush2.msra.mxu0 0.0
    %2793 = vmatprep.subr.mxu0 0.0
    %2794 = vmatpush2.msra.mxu0 0.0
    %2795 = vmatprep.subr.mxu0 0.0
    %2796 = vmatpush2.msra.mxu0 0.0
    %2797 = vmatprep.subr.mxu0 0.0
    %2798 = vmatpush2.msra.mxu0 0.0
    %2799 = vmatprep.subr.mxu0 0.0
    %2800 = vmatpush2.msra.mxu0 0.0
    %2801 = vmatprep.subr.mxu0 0.0
    %2802 = vmatpush2.msra.mxu0 0.0
    %2803 = vmatprep.subr.mxu0 0.0
    %2804 = vmatpush2.msra.mxu0 0.0
    %2805 = vmatprep.subr.mxu0 0.0
    %2806 = vmatpush2.msra.mxu0 0.0
    %2807 = vmatprep.subr.mxu0 0.0
    %2808 = vmatpush2.msra.mxu0 0.0
    %2809 = vmatprep.subr.mxu0 0.0
    %2810 = vmatpush2.msra.mxu0 0.0
    %2811 = vmatprep.subr.mxu0 0.0
    %2812 = vmatpush2.msra.mxu0 0.0
    %2813 = vmatprep.subr.mxu0 0.0
    %2814 = vmatpush2.msra.mxu0 0.0
    %2815 = vmatprep.subr.mxu0 0.0
    %2816 = vmatpush2.msra.mxu0 0.0
    %2817 = vmatprep.subr.mxu0 0.0
    %2818 = vmatpush2.msra.mxu0 0.0
    %2819 = vmatprep.mubr.f32.mxu0 0.0
    %2820 = vmatmul.mubr.f32.gmra.mxu0 %v2753
    %v2821 = vpop.f32.mrf.mxu0
    %v2822 = vadd.f32 0.0, %v2821
    %v2823 = vpop.f32.mrf.mxu0
    %2824 = vdwg.mxu0
    %v2825 = vadd.f32 %v2577, %v2822
    %v2827 = vlaneseq
    %v2828 = vshrl.u32 %v2827, 7
    %v2829 = vsub.s32 0, %v2828
    %v2830 = vrot.slane %v179, %v2829
    %v2832 = vadd.f32 %v2825, %v2830
    %vm2833 = vcmask 9216
    %2834 = vst.msk [vmem:[#allocation2] sm:$0x3] %vm2833, %v2832
    // Predicated region
    $region46: #{rnn_gru_forward.1} parent=1 // pred_check
      _
    $region47: #{rnn_gru_forward.1} parent=1 // pred_check_branch
      %2836 = sbr.rel (0) target = $region49
    $region48: #{rnn_gru_forward.1} parent=1 // pred_region
      %s2838 = ssub.s32 32, 32
      %2839 = vsyncadd [#allocation3], %s2838
      %s2841 = sshll.u32 [#allocation2], 4
      %s2842 = int_to_ptr.vmem [resolvable:$true] %s2841
      %2844 = dma.vmem_to_hbm [thread:$0]  %s2842, 32, %s11, [#allocation3]
    $region49: #{rnn_gru_forward.1} parent=1 // pred_fallthru
      _
    // Predicated region
    $region50: #{rnn_gru_forward.1} parent=1 // pred_check
      _
    $region51: #{rnn_gru_forward.1} parent=1 // pred_check_branch
      %2846 = sbr.rel (0) target = $region53
    $region52: #{rnn_gru_forward.1} parent=1 // pred_region
      %2847 = dma.done [#allocation3], 32
    $region53: #{rnn_gru_forward.1} parent=1 // pred_fallthru
      _
    %2848 = vsyncpa [#allocation3], 1

</llo_original>
